<compile_context>
chip_gen: v7x
topology: tpu7x:2x2x1
jax: 0.10.0
libtpu: 0.0.40
codegen_flags: <defaults>
</compile_context>

<pallas_src>
import jax
import jax.numpy as jnp
from jax.experimental import pallas as pl
from jax.experimental.pallas import tpu as pltpu


def _round_up(x, n):
    return ((x + n - 1) // n) * n


# ----------------------------- Pallas kernel ------------------------------ #
def _hyper_value_kernel(meta_ref, state_ref, w1_ref, w2_ref, out_ref, z_ref):
    wdt = w1_ref.dtype                           # weight / MXU-input dtype
    mv = meta_ref[...].astype(jnp.float32)       # (TB, M)
    st = state_ref[...].astype(jnp.float32)      # (TB, S)  -- unpadded stream
    TB, M = mv.shape
    S = st.shape[1]
    s_pad = w1_ref.shape[0] // (M + 2)           # 128-lane block width, layer 1
    h_pad = w2_ref.shape[0] // (M + 2)           # 128-lane block width, layer 2
    k1 = (M + 2) * s_pad
    k2 = (M + 2) * h_pad

    # Bias-head carrier block [mv | 1 | 0...] (block M+1); written once, reused
    # by layer 2 when s_pad == h_pad (the common case).
    cbase = (M + 1) * s_pad
    z_ref[:, cbase:k1] = jnp.zeros((TB, s_pad), wdt)
    z_ref[:, cbase:cbase + M] = mv.astype(wdt)
    z_ref[:, cbase + M:cbase + M + 1] = jnp.ones((TB, 1), wdt)

    # State block (block M) carries the generated bias b1; it also serves as
    # the in-kernel lane-padded copy of the state (pad to 128 here instead of
    # inflating the HBM stream 8x in the wrapper).
    sbase = M * s_pad
    if S < s_pad:
        z_ref[:, sbase:sbase + s_pad] = jnp.zeros((TB, s_pad), wdt)
    z_ref[:, sbase:sbase + S] = st.astype(wdt)
    st_pad = z_ref[:, sbase:sbase + s_pad].astype(jnp.float32)   # (TB, s_pad)

    # Blocks 0..M-1: outer-product pieces mv[:, m] * state (VPU lane broadcasts,
    # filler under the MXU).
    for m in range(M):
        z_ref[:, m * s_pad:(m + 1) * s_pad] = (mv[:, m:m + 1] * st_pad).astype(wdt)

    # Layer 1: one deep MXU matmul, K = (M+2)*s_pad (= 1280 at toy dims), + ReLU.
    h = jnp.maximum(
        jnp.dot(z_ref[:, :k1], w1_ref[...], preferred_element_type=jnp.float32),
        0.0)                                      # (TB, h_pad) f32

    # Layer 2: overwrite only blocks 0..M with the hidden activations; the
    # carrier block is already in place when the block widths match.
    for m in range(M):
        z_ref[:, m * h_pad:(m + 1) * h_pad] = (mv[:, m:m + 1] * h).astype(wdt)
    z_ref[:, M * h_pad:(M + 1) * h_pad] = h.astype(wdt)
    if s_pad != h_pad:
        cb2 = (M + 1) * h_pad
        z_ref[:, cb2:k2] = jnp.zeros((TB, h_pad), wdt)
        z_ref[:, cb2:cb2 + M] = mv.astype(wdt)
        z_ref[:, cb2 + M:cb2 + M + 1] = jnp.ones((TB, 1), wdt)

    q = jnp.dot(z_ref[:, :k2], w2_ref[...], preferred_element_type=jnp.float32)
    out_ref[...] = q.astype(out_ref.dtype)        # lane-dense (TB, A_pad) store


# --------------------------- weight preparation ---------------------------- #
def prepare_weights(params, meta_v_dim, state_dim, action_dim, hidden_dim,
                    dtype=jnp.bfloat16):
    """Pre-reshape/pad the hypernetwork weights for the kernel.

    Layout per layer ((M+2) blocks of 128 rows each):
      block m (<M): row m*in_pad + i  = W[m, i*out_dim : (i+1)*out_dim]
      block M     : row M*in_pad + i  = b[i*out_dim : (i+1)*out_dim]   (bias, via raw x)
      block M+1   : rows 0..M-1 = Wb,  row M = bb                      (fused bias head)
    dtype=jnp.bfloat16 is the recommended production setting (2x MXU, half the
    resident VMEM / HBM weight traffic); pass jnp.float32 for exact-math checks.
    """
    M, S, A, H = meta_v_dim, state_dim, action_dim, hidden_dim
    S_pad = _round_up(S, 128)
    H_pad = _round_up(H, 128)
    A_pad = _round_up(A, 128)
    assert M + 1 <= S_pad and M + 1 <= H_pad, "bias-head carrier block must fit"

    f32 = jnp.float32

    def build(W, b, Wb, bb, in_dim, in_pad, out_dim, out_pad):
        w = jnp.zeros((M, in_pad, out_pad), f32)
        w = w.at[:, :in_dim, :out_dim].set(W.reshape(M, in_dim, out_dim).astype(f32))
        gb = jnp.zeros((in_pad, out_pad), f32)
        gb = gb.at[:in_dim, :out_dim].set(b.reshape(in_dim, out_dim).astype(f32))
        hd = jnp.zeros((in_pad, out_pad), f32)
        hd = hd.at[:M, :out_dim].set(Wb.astype(f32))
        hd = hd.at[M, :out_dim].set(bb.astype(f32))
        full = jnp.concatenate([w.reshape(M * in_pad, out_pad), gb, hd], axis=0)
        return full.astype(dtype)

    w1_full = build(params["W1"], params["b1"], params["Wb1"], params["bb1"],
                    S, S_pad, H, H_pad)
    w2_full = build(params["W2"], params["b2"], params["Wb2"], params["bb2"],
                    H, H_pad, A, A_pad)
    return {"w1_full": w1_full, "w2_full": w2_full,
            "dims": (M, S, A, H, S_pad, H_pad, A_pad)}


# ------------------------------ tuning ------------------------------------- #
def _default_tuning():
    """Per-chip defaults: (batch tile, scoped VMEM limit).

    v5e/v6e (128 MiB VMEM): big batch tiles amortize the ~0.35us/step overhead.
    v7x / unknown (64 MiB/TC): smaller tiles, <=48 MiB, rely on the >=2-step
    parallel grid for megacore.
    """
    try:
        cap = pltpu.get_tpu_info().vmem_capacity_bytes
    except Exception:
        cap = None
    if cap is not None and cap >= 96 * 1024 * 1024:
        return 512, 96 * 1024 * 1024
    return 256, 48 * 1024 * 1024


# ------------------------------ wrapper ------------------------------------ #
def value_net_forward(prep, meta_v, state, tile_b=None, vmem_limit_bytes=None,
                      out_dtype=None):
    M, S, A, H, S_pad, H_pad, A_pad = prep["dims"]
    w1_full, w2_full = prep["w1_full"], prep["w2_full"]
    wdt = w1_full.dtype
    if out_dtype is None:
        out_dtype = wdt                      # bf16 output halves HBM writeback
    B = meta_v.shape[0]

    dflt_tb, dflt_vmem = _default_tuning()
    if tile_b is None:
        tile_b = dflt_tb
    if vmem_limit_bytes is None:
        vmem_limit_bytes = dflt_vmem

    # Batch tile (multiple of 8 sublanes); guarantee >= 2 grid steps so the
    # "parallel" axis actually shards across the two v7x TensorCores.
    TB = max(8, min(_round_up(tile_b, 8), _round_up(B, 8)))
    if _round_up(B, TB) // TB < 2:
        TB = max(8, _round_up(max(_round_up(B, 8) // 2, 1), 8))
    B_pad = max(_round_up(B, TB), 2 * TB)

    # Batch padding only; state stays (B_pad, S) in HBM (no 8x lane padding).
    mv = jnp.zeros((B_pad, M), meta_v.dtype).at[:B].set(meta_v)
    st = jnp.zeros((B_pad, S), state.dtype).at[:B].set(state)

    k_max = (M + 2) * max(S_pad, H_pad)
    grid = (B_pad // TB,)

    def build(single_buffer_weights):
        def w_spec(shape):
            imap = lambda i: (0, 0)          # resident weights, constant index
            if single_buffer_weights:
                return pl.BlockSpec(shape, imap, pipeline_mode=pl.Buffered(1))
            return pl.BlockSpec(shape, imap)

        return pl.pallas_call(
            _hyper_value_kernel,
            out_shape=jax.ShapeDtypeStruct((B_pad, A_pad), out_dtype),
            grid=grid,
            in_specs=[
                pl.BlockSpec((TB, M), lambda i: (i, 0)),   # meta_v tile
                pl.BlockSpec((TB, S), lambda i: (i, 0)),   # state tile (unpadded)
                w_spec(w1_full.shape),
                w_spec(w2_full.shape),
            ],
            out_specs=pl.BlockSpec((TB, A_pad), lambda i: (i, 0)),
            scratch_shapes=[pltpu.VMEM((TB, k_max), wdt)],  # z assembly buffer
            compiler_params=pltpu.CompilerParams(
                dimension_semantics=("parallel",),          # megacore on v7x
                vmem_limit_bytes=vmem_limit_bytes,
            ),
        )

    try:
        out = build(True)(mv, st, w1_full, w2_full)
    except Exception:
        # pipeline_mode=pl.Buffered(1) unsupported on this jax: default buffering.
        out = build(False)(mv, st, w1_full, w2_full)
    return out[:B, :A]


# --------------------------- param init / reference ------------------------ #
def init_params(key, meta_v_dim, state_dim, action_dim, hidden_dim):
    ks = jax.random.split(key, 8)
    sc = 1.0 / jnp.sqrt(jnp.float32(meta_v_dim))
    def lin(k, out_dim):
        return sc * jax.random.normal(k, (meta_v_dim, out_dim), jnp.float32)
    return {
        "W1":  lin(ks[0], state_dim * hidden_dim),
        "b1":  sc * jax.random.normal(ks[1], (state_dim * hidden_dim,), jnp.float32),
        "Wb1": lin(ks[2], hidden_dim),
        "bb1": sc * jax.random.normal(ks[3], (hidden_dim,), jnp.float32),
        "W2":  lin(ks[4], hidden_dim * action_dim),
        "b2":  sc * jax.random.normal(ks[5], (hidden_dim * action_dim,), jnp.float32),
        "Wb2": lin(ks[6], action_dim),
        "bb2": sc * jax.random.normal(ks[7], (action_dim,), jnp.float32),
    }


def reference_forward(params, meta_v, state):
    B = meta_v.shape[0]
    S = state.shape[1]
    H = params["bb1"].shape[0]
    A = params["bb2"].shape[0]
    w1 = (meta_v @ params["W1"] + params["b1"]).reshape(B, S, H)
    gb1 = meta_v @ params["Wb1"] + params["bb1"]
    w2 = (meta_v @ params["W2"] + params["b2"]).reshape(B, H, A)
    gb2 = meta_v @ params["Wb2"] + params["bb2"]
    h = jax.nn.relu(jnp.einsum("bs,bsh->bh", state, w1) + gb1)
    return jnp.einsum("bh,bha->ba", h, w2) + gb2


# ---------------------------------- main ----------------------------------- #
if __name__ == "__main__":
    B, META_V_DIM, STATE_DIM, ACTION_DIM, HIDDEN_DIM = 2, 8, 16, 4, 32

    key = jax.random.PRNGKey(0)
    kp, km, ks = jax.random.split(key, 3)
    params = init_params(kp, META_V_DIM, STATE_DIM, ACTION_DIM, HIDDEN_DIM)
    meta_v = jax.random.normal(km, (B, META_V_DIM), jnp.float32)
    state = jax.random.normal(ks, (B, STATE_DIM), jnp.float32)

    q_ref = reference_forward(params, meta_v, state)

    # Exact-math path (f32 weights / f32 output): tight check of the fused algebra.
    prep_f32 = prepare_weights(params, META_V_DIM, STATE_DIM, ACTION_DIM,
                               HIDDEN_DIM, dtype=jnp.float32)
    q_f32 = jax.block_until_ready(value_net_forward(prep_f32, meta_v, state))
    assert q_f32.shape == (B, ACTION_DIM)
    assert jnp.allclose(q_f32.astype(jnp.float32), q_ref, atol=1e-4, rtol=1e-4), (
        q_f32, q_ref)

    # Recommended fast path (bf16 weights + bf16 output): relaxed bf16 tolerance.
    prep_bf16 = prepare_weights(params, META_V_DIM, STATE_DIM, ACTION_DIM,
                                HIDDEN_DIM, dtype=jnp.bfloat16)
    q_bf16 = jax.block_until_ready(value_net_forward(prep_bf16, meta_v, state))
    assert q_bf16.shape == (B, ACTION_DIM)
    rel_err = jnp.max(jnp.abs(q_bf16.astype(jnp.float32) - q_ref)) / (
        jnp.max(jnp.abs(q_ref)) + 1e-6)
    assert rel_err < 5e-2, rel_err

    print("KERNEL_OK")
</pallas_src>

<mosaic_0001>
module attributes {stable_mosaic.version = 11 : i64} {
  func.func @_hyper_value_kernel(%arg0: i32, %arg1: memref<8x8xf32, #tpu.memory_space<vmem>>, %arg2: memref<8x16xf32, #tpu.memory_space<vmem>>, %arg3: memref<1280x128xf32, #tpu.memory_space<vmem>>, %arg4: memref<1280x128xf32, #tpu.memory_space<vmem>>, %arg5: memref<8x128xf32, #tpu.memory_space<vmem>>, %arg6: memref<8x1280xf32, #tpu.memory_space<vmem>>) attributes {dimension_semantics = [#tpu.dimension_semantics<parallel>], iteration_bounds = array<i64: 2>, scalar_prefetch = 0 : i64, scratch_operands = 1 : i64, tpu.core_type = #tpu.core_type<tc>, window_params = [{transform_indices = @transform_0, window_bounds = array<i64: 8, 8>}, {transform_indices = @transform_1, window_bounds = array<i64: 8, 16>}, {pipeline_mode = #tpu.pipeline_mode<synchronous>, transform_indices = @transform_2, window_bounds = array<i64: 1280, 128>}, {pipeline_mode = #tpu.pipeline_mode<synchronous>, transform_indices = @transform_3, window_bounds = array<i64: 1280, 128>}, {transform_indices = @transform_4, window_bounds = array<i64: 8, 128>}]} {
    %c0 = arith.constant 0 : index
    %c0_0 = arith.constant 0 : index
    %0 = vector.load %arg1[%c0, %c0_0] : memref<8x8xf32, #tpu.memory_space<vmem>>, vector<8x8xf32>
    %c0_1 = arith.constant 0 : index
    %c0_2 = arith.constant 0 : index
    %1 = vector.load %arg2[%c0_1, %c0_2] : memref<8x16xf32, #tpu.memory_space<vmem>>, vector<8x16xf32>
    %cst = arith.constant 0.000000e+00 : f32
    %2 = vector.broadcast %cst : f32 to vector<8x128xf32>
    %c0_3 = arith.constant 0 : index
    %c1152 = arith.constant 1152 : index
    %3 = vector.load %arg6[%c0_3, %c1152] : memref<8x1280xf32, #tpu.memory_space<vmem>>, vector<8x128xf32>
    tpu.vector_store %arg6[%c0_3, %c1152], %2 {strides = array<i32>} : memref<8x1280xf32, #tpu.memory_space<vmem>>, vector<8x128xf32>,
    %c0_4 = arith.constant 0 : index
    %c1152_5 = arith.constant 1152 : index
    %4 = vector.load %arg6[%c0_4, %c1152_5] : memref<8x1280xf32, #tpu.memory_space<vmem>>, vector<8x8xf32>
    tpu.vector_store %arg6[%c0_4, %c1152_5], %0 {strides = array<i32>} : memref<8x1280xf32, #tpu.memory_space<vmem>>, vector<8x8xf32>,
    %cst_6 = arith.constant 1.000000e+00 : f32
    %5 = vector.broadcast %cst_6 : f32 to vector<8x1xf32>
    %c0_7 = arith.constant 0 : index
    %c1160 = arith.constant 1160 : index
    %6 = vector.load %arg6[%c0_7, %c1160] : memref<8x1280xf32, #tpu.memory_space<vmem>>, vector<8x1xf32>
    tpu.vector_store %arg6[%c0_7, %c1160], %5 {strides = array<i32>} : memref<8x1280xf32, #tpu.memory_space<vmem>>, vector<8x1xf32>,
    %cst_8 = arith.constant 0.000000e+00 : f32
    %7 = vector.broadcast %cst_8 : f32 to vector<8x128xf32>
    %c0_9 = arith.constant 0 : index
    %c1024 = arith.constant 1024 : index
    %8 = vector.load %arg6[%c0_9, %c1024] : memref<8x1280xf32, #tpu.memory_space<vmem>>, vector<8x128xf32>
    tpu.vector_store %arg6[%c0_9, %c1024], %7 {strides = array<i32>} : memref<8x1280xf32, #tpu.memory_space<vmem>>, vector<8x128xf32>,
    %c0_10 = arith.constant 0 : index
    %c1024_11 = arith.constant 1024 : index
    %9 = vector.load %arg6[%c0_10, %c1024_11] : memref<8x1280xf32, #tpu.memory_space<vmem>>, vector<8x16xf32>
    tpu.vector_store %arg6[%c0_10, %c1024_11], %1 {strides = array<i32>} : memref<8x1280xf32, #tpu.memory_space<vmem>>, vector<8x16xf32>,
    %c0_12 = arith.constant 0 : index
    %c1024_13 = arith.constant 1024 : index
    %10 = vector.load %arg6[%c0_12, %c1024_13] : memref<8x1280xf32, #tpu.memory_space<vmem>>, vector<8x128xf32>
    %11 = vector.extract_strided_slice %0 {offsets = [0, 0], sizes = [8, 1], strides = [1, 1]} : vector<8x8xf32> to vector<8x1xf32>
    %12 = vector.broadcast %11 : vector<8x1xf32> to vector<8x128xf32>
    %13 = arith.mulf %12, %10 : vector<8x128xf32>
    %c0_14 = arith.constant 0 : index
    %c0_15 = arith.constant 0 : index
    %14 = vector.load %arg6[%c0_14, %c0_15] : memref<8x1280xf32, #tpu.memory_space<vmem>>, vector<8x128xf32>
    tpu.vector_store %arg6[%c0_14, %c0_15], %13 {strides = array<i32>} : memref<8x1280xf32, #tpu.memory_space<vmem>>, vector<8x128xf32>,
    %15 = vector.extract_strided_slice %0 {offsets = [0, 1], sizes = [8, 1], strides = [1, 1]} : vector<8x8xf32> to vector<8x1xf32>
    %16 = vector.broadcast %15 : vector<8x1xf32> to vector<8x128xf32>
    %17 = arith.mulf %16, %10 : vector<8x128xf32>
    %c0_16 = arith.constant 0 : index
    %c128 = arith.constant 128 : index
    %18 = vector.load %arg6[%c0_16, %c128] : memref<8x1280xf32, #tpu.memory_space<vmem>>, vector<8x128xf32>
    tpu.vector_store %arg6[%c0_16, %c128], %17 {strides = array<i32>} : memref<8x1280xf32, #tpu.memory_space<vmem>>, vector<8x128xf32>,
    %19 = vector.extract_strided_slice %0 {offsets = [0, 2], sizes = [8, 1], strides = [1, 1]} : vector<8x8xf32> to vector<8x1xf32>
    %20 = vector.broadcast %19 : vector<8x1xf32> to vector<8x128xf32>
    %21 = arith.mulf %20, %10 : vector<8x128xf32>
    %c0_17 = arith.constant 0 : index
    %c256 = arith.constant 256 : index
    %22 = vector.load %arg6[%c0_17, %c256] : memref<8x1280xf32, #tpu.memory_space<vmem>>, vector<8x128xf32>
    tpu.vector_store %arg6[%c0_17, %c256], %21 {strides = array<i32>} : memref<8x1280xf32, #tpu.memory_space<vmem>>, vector<8x128xf32>,
    %23 = vector.extract_strided_slice %0 {offsets = [0, 3], sizes = [8, 1], strides = [1, 1]} : vector<8x8xf32> to vector<8x1xf32>
    %24 = vector.broadcast %23 : vector<8x1xf32> to vector<8x128xf32>
    %25 = arith.mulf %24, %10 : vector<8x128xf32>
    %c0_18 = arith.constant 0 : index
    %c384 = arith.constant 384 : index
    %26 = vector.load %arg6[%c0_18, %c384] : memref<8x1280xf32, #tpu.memory_space<vmem>>, vector<8x128xf32>
    tpu.vector_store %arg6[%c0_18, %c384], %25 {strides = array<i32>} : memref<8x1280xf32, #tpu.memory_space<vmem>>, vector<8x128xf32>,
    %27 = vector.extract_strided_slice %0 {offsets = [0, 4], sizes = [8, 1], strides = [1, 1]} : vector<8x8xf32> to vector<8x1xf32>
    %28 = vector.broadcast %27 : vector<8x1xf32> to vector<8x128xf32>
    %29 = arith.mulf %28, %10 : vector<8x128xf32>
    %c0_19 = arith.constant 0 : index
    %c512 = arith.constant 512 : index
    %30 = vector.load %arg6[%c0_19, %c512] : memref<8x1280xf32, #tpu.memory_space<vmem>>, vector<8x128xf32>
    tpu.vector_store %arg6[%c0_19, %c512], %29 {strides = array<i32>} : memref<8x1280xf32, #tpu.memory_space<vmem>>, vector<8x128xf32>,
    %31 = vector.extract_strided_slice %0 {offsets = [0, 5], sizes = [8, 1], strides = [1, 1]} : vector<8x8xf32> to vector<8x1xf32>
    %32 = vector.broadcast %31 : vector<8x1xf32> to vector<8x128xf32>
    %33 = arith.mulf %32, %10 : vector<8x128xf32>
    %c0_20 = arith.constant 0 : index
    %c640 = arith.constant 640 : index
    %34 = vector.load %arg6[%c0_20, %c640] : memref<8x1280xf32, #tpu.memory_space<vmem>>, vector<8x128xf32>
    tpu.vector_store %arg6[%c0_20, %c640], %33 {strides = array<i32>} : memref<8x1280xf32, #tpu.memory_space<vmem>>, vector<8x128xf32>,
    %35 = vector.extract_strided_slice %0 {offsets = [0, 6], sizes = [8, 1], strides = [1, 1]} : vector<8x8xf32> to vector<8x1xf32>
    %36 = vector.broadcast %35 : vector<8x1xf32> to vector<8x128xf32>
    %37 = arith.mulf %36, %10 : vector<8x128xf32>
    %c0_21 = arith.constant 0 : index
    %c768 = arith.constant 768 : index
    %38 = vector.load %arg6[%c0_21, %c768] : memref<8x1280xf32, #tpu.memory_space<vmem>>, vector<8x128xf32>
    tpu.vector_store %arg6[%c0_21, %c768], %37 {strides = array<i32>} : memref<8x1280xf32, #tpu.memory_space<vmem>>, vector<8x128xf32>,
    %39 = vector.extract_strided_slice %0 {offsets = [0, 7], sizes = [8, 1], strides = [1, 1]} : vector<8x8xf32> to vector<8x1xf32>
    %40 = vector.broadcast %39 : vector<8x1xf32> to vector<8x128xf32>
    %41 = arith.mulf %40, %10 : vector<8x128xf32>
    %c0_22 = arith.constant 0 : index
    %c896 = arith.constant 896 : index
    %42 = vector.load %arg6[%c0_22, %c896] : memref<8x1280xf32, #tpu.memory_space<vmem>>, vector<8x128xf32>
    tpu.vector_store %arg6[%c0_22, %c896], %41 {strides = array<i32>} : memref<8x1280xf32, #tpu.memory_space<vmem>>, vector<8x128xf32>,
    %c0_23 = arith.constant 0 : index
    %c0_24 = arith.constant 0 : index
    %43 = vector.load %arg6[%c0_23, %c0_24] : memref<8x1280xf32, #tpu.memory_space<vmem>>, vector<8x1280xf32>
    %c0_25 = arith.constant 0 : index
    %c0_26 = arith.constant 0 : index
    %44 = vector.load %arg3[%c0_25, %c0_26] : memref<1280x128xf32, #tpu.memory_space<vmem>>, vector<1280x128xf32>
    %cst_27 = arith.constant dense<0.000000e+00> : vector<8x128xf32>
    %45 = tpu.matmul %43, %44, %cst_27 {dimension_numbers = #tpu.dot_dimension_numbers<[1], [0], [0], [1], [0, 0, 1, 1], [], []>} : vector<8x1280xf32>, vector<1280x128xf32>, vector<8x128xf32> -> vector<8x128xf32>
    %cst_28 = arith.constant 0.000000e+00 : f32
    %46 = vector.broadcast %cst_28 : f32 to vector<8x128xf32>
    %47 = arith.maximumf %45, %46 : vector<8x128xf32>
    %48 = vector.extract_strided_slice %0 {offsets = [0, 0], sizes = [8, 1], strides = [1, 1]} : vector<8x8xf32> to vector<8x1xf32>
    %49 = vector.broadcast %48 : vector<8x1xf32> to vector<8x128xf32>
    %50 = arith.mulf %49, %47 : vector<8x128xf32>
    %c0_29 = arith.constant 0 : index
    %c0_30 = arith.constant 0 : index
    %51 = vector.load %arg6[%c0_29, %c0_30] : memref<8x1280xf32, #tpu.memory_space<vmem>>, vector<8x128xf32>
    tpu.vector_store %arg6[%c0_29, %c0_30], %50 {strides = array<i32>} : memref<8x1280xf32, #tpu.memory_space<vmem>>, vector<8x128xf32>,
    %52 = vector.extract_strided_slice %0 {offsets = [0, 1], sizes = [8, 1], strides = [1, 1]} : vector<8x8xf32> to vector<8x1xf32>
    %53 = vector.broadcast %52 : vector<8x1xf32> to vector<8x128xf32>
    %54 = arith.mulf %53, %47 : vector<8x128xf32>
    %c0_31 = arith.constant 0 : index
    %c128_32 = arith.constant 128 : index
    %55 = vector.load %arg6[%c0_31, %c128_32] : memref<8x1280xf32, #tpu.memory_space<vmem>>, vector<8x128xf32>
    tpu.vector_store %arg6[%c0_31, %c128_32], %54 {strides = array<i32>} : memref<8x1280xf32, #tpu.memory_space<vmem>>, vector<8x128xf32>,
    %56 = vector.extract_strided_slice %0 {offsets = [0, 2], sizes = [8, 1], strides = [1, 1]} : vector<8x8xf32> to vector<8x1xf32>
    %57 = vector.broadcast %56 : vector<8x1xf32> to vector<8x128xf32>
    %58 = arith.mulf %57, %47 : vector<8x128xf32>
    %c0_33 = arith.constant 0 : index
    %c256_34 = arith.constant 256 : index
    %59 = vector.load %arg6[%c0_33, %c256_34] : memref<8x1280xf32, #tpu.memory_space<vmem>>, vector<8x128xf32>
    tpu.vector_store %arg6[%c0_33, %c256_34], %58 {strides = array<i32>} : memref<8x1280xf32, #tpu.memory_space<vmem>>, vector<8x128xf32>,
    %60 = vector.extract_strided_slice %0 {offsets = [0, 3], sizes = [8, 1], strides = [1, 1]} : vector<8x8xf32> to vector<8x1xf32>
    %61 = vector.broadcast %60 : vector<8x1xf32> to vector<8x128xf32>
    %62 = arith.mulf %61, %47 : vector<8x128xf32>
    %c0_35 = arith.constant 0 : index
    %c384_36 = arith.constant 384 : index
    %63 = vector.load %arg6[%c0_35, %c384_36] : memref<8x1280xf32, #tpu.memory_space<vmem>>, vector<8x128xf32>
    tpu.vector_store %arg6[%c0_35, %c384_36], %62 {strides = array<i32>} : memref<8x1280xf32, #tpu.memory_space<vmem>>, vector<8x128xf32>,
    %64 = vector.extract_strided_slice %0 {offsets = [0, 4], sizes = [8, 1], strides = [1, 1]} : vector<8x8xf32> to vector<8x1xf32>
    %65 = vector.broadcast %64 : vector<8x1xf32> to vector<8x128xf32>
    %66 = arith.mulf %65, %47 : vector<8x128xf32>
    %c0_37 = arith.constant 0 : index
    %c512_38 = arith.constant 512 : index
    %67 = vector.load %arg6[%c0_37, %c512_38] : memref<8x1280xf32, #tpu.memory_space<vmem>>, vector<8x128xf32>
    tpu.vector_store %arg6[%c0_37, %c512_38], %66 {strides = array<i32>} : memref<8x1280xf32, #tpu.memory_space<vmem>>, vector<8x128xf32>,
    %68 = vector.extract_strided_slice %0 {offsets = [0, 5], sizes = [8, 1], strides = [1, 1]} : vector<8x8xf32> to vector<8x1xf32>
    %69 = vector.broadcast %68 : vector<8x1xf32> to vector<8x128xf32>
    %70 = arith.mulf %69, %47 : vector<8x128xf32>
    %c0_39 = arith.constant 0 : index
    %c640_40 = arith.constant 640 : index
    %71 = vector.load %arg6[%c0_39, %c640_40] : memref<8x1280xf32, #tpu.memory_space<vmem>>, vector<8x128xf32>
    tpu.vector_store %arg6[%c0_39, %c640_40], %70 {strides = array<i32>} : memref<8x1280xf32, #tpu.memory_space<vmem>>, vector<8x128xf32>,
    %72 = vector.extract_strided_slice %0 {offsets = [0, 6], sizes = [8, 1], strides = [1, 1]} : vector<8x8xf32> to vector<8x1xf32>
    %73 = vector.broadcast %72 : vector<8x1xf32> to vector<8x128xf32>
    %74 = arith.mulf %73, %47 : vector<8x128xf32>
    %c0_41 = arith.constant 0 : index
    %c768_42 = arith.constant 768 : index
    %75 = vector.load %arg6[%c0_41, %c768_42] : memref<8x1280xf32, #tpu.memory_space<vmem>>, vector<8x128xf32>
    tpu.vector_store %arg6[%c0_41, %c768_42], %74 {strides = array<i32>} : memref<8x1280xf32, #tpu.memory_space<vmem>>, vector<8x128xf32>,
    %76 = vector.extract_strided_slice %0 {offsets = [0, 7], sizes = [8, 1], strides = [1, 1]} : vector<8x8xf32> to vector<8x1xf32>
    %77 = vector.broadcast %76 : vector<8x1xf32> to vector<8x128xf32>
    %78 = arith.mulf %77, %47 : vector<8x128xf32>
    %c0_43 = arith.constant 0 : index
    %c896_44 = arith.constant 896 : index
    %79 = vector.load %arg6[%c0_43, %c896_44] : memref<8x1280xf32, #tpu.memory_space<vmem>>, vector<8x128xf32>
    tpu.vector_store %arg6[%c0_43, %c896_44], %78 {strides = array<i32>} : memref<8x1280xf32, #tpu.memory_space<vmem>>, vector<8x128xf32>,
    %c0_45 = arith.constant 0 : index
    %c1024_46 = arith.constant 1024 : index
    %80 = vector.load %arg6[%c0_45, %c1024_46] : memref<8x1280xf32, #tpu.memory_space<vmem>>, vector<8x128xf32>
    tpu.vector_store %arg6[%c0_45, %c1024_46], %47 {strides = array<i32>} : memref<8x1280xf32, #tpu.memory_space<vmem>>, vector<8x128xf32>,
    %c0_47 = arith.constant 0 : index
    %c0_48 = arith.constant 0 : index
    %81 = vector.load %arg6[%c0_47, %c0_48] : memref<8x1280xf32, #tpu.memory_space<vmem>>, vector<8x1280xf32>
    %c0_49 = arith.constant 0 : index
    %c0_50 = arith.constant 0 : index
    %82 = vector.load %arg4[%c0_49, %c0_50] : memref<1280x128xf32, #tpu.memory_space<vmem>>, vector<1280x128xf32>
    %cst_51 = arith.constant dense<0.000000e+00> : vector<8x128xf32>
    %83 = tpu.matmul %81, %82, %cst_51 {dimension_numbers = #tpu.dot_dimension_numbers<[1], [0], [0], [1], [0, 0, 1, 1], [], []>} : vector<8x1280xf32>, vector<1280x128xf32>, vector<8x128xf32> -> vector<8x128xf32>
    %c0_52 = arith.constant 0 : index
    %c0_53 = arith.constant 0 : index
    %84 = vector.load %arg5[%c0_52, %c0_53] : memref<8x128xf32, #tpu.memory_space<vmem>>, vector<8x128xf32>
    tpu.vector_store %arg5[%c0_52, %c0_53], %83 {strides = array<i32>} : memref<8x128xf32, #tpu.memory_space<vmem>>, vector<8x128xf32>,
    return
  }
  func.func @transform_0(%arg0: i32) -> (i32, i32) {
    %c0_i32 = arith.constant 0 : i32
    %c0_i32_0 = arith.constant 0 : i32
    return %arg0, %c0_i32 : i32, i32
  }
  func.func @transform_1(%arg0: i32) -> (i32, i32) {
    %c0_i32 = arith.constant 0 : i32
    %c0_i32_0 = arith.constant 0 : i32
    return %arg0, %c0_i32 : i32, i32
  }
  func.func @transform_2(%arg0: i32) -> (i32, i32) {
    %c0_i32 = arith.constant 0 : i32
    %c0_i32_0 = arith.constant 0 : i32
    %c0_i32_1 = arith.constant 0 : i32
    return %c0_i32, %c0_i32_0 : i32, i32
  }
  func.func @transform_3(%arg0: i32) -> (i32, i32) {
    %c0_i32 = arith.constant 0 : i32
    %c0_i32_0 = arith.constant 0 : i32
    %c0_i32_1 = arith.constant 0 : i32
    return %c0_i32, %c0_i32_0 : i32, i32
  }
  func.func @transform_4(%arg0: i32) -> (i32, i32) {
    %c0_i32 = arith.constant 0 : i32
    %c0_i32_0 = arith.constant 0 : i32
    return %arg0, %c0_i32 : i32, i32
  }
}

module attributes {stable_mosaic.version = 11 : i64} {
  func.func @_hyper_value_kernel(%arg0: i32, %arg1: memref<8x8xf32, #tpu.memory_space<vmem>>, %arg2: memref<8x16xf32, #tpu.memory_space<vmem>>, %arg3: memref<1280x128xf32, #tpu.memory_space<vmem>>, %arg4: memref<1280x128xf32, #tpu.memory_space<vmem>>, %arg5: memref<8x128xf32, #tpu.memory_space<vmem>>, %arg6: memref<8x1280xf32, #tpu.memory_space<vmem>>) attributes {dimension_semantics = [#tpu.dimension_semantics<parallel>], iteration_bounds = array<i64: 2>, scalar_prefetch = 0 : i64, scratch_operands = 1 : i64, tpu.core_type = #tpu.core_type<tc>, window_params = [{transform_indices = @transform_0, window_bounds = array<i64: 8, 8>}, {transform_indices = @transform_1, window_bounds = array<i64: 8, 16>}, {pipeline_mode = #tpu.pipeline_mode<synchronous>, transform_indices = @transform_2, window_bounds = array<i64: 1280, 128>}, {pipeline_mode = #tpu.pipeline_mode<synchronous>, transform_indices = @transform_3, window_bounds = array<i64: 1280, 128>}, {transform_indices = @transform_4, window_bounds = array<i64: 8, 128>}]} {
    %c0 = arith.constant 0 : index
    %c0_0 = arith.constant 0 : index
    %0 = vector.load %arg1[%c0, %c0_0] : memref<8x8xf32, #tpu.memory_space<vmem>>, vector<8x8xf32>
    %c0_1 = arith.constant 0 : index
    %c0_2 = arith.constant 0 : index
    %1 = vector.load %arg2[%c0_1, %c0_2] : memref<8x16xf32, #tpu.memory_space<vmem>>, vector<8x16xf32>
    %cst = arith.constant 0.000000e+00 : f32
    %2 = vector.broadcast %cst : f32 to vector<8x128xf32>
    %c0_3 = arith.constant 0 : index
    %c1152 = arith.constant 1152 : index
    %3 = vector.load %arg6[%c0_3, %c1152] : memref<8x1280xf32, #tpu.memory_space<vmem>>, vector<8x128xf32>
    tpu.vector_store %arg6[%c0_3, %c1152], %2 {strides = array<i32>} : memref<8x1280xf32, #tpu.memory_space<vmem>>, vector<8x128xf32>,
    %c0_4 = arith.constant 0 : index
    %c1152_5 = arith.constant 1152 : index
    %4 = vector.load %arg6[%c0_4, %c1152_5] : memref<8x1280xf32, #tpu.memory_space<vmem>>, vector<8x8xf32>
    tpu.vector_store %arg6[%c0_4, %c1152_5], %0 {strides = array<i32>} : memref<8x1280xf32, #tpu.memory_space<vmem>>, vector<8x8xf32>,
    %cst_6 = arith.constant 1.000000e+00 : f32
    %5 = vector.broadcast %cst_6 : f32 to vector<8x1xf32>
    %c0_7 = arith.constant 0 : index
    %c1160 = arith.constant 1160 : index
    %6 = vector.load %arg6[%c0_7, %c1160] : memref<8x1280xf32, #tpu.memory_space<vmem>>, vector<8x1xf32>
    tpu.vector_store %arg6[%c0_7, %c1160], %5 {strides = array<i32>} : memref<8x1280xf32, #tpu.memory_space<vmem>>, vector<8x1xf32>,
    %cst_8 = arith.constant 0.000000e+00 : f32
    %7 = vector.broadcast %cst_8 : f32 to vector<8x128xf32>
    %c0_9 = arith.constant 0 : index
    %c1024 = arith.constant 1024 : index
    %8 = vector.load %arg6[%c0_9, %c1024] : memref<8x1280xf32, #tpu.memory_space<vmem>>, vector<8x128xf32>
    tpu.vector_store %arg6[%c0_9, %c1024], %7 {strides = array<i32>} : memref<8x1280xf32, #tpu.memory_space<vmem>>, vector<8x128xf32>,
    %c0_10 = arith.constant 0 : index
    %c1024_11 = arith.constant 1024 : index
    %9 = vector.load %arg6[%c0_10, %c1024_11] : memref<8x1280xf32, #tpu.memory_space<vmem>>, vector<8x16xf32>
    tpu.vector_store %arg6[%c0_10, %c1024_11], %1 {strides = array<i32>} : memref<8x1280xf32, #tpu.memory_space<vmem>>, vector<8x16xf32>,
    %c0_12 = arith.constant 0 : index
    %c1024_13 = arith.constant 1024 : index
    %10 = vector.load %arg6[%c0_12, %c1024_13] : memref<8x1280xf32, #tpu.memory_space<vmem>>, vector<8x128xf32>
    %11 = vector.extract_strided_slice %0 {offsets = [0, 0], sizes = [8, 1], strides = [1, 1]} : vector<8x8xf32> to vector<8x1xf32>
    %12 = vector.broadcast %11 : vector<8x1xf32> to vector<8x128xf32>
    %13 = arith.mulf %12, %10 : vector<8x128xf32>
    %c0_14 = arith.constant 0 : index
    %c0_15 = arith.constant 0 : index
    %14 = vector.load %arg6[%c0_14, %c0_15] : memref<8x1280xf32, #tpu.memory_space<vmem>>, vector<8x128xf32>
    tpu.vector_store %arg6[%c0_14, %c0_15], %13 {strides = array<i32>} : memref<8x1280xf32, #tpu.memory_space<vmem>>, vector<8x128xf32>,
    %15 = vector.extract_strided_slice %0 {offsets = [0, 1], sizes = [8, 1], strides = [1, 1]} : vector<8x8xf32> to vector<8x1xf32>
    %16 = vector.broadcast %15 : vector<8x1xf32> to vector<8x128xf32>
    %17 = arith.mulf %16, %10 : vector<8x128xf32>
    %c0_16 = arith.constant 0 : index
    %c128 = arith.constant 128 : index
    %18 = vector.load %arg6[%c0_16, %c128] : memref<8x1280xf32, #tpu.memory_space<vmem>>, vector<8x128xf32>
    tpu.vector_store %arg6[%c0_16, %c128], %17 {strides = array<i32>} : memref<8x1280xf32, #tpu.memory_space<vmem>>, vector<8x128xf32>,
    %19 = vector.extract_strided_slice %0 {offsets = [0, 2], sizes = [8, 1], strides = [1, 1]} : vector<8x8xf32> to vector<8x1xf32>
    %20 = vector.broadcast %19 : vector<8x1xf32> to vector<8x128xf32>
    %21 = arith.mulf %20, %10 : vector<8x128xf32>
    %c0_17 = arith.constant 0 : index
    %c256 = arith.constant 256 : index
    %22 = vector.load %arg6[%c0_17, %c256] : memref<8x1280xf32, #tpu.memory_space<vmem>>, vector<8x128xf32>
    tpu.vector_store %arg6[%c0_17, %c256], %21 {strides = array<i32>} : memref<8x1280xf32, #tpu.memory_space<vmem>>, vector<8x128xf32>,
    %23 = vector.extract_strided_slice %0 {offsets = [0, 3], sizes = [8, 1], strides = [1, 1]} : vector<8x8xf32> to vector<8x1xf32>
    %24 = vector.broadcast %23 : vector<8x1xf32> to vector<8x128xf32>
    %25 = arith.mulf %24, %10 : vector<8x128xf32>
    %c0_18 = arith.constant 0 : index
    %c384 = arith.constant 384 : index
    %26 = vector.load %arg6[%c0_18, %c384] : memref<8x1280xf32, #tpu.memory_space<vmem>>, vector<8x128xf32>
    tpu.vector_store %arg6[%c0_18, %c384], %25 {strides = array<i32>} : memref<8x1280xf32, #tpu.memory_space<vmem>>, vector<8x128xf32>,
    %27 = vector.extract_strided_slice %0 {offsets = [0, 4], sizes = [8, 1], strides = [1, 1]} : vector<8x8xf32> to vector<8x1xf32>
    %28 = vector.broadcast %27 : vector<8x1xf32> to vector<8x128xf32>
    %29 = arith.mulf %28, %10 : vector<8x128xf32>
    %c0_19 = arith.constant 0 : index
    %c512 = arith.constant 512 : index
    %30 = vector.load %arg6[%c0_19, %c512] : memref<8x1280xf32, #tpu.memory_space<vmem>>, vector<8x128xf32>
    tpu.vector_store %arg6[%c0_19, %c512], %29 {strides = array<i32>} : memref<8x1280xf32, #tpu.memory_space<vmem>>, vector<8x128xf32>,
    %31 = vector.extract_strided_slice %0 {offsets = [0, 5], sizes = [8, 1], strides = [1, 1]} : vector<8x8xf32> to vector<8x1xf32>
    %32 = vector.broadcast %31 : vector<8x1xf32> to vector<8x128xf32>
    %33 = arith.mulf %32, %10 : vector<8x128xf32>
    %c0_20 = arith.constant 0 : index
    %c640 = arith.constant 640 : index
    %34 = vector.load %arg6[%c0_20, %c640] : memref<8x1280xf32, #tpu.memory_space<vmem>>, vector<8x128xf32>
    tpu.vector_store %arg6[%c0_20, %c640], %33 {strides = array<i32>} : memref<8x1280xf32, #tpu.memory_space<vmem>>, vector<8x128xf32>,
    %35 = vector.extract_strided_slice %0 {offsets = [0, 6], sizes = [8, 1], strides = [1, 1]} : vector<8x8xf32> to vector<8x1xf32>
    %36 = vector.broadcast %35 : vector<8x1xf32> to vector<8x128xf32>
    %37 = arith.mulf %36, %10 : vector<8x128xf32>
    %c0_21 = arith.constant 0 : index
    %c768 = arith.constant 768 : index
    %38 = vector.load %arg6[%c0_21, %c768] : memref<8x1280xf32, #tpu.memory_space<vmem>>, vector<8x128xf32>
    tpu.vector_store %arg6[%c0_21, %c768], %37 {strides = array<i32>} : memref<8x1280xf32, #tpu.memory_space<vmem>>, vector<8x128xf32>,
    %39 = vector.extract_strided_slice %0 {offsets = [0, 7], sizes = [8, 1], strides = [1, 1]} : vector<8x8xf32> to vector<8x1xf32>
    %40 = vector.broadcast %39 : vector<8x1xf32> to vector<8x128xf32>
    %41 = arith.mulf %40, %10 : vector<8x128xf32>
    %c0_22 = arith.constant 0 : index
    %c896 = arith.constant 896 : index
    %42 = vector.load %arg6[%c0_22, %c896] : memref<8x1280xf32, #tpu.memory_space<vmem>>, vector<8x128xf32>
    tpu.vector_store %arg6[%c0_22, %c896], %41 {strides = array<i32>} : memref<8x1280xf32, #tpu.memory_space<vmem>>, vector<8x128xf32>,
    %c0_23 = arith.constant 0 : index
    %c0_24 = arith.constant 0 : index
    %43 = vector.load %arg6[%c0_23, %c0_24] : memref<8x1280xf32, #tpu.memory_space<vmem>>, vector<8x1280xf32>
    %c0_25 = arith.constant 0 : index
    %c0_26 = arith.constant 0 : index
    %44 = vector.load %arg3[%c0_25, %c0_26] : memref<1280x128xf32, #tpu.memory_space<vmem>>, vector<1280x128xf32>
    %cst_27 = arith.constant dense<0.000000e+00> : vector<8x128xf32>
    %45 = tpu.matmul %43, %44, %cst_27 {dimension_numbers = #tpu.dot_dimension_numbers<[1], [0], [0], [1], [0, 0, 1, 1], [], []>} : vector<8x1280xf32>, vector<1280x128xf32>, vector<8x128xf32> -> vector<8x128xf32>
    %cst_28 = arith.constant 0.000000e+00 : f32
    %46 = vector.broadcast %cst_28 : f32 to vector<8x128xf32>
    %47 = arith.maximumf %45, %46 : vector<8x128xf32>
    %48 = vector.extract_strided_slice %0 {offsets = [0, 0], sizes = [8, 1], strides = [1, 1]} : vector<8x8xf32> to vector<8x1xf32>
    %49 = vector.broadcast %48 : vector<8x1xf32> to vector<8x128xf32>
    %50 = arith.mulf %49, %47 : vector<8x128xf32>
    %c0_29 = arith.constant 0 : index
    %c0_30 = arith.constant 0 : index
    %51 = vector.load %arg6[%c0_29, %c0_30] : memref<8x1280xf32, #tpu.memory_space<vmem>>, vector<8x128xf32>
    tpu.vector_store %arg6[%c0_29, %c0_30], %50 {strides = array<i32>} : memref<8x1280xf32, #tpu.memory_space<vmem>>, vector<8x128xf32>,
    %52 = vector.extract_strided_slice %0 {offsets = [0, 1], sizes = [8, 1], strides = [1, 1]} : vector<8x8xf32> to vector<8x1xf32>
    %53 = vector.broadcast %52 : vector<8x1xf32> to vector<8x128xf32>
    %54 = arith.mulf %53, %47 : vector<8x128xf32>
    %c0_31 = arith.constant 0 : index
    %c128_32 = arith.constant 128 : index
    %55 = vector.load %arg6[%c0_31, %c128_32] : memref<8x1280xf32, #tpu.memory_space<vmem>>, vector<8x128xf32>
    tpu.vector_store %arg6[%c0_31, %c128_32], %54 {strides = array<i32>} : memref<8x1280xf32, #tpu.memory_space<vmem>>, vector<8x128xf32>,
    %56 = vector.extract_strided_slice %0 {offsets = [0, 2], sizes = [8, 1], strides = [1, 1]} : vector<8x8xf32> to vector<8x1xf32>
    %57 = vector.broadcast %56 : vector<8x1xf32> to vector<8x128xf32>
    %58 = arith.mulf %57, %47 : vector<8x128xf32>
    %c0_33 = arith.constant 0 : index
    %c256_34 = arith.constant 256 : index
    %59 = vector.load %arg6[%c0_33, %c256_34] : memref<8x1280xf32, #tpu.memory_space<vmem>>, vector<8x128xf32>
    tpu.vector_store %arg6[%c0_33, %c256_34], %58 {strides = array<i32>} : memref<8x1280xf32, #tpu.memory_space<vmem>>, vector<8x128xf32>,
    %60 = vector.extract_strided_slice %0 {offsets = [0, 3], sizes = [8, 1], strides = [1, 1]} : vector<8x8xf32> to vector<8x1xf32>
    %61 = vector.broadcast %60 : vector<8x1xf32> to vector<8x128xf32>
    %62 = arith.mulf %61, %47 : vector<8x128xf32>
    %c0_35 = arith.constant 0 : index
    %c384_36 = arith.constant 384 : index
    %63 = vector.load %arg6[%c0_35, %c384_36] : memref<8x1280xf32, #tpu.memory_space<vmem>>, vector<8x128xf32>
    tpu.vector_store %arg6[%c0_35, %c384_36], %62 {strides = array<i32>} : memref<8x1280xf32, #tpu.memory_space<vmem>>, vector<8x128xf32>,
    %64 = vector.extract_strided_slice %0 {offsets = [0, 4], sizes = [8, 1], strides = [1, 1]} : vector<8x8xf32> to vector<8x1xf32>
    %65 = vector.broadcast %64 : vector<8x1xf32> to vector<8x128xf32>
    %66 = arith.mulf %65, %47 : vector<8x128xf32>
    %c0_37 = arith.constant 0 : index
    %c512_38 = arith.constant 512 : index
    %67 = vector.load %arg6[%c0_37, %c512_38] : memref<8x1280xf32, #tpu.memory_space<vmem>>, vector<8x128xf32>
    tpu.vector_store %arg6[%c0_37, %c512_38], %66 {strides = array<i32>} : memref<8x1280xf32, #tpu.memory_space<vmem>>, vector<8x128xf32>,
    %68 = vector.extract_strided_slice %0 {offsets = [0, 5], sizes = [8, 1], strides = [1, 1]} : vector<8x8xf32> to vector<8x1xf32>
    %69 = vector.broadcast %68 : vector<8x1xf32> to vector<8x128xf32>
    %70 = arith.mulf %69, %47 : vector<8x128xf32>
    %c0_39 = arith.constant 0 : index
    %c640_40 = arith.constant 640 : index
    %71 = vector.load %arg6[%c0_39, %c640_40] : memref<8x1280xf32, #tpu.memory_space<vmem>>, vector<8x128xf32>
    tpu.vector_store %arg6[%c0_39, %c640_40], %70 {strides = array<i32>} : memref<8x1280xf32, #tpu.memory_space<vmem>>, vector<8x128xf32>,
    %72 = vector.extract_strided_slice %0 {offsets = [0, 6], sizes = [8, 1], strides = [1, 1]} : vector<8x8xf32> to vector<8x1xf32>
    %73 = vector.broadcast %72 : vector<8x1xf32> to vector<8x128xf32>
    %74 = arith.mulf %73, %47 : vector<8x128xf32>
    %c0_41 = arith.constant 0 : index
    %c768_42 = arith.constant 768 : index
    %75 = vector.load %arg6[%c0_41, %c768_42] : memref<8x1280xf32, #tpu.memory_space<vmem>>, vector<8x128xf32>
    tpu.vector_store %arg6[%c0_41, %c768_42], %74 {strides = array<i32>} : memref<8x1280xf32, #tpu.memory_space<vmem>>, vector<8x128xf32>,
    %76 = vector.extract_strided_slice %0 {offsets = [0, 7], sizes = [8, 1], strides = [1, 1]} : vector<8x8xf32> to vector<8x1xf32>
    %77 = vector.broadcast %76 : vector<8x1xf32> to vector<8x128xf32>
    %78 = arith.mulf %77, %47 : vector<8x128xf32>
    %c0_43 = arith.constant 0 : index
    %c896_44 = arith.constant 896 : index
    %79 = vector.load %arg6[%c0_43, %c896_44] : memref<8x1280xf32, #tpu.memory_space<vmem>>, vector<8x128xf32>
    tpu.vector_store %arg6[%c0_43, %c896_44], %78 {strides = array<i32>} : memref<8x1280xf32, #tpu.memory_space<vmem>>, vector<8x128xf32>,
    %c0_45 = arith.constant 0 : index
    %c1024_46 = arith.constant 1024 : index
    %80 = vector.load %arg6[%c0_45, %c1024_46] : memref<8x1280xf32, #tpu.memory_space<vmem>>, vector<8x128xf32>
    tpu.vector_store %arg6[%c0_45, %c1024_46], %47 {strides = array<i32>} : memref<8x1280xf32, #tpu.memory_space<vmem>>, vector<8x128xf32>,
    %c0_47 = arith.constant 0 : index
    %c0_48 = arith.constant 0 : index
    %81 = vector.load %arg6[%c0_47, %c0_48] : memref<8x1280xf32, #tpu.memory_space<vmem>>, vector<8x1280xf32>
    %c0_49 = arith.constant 0 : index
    %c0_50 = arith.constant 0 : index
    %82 = vector.load %arg4[%c0_49, %c0_50] : memref<1280x128xf32, #tpu.memory_space<vmem>>, vector<1280x128xf32>
    %cst_51 = arith.constant dense<0.000000e+00> : vector<8x128xf32>
    %83 = tpu.matmul %81, %82, %cst_51 {dimension_numbers = #tpu.dot_dimension_numbers<[1], [0], [0], [1], [0, 0, 1, 1], [], []>} : vector<8x1280xf32>, vector<1280x128xf32>, vector<8x128xf32> -> vector<8x128xf32>
    %c0_52 = arith.constant 0 : index
    %c0_53 = arith.constant 0 : index
    %84 = vector.load %arg5[%c0_52, %c0_53] : memref<8x128xf32, #tpu.memory_space<vmem>>, vector<8x128xf32>
    tpu.vector_store %arg5[%c0_52, %c0_53], %83 {strides = array<i32>} : memref<8x128xf32, #tpu.memory_space<vmem>>, vector<8x128xf32>,
    return
  }
  func.func @transform_0(%arg0: i32) -> (i32, i32) {
    %c0_i32 = arith.constant 0 : i32
    %c0_i32_0 = arith.constant 0 : i32
    return %arg0, %c0_i32 : i32, i32
  }
  func.func @transform_1(%arg0: i32) -> (i32, i32) {
    %c0_i32 = arith.constant 0 : i32
    %c0_i32_0 = arith.constant 0 : i32
    return %arg0, %c0_i32 : i32, i32
  }
  func.func @transform_2(%arg0: i32) -> (i32, i32) {
    %c0_i32 = arith.constant 0 : i32
    %c0_i32_0 = arith.constant 0 : i32
    %c0_i32_1 = arith.constant 0 : i32
    return %c0_i32, %c0_i32_0 : i32, i32
  }
  func.func @transform_3(%arg0: i32) -> (i32, i32) {
    %c0_i32 = arith.constant 0 : i32
    %c0_i32_0 = arith.constant 0 : i32
    %c0_i32_1 = arith.constant 0 : i32
    return %c0_i32, %c0_i32_0 : i32, i32
  }
  func.func @transform_4(%arg0: i32) -> (i32, i32) {
    %c0_i32 = arith.constant 0 : i32
    %c0_i32_0 = arith.constant 0 : i32
    return %arg0, %c0_i32 : i32, i32
  }
}

</mosaic_0001>

<llo_original>
// kernel: tpu_custom_call.1
$region0: #{tpu_custom_call.1}
  #allocation0 [shape = 'u32[]', space=smem, size = 0x4, offset = 0x4, fixed_abs, tag = 'smem constant byte address 0x4 - core index']
  #allocation1 [shape = 'u32[144,128]{1,0:T(1,128)}', space=vmem, size = 0x12000, scoped, tag = 'internal scratch']
  #allocation2 [shape = 'f32[8,1280]{1,0:T(8,128)}', space=vmem, size = 0xa000, scoped, tag = 'scratch operand']
  %s0 = inlined_call_operand.vmem [shape: f32[16,8], index: 0, kind: input, shape index: {}]
  %s1 = inlined_call_operand.vmem [shape: f32[16,16], index: 1, kind: input, shape index: {}]
  %s2 = inlined_call_operand.hbm [shape: f32[1280,128], index: 2, kind: input, shape index: {}]
  %s3 = inlined_call_operand.hbm [shape: f32[1280,128], index: 3, kind: input, shape index: {}]
  %s4 = inlined_call_operand.hbm [shape: f32[16,128], index: 4, kind: output, shape index: {}]
  %s5 = sld [smem:[#allocation0]]
  $region57: #{tpu_custom_call.1} parent=0
    _
  %s7 = ssub.s32 1, %s5
  %s8 = scalar_select 0, %s7, %s5
  $region1: #{tpu_custom_call.1} parent=0
    #allocation3 [shape = 'u8[655360]{0}', space=vmem, size = 0xa0000, scoped, tag = 'input window, operand 2, single buffered']
    #allocation4 [shape = 's32[2]{0}', space=sflag, size = 0x8, scoped, tag = 'scoped memory for tpu_custom_call.1']
    #allocation5 [shape = 's32[2]{0}', space=sflag, size = 0x8, scoped, tag = 'scoped memory for tpu_custom_call.1']
    #allocation6 [shape = 'u8[655360]{0}', space=vmem, size = 0xa0000, scoped, tag = 'input window, operand 3, single buffered']
    #allocation7 [shape = 's32[1]{0}', space=sflag, size = 0x4, scoped, tag = 'scoped memory for tpu_custom_call.1']
    #allocation8 [shape = 'u8[8192]{0}', space=vmem, size = 0x2000, scoped, tag = 'output window, operand 0']
    %9 = vsyncpa [#allocation4], 0
    %10 = vsyncpa [#allocation7], 0
    %11 = vsyncpa [#allocation5], 0
    %s12 = scalar_lea.sflag [#allocation5], 1
    %13 = vsyncpa %s12, 0
    loop: start=0, step=1, limit=4
    $region2: #{tpu_custom_call.1} parent=1 // loop_pre_header
      _
    $region3: #{tpu_custom_call.1} parent=1 // loop_header
      %s15 = sphi 0, %s19
      %p16 = scmp.ge.s32.totalorder %s15, 4
      %s25 = sphi 0, %s27
      %s28 = sphi 0, %s25
      %s29 = sphi 0, %s28
      %s45 = sphi 0, %s29
      %s51 = sphi 0, %s53
      %s54 = sphi 0, %s51
      %s55 = sphi 0, %s54
      %s71 = sphi 0, %s55
      %s75 = sphi 0, %s75
      %s77 = sphi 0, %s75
      %s78 = sphi 0, %s77
      %s92 = sphi 0, %s78
      %s96 = sphi 0, %s96
      %s98 = sphi 0, %s96
      %s99 = sphi 0, %s98
      %s113 = sphi 0, %s99
      %s119 = sphi 0, %s121
      %s122 = sphi 0, %s119
      %s123 = sphi 0, %s122
      %s139 = sphi 0, %s123
    $region4: #{tpu_custom_call.1} parent=1 // loop_header_branch
      %18 = sbr.rel (%p16) target = $region8
    $region5: #{tpu_custom_call.1} parent=1 // loop_body
      %s20 = ssub.s32 %s15, 1
      %s21 = ssub.s32 %s15, 2
      %s22 = sadd.s32 %s15, 1
      %s23 = ssub.s32 %s15, %s22
      %p24 = scmp.eq.s32.totalorder %s23, 0
      %s26 = sadd.s32 %s25, 1
      %s27 = scalar_select %p24, %s25, %s26
      %p30 = pneg %p24
      %p31 = scmp.eq.s32.totalorder %s15, 1
      %p32 = por %p30, %p31
      %p33 = scmp.ne.s32.totalorder %s25, %s28
      %p34 = scmp.eq.s32.totalorder %s15, 0
      %p35 = por %p33, %p34
      %p36 = scmp.ne.s32.totalorder %s25, %s28
      %p37 = scmp.eq.s32.totalorder %s20, 1
      %p38 = por %p36, %p37
      %p39 = scmp.ne.s32.totalorder %s28, %s29
      %p40 = scmp.eq.s32.totalorder %s20, 0
      %p41 = por %p39, %p40
      %p42 = scmp.ne.s32.totalorder %s28, %s29
      %p43 = scmp.eq.s32.totalorder %s21, 1
      %p44 = por %p42, %p43
      %p46 = scmp.ne.s32.totalorder %s29, %s45
      %p47 = scmp.eq.s32.totalorder %s21, 0
      %p48 = por %p46, %p47
      %s49 = ssub.s32 %s15, %s22
      %p50 = scmp.eq.s32.totalorder %s49, 0
      %s52 = sadd.s32 %s51, 1
      %s53 = scalar_select %p50, %s51, %s52
      %p56 = pneg %p50
      %p57 = scmp.eq.s32.totalorder %s15, 1
      %p58 = por %p56, %p57
      %p59 = scmp.ne.s32.totalorder %s51, %s54
      %p60 = scmp.eq.s32.totalorder %s15, 0
      %p61 = por %p59, %p60
      %p62 = scmp.ne.s32.totalorder %s51, %s54
      %p63 = scmp.eq.s32.totalorder %s20, 1
      %p64 = por %p62, %p63
      %p65 = scmp.ne.s32.totalorder %s54, %s55
      %p66 = scmp.eq.s32.totalorder %s20, 0
      %p67 = por %p65, %p66
      %p68 = scmp.ne.s32.totalorder %s54, %s55
      %p69 = scmp.eq.s32.totalorder %s21, 1
      %p70 = por %p68, %p69
      %p72 = scmp.ne.s32.totalorder %s55, %s71
      %p73 = scmp.eq.s32.totalorder %s21, 0
      %p74 = por %p72, %p73
      %s76 = sadd.s32 %s75, 1
      %p79 = scmp.eq.s32.totalorder %s15, 1
      %p80 = scmp.ne.s32.totalorder %s75, %s77
      %p81 = scmp.eq.s32.totalorder %s15, 0
      %p82 = por %p80, %p81
      %p83 = scmp.ne.s32.totalorder %s75, %s77
      %p84 = scmp.eq.s32.totalorder %s20, 1
      %p85 = por %p83, %p84
      %p86 = scmp.ne.s32.totalorder %s77, %s78
      %p87 = scmp.eq.s32.totalorder %s20, 0
      %p88 = por %p86, %p87
      %p89 = scmp.ne.s32.totalorder %s77, %s78
      %p90 = scmp.eq.s32.totalorder %s21, 1
      %p91 = por %p89, %p90
      %p93 = scmp.ne.s32.totalorder %s78, %s92
      %p94 = scmp.eq.s32.totalorder %s21, 0
      %p95 = por %p93, %p94
      %s97 = sadd.s32 %s96, 1
      %p100 = scmp.eq.s32.totalorder %s15, 1
      %p101 = scmp.ne.s32.totalorder %s96, %s98
      %p102 = scmp.eq.s32.totalorder %s15, 0
      %p103 = por %p101, %p102
      %p104 = scmp.ne.s32.totalorder %s96, %s98
      %p105 = scmp.eq.s32.totalorder %s20, 1
      %p106 = por %p104, %p105
      %p107 = scmp.ne.s32.totalorder %s98, %s99
      %p108 = scmp.eq.s32.totalorder %s20, 0
      %p109 = por %p107, %p108
      %p110 = scmp.ne.s32.totalorder %s98, %s99
      %p111 = scmp.eq.s32.totalorder %s21, 1
      %p112 = por %p110, %p111
      %p114 = scmp.ne.s32.totalorder %s99, %s113
      %p115 = scmp.eq.s32.totalorder %s21, 0
      %p116 = por %p114, %p115
      %s117 = ssub.s32 %s15, %s22
      %p118 = scmp.eq.s32.totalorder %s117, 0
      %s120 = sadd.s32 %s119, 1
      %s121 = scalar_select %p118, %s119, %s120
      %p124 = pneg %p118
      %p125 = scmp.eq.s32.totalorder %s15, 1
      %p126 = por %p124, %p125
      %p127 = scmp.ne.s32.totalorder %s119, %s122
      %p128 = scmp.eq.s32.totalorder %s15, 0
      %p129 = por %p127, %p128
      %p130 = scmp.ne.s32.totalorder %s119, %s122
      %p131 = scmp.eq.s32.totalorder %s20, 1
      %p132 = por %p130, %p131
      %p133 = scmp.ne.s32.totalorder %s122, %s123
      %p134 = scmp.eq.s32.totalorder %s20, 0
      %p135 = por %p133, %p134
      %p136 = scmp.ne.s32.totalorder %s122, %s123
      %p137 = scmp.eq.s32.totalorder %s21, 1
      %p138 = por %p136, %p137
      %p140 = scmp.ne.s32.totalorder %s123, %s139
      %p141 = scmp.eq.s32.totalorder %s21, 0
      %p142 = por %p140, %p141
      %p143 = scmp.le.s32.totalorder 1, %s15
      %p144 = scmp.lt.s32.totalorder %s15, 3
      %p145 = pnand %p143, %p144
      %p146 = pneg %p145
      // Predicated region
      $region9: #{tpu_custom_call.1} parent=5 // pred_check
        _
      $region10: #{tpu_custom_call.1} parent=5 // pred_check_branch
        %148 = sbr.rel (%p145) target = $region12
      $region11: #{tpu_custom_call.1} parent=5 // pred_region
        %s149 = ssub.s32 %s15, 1
        // Predicated region
        $region13: #{tpu_custom_call.1} parent=11 // pred_check
          %p150 = pneg %p88
        $region14: #{tpu_custom_call.1} parent=11 // pred_check_branch
          %152 = sbr.rel (%p150) target = $region16
        $region15: #{tpu_custom_call.1} parent=11 // pred_region
          %s154 = ssub.s32 20480, 20480
          %155 = vsyncadd [#allocation4], %s154
          %s156 = sshll.u32 [#allocation3], 4
          %s157 = int_to_ptr.vmem [resolvable:$true] %s156
          %162 = dma.hbm_to_vmem [thread:$0]  %s2, 20480, %s157, [#allocation4], 128, 128, 8
        $region16: #{tpu_custom_call.1} parent=11 // pred_fallthru
          _
        // Predicated region
        $region17: #{tpu_custom_call.1} parent=11 // pred_check
          %p163 = pneg %p109
        $region18: #{tpu_custom_call.1} parent=11 // pred_check_branch
          %165 = sbr.rel (%p163) target = $region20
        $region19: #{tpu_custom_call.1} parent=11 // pred_region
          %s167 = ssub.s32 20480, 20480
          %168 = vsyncadd [#allocation7], %s167
          %s169 = sshll.u32 [#allocation6], 4
          %s170 = int_to_ptr.vmem [resolvable:$true] %s169
          %175 = dma.hbm_to_vmem [thread:$0]  %s3, 20480, %s170, [#allocation7], 128, 128, 8
        $region20: #{tpu_custom_call.1} parent=11 // pred_fallthru
          _
      $region12: #{tpu_custom_call.1} parent=5 // pred_fallthru
        _
      %p176 = scmp.lt.s32.totalorder %s15, 2
      // Predicated region
      $region21: #{tpu_custom_call.1} parent=5 // pred_check
        %p177 = pneg %p176
      $region22: #{tpu_custom_call.1} parent=5 // pred_check_branch
        %179 = sbr.rel (%p177) target = $region24
      $region23: #{tpu_custom_call.1} parent=5 // pred_region
        // Predicated region
        $region25: #{tpu_custom_call.1} parent=23 // pred_check
          %p180 = pneg %p35
        $region26: #{tpu_custom_call.1} parent=23 // pred_check_branch
          %182 = sbr.rel (%p180) target = $region28
        $region27: #{tpu_custom_call.1} parent=23 // pred_region
          %p183 = scmp.lt.s32.totalorder %s15, 1
          %s184 = scalar_select %p183, %s15, 1
          %s185 = smul.addr %s184, 8
          %s186 = scalar_lea.vmem %s0, %s185
        $region28: #{tpu_custom_call.1} parent=23 // pred_fallthru
          _
        // Predicated region
        $region29: #{tpu_custom_call.1} parent=23 // pred_check
          %p187 = pneg %p61
        $region30: #{tpu_custom_call.1} parent=23 // pred_check_branch
          %189 = sbr.rel (%p187) target = $region32
        $region31: #{tpu_custom_call.1} parent=23 // pred_region
          %p190 = scmp.lt.s32.totalorder %s15, 1
          %s191 = scalar_select %p190, %s15, 1
          %s192 = smul.addr %s191, 8
          %s193 = scalar_lea.vmem %s1, %s192
        $region32: #{tpu_custom_call.1} parent=23 // pred_fallthru
          _
      $region24: #{tpu_custom_call.1} parent=5 // pred_fallthru
        _
      %p194 = scmp.le.s32.totalorder 1, %s15
      %p195 = scmp.lt.s32.totalorder %s15, 3
      %p196 = pnand %p194, %p195
      %p197 = pneg %p196
      // Predicated region
      $region33: #{tpu_custom_call.1} parent=5 // pred_check
        _
      $region34: #{tpu_custom_call.1} parent=5 // pred_check_branch
        %199 = sbr.rel (%p196) target = $region36
      $region35: #{tpu_custom_call.1} parent=5 // pred_region
        %s200 = ssub.s32 %s15, 1
        // Predicated region
        $region37: #{tpu_custom_call.1} parent=35 // pred_check
          %p201 = pneg %p88
        $region38: #{tpu_custom_call.1} parent=35 // pred_check_branch
          %203 = sbr.rel (%p201) target = $region40
        $region39: #{tpu_custom_call.1} parent=35 // pred_region
          %204 = dma.done [#allocation4], 20480
        $region40: #{tpu_custom_call.1} parent=35 // pred_fallthru
          _
        // Predicated region
        $region41: #{tpu_custom_call.1} parent=35 // pred_check
          %p205 = pneg %p109
        $region42: #{tpu_custom_call.1} parent=35 // pred_check_branch
          %207 = sbr.rel (%p205) target = $region44
        $region43: #{tpu_custom_call.1} parent=35 // pred_region
          %208 = dma.done [#allocation7], 20480
        $region44: #{tpu_custom_call.1} parent=35 // pred_fallthru
          _
        %p209 = scmp.lt.s32.totalorder %s20, 1
        %s210 = scalar_select %p209, %s20, 1
        %s211 = smul.addr %s210, 8
        %s212 = scalar_lea.vmem %s0, %s211
        %p213 = pneg %p41
        %p214 = pneg %p38
        %p215 = scmp.lt.s32.totalorder %s20, 1
        %s216 = scalar_select %p215, %s20, 1
        %s217 = smul.addr %s216, 8
        %s218 = scalar_lea.vmem %s1, %s217
        %p219 = pneg %p67
        %p220 = pneg %p64
        %p221 = pneg %p88
        %p222 = pneg %p85
        %p223 = pneg %p109
        %p224 = pneg %p106
        %p225 = pneg %p135
        %p226 = pneg %p132
        %s227 = sand.u32 %s122, 1
        %s228 = scalar_lea.sflag [#allocation5], %s227
        %s229 = sand.u32 %s122, 1
        %s230 = smul.addr %s229, 8
        %s231 = scalar_lea.vmem [#allocation8], %s230
        %p232 = scmp.lt.s32.totalorder %s20, 1
        %s233 = scalar_select %p232, %s20, 1
        %s234 = smul.addr %s233, 8
        %s235 = scalar_lea.vmem %s0, %s234
        %p236 = scmp.lt.s32.totalorder %s20, 1
        %s237 = scalar_select %p236, %s20, 1
        %s238 = smul.addr %s237, 8
        %s239 = scalar_lea.vmem %s1, %s238
        %v240 = vld [vmem:[%s235] sm:$0xff]
        %v241 = vld [vmem:[%s239] sm:$0xff]
        %242 = vst [vmem:[#allocation2 + $0x48] sm:$0xff] 0.0
        %vm243 = vcmask 64512
        %244 = vst.msk [vmem:[#allocation2 + $0x48] sm:$0xff] %vm243, %v240
        %vm245 = vcmask 72768
        %246 = vst.msk [vmem:[#allocation2 + $0x48] sm:$0xff] %vm245, 1.0
        %247 = vst [vmem:[#allocation2 + $0x40] sm:$0xff] 0.0
        %vm248 = vcmask 130048
        %249 = vst.msk [vmem:[#allocation2 + $0x40] sm:$0xff] %vm248, %v241
        %v250 = vld [vmem:[#allocation2 + $0x40] sm:$0xff]
        %252 = vset.pattern.permute.xlu0 0
        %253 = vperm.xlu0 %252, %v240
        %v254 = vpop.permute.xlu0 %253
        %v256 = vmul.f32 %v254, %v250
        %257 = vst [vmem:[#allocation2] sm:$0xff] %v256
        %258 = vset.pattern.permute.xlu0 1
        %259 = vperm.xlu0 %258, %v240
        %v260 = vpop.permute.xlu0 %259
        %v262 = vmul.f32 %v260, %v250
        %263 = vst [vmem:[#allocation2 + $0x8] sm:$0xff] %v262
        %264 = vset.pattern.permute.xlu0 2
        %265 = vperm.xlu0 %264, %v240
        %v266 = vpop.permute.xlu0 %265
        %v268 = vmul.f32 %v266, %v250
        %269 = vst [vmem:[#allocation2 + $0x10] sm:$0xff] %v268
        %270 = vset.pattern.permute.xlu0 3
        %271 = vperm.xlu0 %270, %v240
        %v272 = vpop.permute.xlu0 %271
        %v274 = vmul.f32 %v272, %v250
        %275 = vst [vmem:[#allocation2 + $0x18] sm:$0xff] %v274
        %276 = vset.pattern.permute.xlu0 4
        %277 = vperm.xlu0 %276, %v240
        %v278 = vpop.permute.xlu0 %277
        %v280 = vmul.f32 %v278, %v250
        %281 = vst [vmem:[#allocation2 + $0x20] sm:$0xff] %v280
        %282 = vset.pattern.permute.xlu0 5
        %283 = vperm.xlu0 %282, %v240
        %v284 = vpop.permute.xlu0 %283
        %v286 = vmul.f32 %v284, %v250
        %287 = vst [vmem:[#allocation2 + $0x28] sm:$0xff] %v286
        %288 = vset.pattern.permute.xlu0 6
        %289 = vperm.xlu0 %288, %v240
        %v290 = vpop.permute.xlu0 %289
        %v292 = vmul.f32 %v290, %v250
        %293 = vst [vmem:[#allocation2 + $0x30] sm:$0xff] %v292
        %294 = vset.pattern.permute.xlu0 7
        %295 = vperm.xlu0 %294, %v240
        %v296 = vpop.permute.xlu0 %295
        %v298 = vmul.f32 %v296, %v250
        %299 = vst [vmem:[#allocation2 + $0x38] sm:$0xff] %v298
        %v300 = vld [vmem:[#allocation2] sm:$0xff]
        %v301 = vld [vmem:[#allocation2 + $0x8] sm:$0xff]
        %v302 = vld [vmem:[#allocation2 + $0x10] sm:$0xff]
        %v303 = vld [vmem:[#allocation2 + $0x18] sm:$0xff]
        %v304 = vld [vmem:[#allocation2 + $0x20] sm:$0xff]
        %v305 = vld [vmem:[#allocation2 + $0x28] sm:$0xff]
        %v306 = vld [vmem:[#allocation2 + $0x30] sm:$0xff]
        %v307 = vld [vmem:[#allocation2 + $0x38] sm:$0xff]
        %v308 = vld [vmem:[#allocation2 + $0x40] sm:$0xff]
        %v309 = vld [vmem:[#allocation2 + $0x48] sm:$0xff]
        %v310 = vld [vmem:[#allocation3] sm:$0xff]
        %v311 = vld [vmem:[#allocation3 + $0x8] sm:$0xff]
        %v312 = vld [vmem:[#allocation3 + $0x10] sm:$0xff]
        %v313 = vld [vmem:[#allocation3 + $0x18] sm:$0xff]
        %v314 = vld [vmem:[#allocation3 + $0x20] sm:$0xff]
        %v315 = vld [vmem:[#allocation3 + $0x28] sm:$0xff]
        %v316 = vld [vmem:[#allocation3 + $0x30] sm:$0xff]
        %v317 = vld [vmem:[#allocation3 + $0x38] sm:$0xff]
        %v318 = vld [vmem:[#allocation3 + $0x40] sm:$0xff]
        %v319 = vld [vmem:[#allocation3 + $0x48] sm:$0xff]
        %v320 = vld [vmem:[#allocation3 + $0x50] sm:$0xff]
        %v321 = vld [vmem:[#allocation3 + $0x58] sm:$0xff]
        %v322 = vld [vmem:[#allocation3 + $0x60] sm:$0xff]
        %v323 = vld [vmem:[#allocation3 + $0x68] sm:$0xff]
        %v324 = vld [vmem:[#allocation3 + $0x70] sm:$0xff]
        %v325 = vld [vmem:[#allocation3 + $0x78] sm:$0xff]
        %v326 = vld [vmem:[#allocation3 + $0x80] sm:$0xff]
        %v327 = vld [vmem:[#allocation3 + $0x88] sm:$0xff]
        %v328 = vld [vmem:[#allocation3 + $0x90] sm:$0xff]
        %v329 = vld [vmem:[#allocation3 + $0x98] sm:$0xff]
        %v330 = vld [vmem:[#allocation3 + $0xa0] sm:$0xff]
        %v331 = vld [vmem:[#allocation3 + $0xa8] sm:$0xff]
        %v332 = vld [vmem:[#allocation3 + $0xb0] sm:$0xff]
        %v333 = vld [vmem:[#allocation3 + $0xb8] sm:$0xff]
        %v334 = vld [vmem:[#allocation3 + $0xc0] sm:$0xff]
        %v335 = vld [vmem:[#allocation3 + $0xc8] sm:$0xff]
        %v336 = vld [vmem:[#allocation3 + $0xd0] sm:$0xff]
        %v337 = vld [vmem:[#allocation3 + $0xd8] sm:$0xff]
        %v338 = vld [vmem:[#allocation3 + $0xe0] sm:$0xff]
        %v339 = vld [vmem:[#allocation3 + $0xe8] sm:$0xff]
        %v340 = vld [vmem:[#allocation3 + $0xf0] sm:$0xff]
        %v341 = vld [vmem:[#allocation3 + $0xf8] sm:$0xff]
        %v342 = vld [vmem:[#allocation3 + $0x100] sm:$0xff]
        %v343 = vld [vmem:[#allocation3 + $0x108] sm:$0xff]
        %v344 = vld [vmem:[#allocation3 + $0x110] sm:$0xff]
        %v345 = vld [vmem:[#allocation3 + $0x118] sm:$0xff]
        %v346 = vld [vmem:[#allocation3 + $0x120] sm:$0xff]
        %v347 = vld [vmem:[#allocation3 + $0x128] sm:$0xff]
        %v348 = vld [vmem:[#allocation3 + $0x130] sm:$0xff]
        %v349 = vld [vmem:[#allocation3 + $0x138] sm:$0xff]
        %v350 = vld [vmem:[#allocation3 + $0x140] sm:$0xff]
        %v351 = vld [vmem:[#allocation3 + $0x148] sm:$0xff]
        %v352 = vld [vmem:[#allocation3 + $0x150] sm:$0xff]
        %v353 = vld [vmem:[#allocation3 + $0x158] sm:$0xff]
        %v354 = vld [vmem:[#allocation3 + $0x160] sm:$0xff]
        %v355 = vld [vmem:[#allocation3 + $0x168] sm:$0xff]
        %v356 = vld [vmem:[#allocation3 + $0x170] sm:$0xff]
        %v357 = vld [vmem:[#allocation3 + $0x178] sm:$0xff]
        %v358 = vld [vmem:[#allocation3 + $0x180] sm:$0xff]
        %v359 = vld [vmem:[#allocation3 + $0x188] sm:$0xff]
        %v360 = vld [vmem:[#allocation3 + $0x190] sm:$0xff]
        %v361 = vld [vmem:[#allocation3 + $0x198] sm:$0xff]
        %v362 = vld [vmem:[#allocation3 + $0x1a0] sm:$0xff]
        %v363 = vld [vmem:[#allocation3 + $0x1a8] sm:$0xff]
        %v364 = vld [vmem:[#allocation3 + $0x1b0] sm:$0xff]
        %v365 = vld [vmem:[#allocation3 + $0x1b8] sm:$0xff]
        %v366 = vld [vmem:[#allocation3 + $0x1c0] sm:$0xff]
        %v367 = vld [vmem:[#allocation3 + $0x1c8] sm:$0xff]
        %v368 = vld [vmem:[#allocation3 + $0x1d0] sm:$0xff]
        %v369 = vld [vmem:[#allocation3 + $0x1d8] sm:$0xff]
        %v370 = vld [vmem:[#allocation3 + $0x1e0] sm:$0xff]
        %v371 = vld [vmem:[#allocation3 + $0x1e8] sm:$0xff]
        %v372 = vld [vmem:[#allocation3 + $0x1f0] sm:$0xff]
        %v373 = vld [vmem:[#allocation3 + $0x1f8] sm:$0xff]
        %v374 = vld [vmem:[#allocation3 + $0x200] sm:$0xff]
        %v375 = vld [vmem:[#allocation3 + $0x208] sm:$0xff]
        %v376 = vld [vmem:[#allocation3 + $0x210] sm:$0xff]
        %v377 = vld [vmem:[#allocation3 + $0x218] sm:$0xff]
        %v378 = vld [vmem:[#allocation3 + $0x220] sm:$0xff]
        %v379 = vld [vmem:[#allocation3 + $0x228] sm:$0xff]
        %v380 = vld [vmem:[#allocation3 + $0x230] sm:$0xff]
        %v381 = vld [vmem:[#allocation3 + $0x238] sm:$0xff]
        %v382 = vld [vmem:[#allocation3 + $0x240] sm:$0xff]
        %v383 = vld [vmem:[#allocation3 + $0x248] sm:$0xff]
        %v384 = vld [vmem:[#allocation3 + $0x250] sm:$0xff]
        %v385 = vld [vmem:[#allocation3 + $0x258] sm:$0xff]
        %v386 = vld [vmem:[#allocation3 + $0x260] sm:$0xff]
        %v387 = vld [vmem:[#allocation3 + $0x268] sm:$0xff]
        %v388 = vld [vmem:[#allocation3 + $0x270] sm:$0xff]
        %v389 = vld [vmem:[#allocation3 + $0x278] sm:$0xff]
        %v390 = vld [vmem:[#allocation3 + $0x280] sm:$0xff]
        %v391 = vld [vmem:[#allocation3 + $0x288] sm:$0xff]
        %v392 = vld [vmem:[#allocation3 + $0x290] sm:$0xff]
        %v393 = vld [vmem:[#allocation3 + $0x298] sm:$0xff]
        %v394 = vld [vmem:[#allocation3 + $0x2a0] sm:$0xff]
        %v395 = vld [vmem:[#allocation3 + $0x2a8] sm:$0xff]
        %v396 = vld [vmem:[#allocation3 + $0x2b0] sm:$0xff]
        %v397 = vld [vmem:[#allocation3 + $0x2b8] sm:$0xff]
        %v398 = vld [vmem:[#allocation3 + $0x2c0] sm:$0xff]
        %v399 = vld [vmem:[#allocation3 + $0x2c8] sm:$0xff]
        %v400 = vld [vmem:[#allocation3 + $0x2d0] sm:$0xff]
        %v401 = vld [vmem:[#allocation3 + $0x2d8] sm:$0xff]
        %v402 = vld [vmem:[#allocation3 + $0x2e0] sm:$0xff]
        %v403 = vld [vmem:[#allocation3 + $0x2e8] sm:$0xff]
        %v404 = vld [vmem:[#allocation3 + $0x2f0] sm:$0xff]
        %v405 = vld [vmem:[#allocation3 + $0x2f8] sm:$0xff]
        %v406 = vld [vmem:[#allocation3 + $0x300] sm:$0xff]
        %v407 = vld [vmem:[#allocation3 + $0x308] sm:$0xff]
        %v408 = vld [vmem:[#allocation3 + $0x310] sm:$0xff]
        %v409 = vld [vmem:[#allocation3 + $0x318] sm:$0xff]
        %v410 = vld [vmem:[#allocation3 + $0x320] sm:$0xff]
        %v411 = vld [vmem:[#allocation3 + $0x328] sm:$0xff]
        %v412 = vld [vmem:[#allocation3 + $0x330] sm:$0xff]
        %v413 = vld [vmem:[#allocation3 + $0x338] sm:$0xff]
        %v414 = vld [vmem:[#allocation3 + $0x340] sm:$0xff]
        %v415 = vld [vmem:[#allocation3 + $0x348] sm:$0xff]
        %v416 = vld [vmem:[#allocation3 + $0x350] sm:$0xff]
        %v417 = vld [vmem:[#allocation3 + $0x358] sm:$0xff]
        %v418 = vld [vmem:[#allocation3 + $0x360] sm:$0xff]
        %v419 = vld [vmem:[#allocation3 + $0x368] sm:$0xff]
        %v420 = vld [vmem:[#allocation3 + $0x370] sm:$0xff]
        %v421 = vld [vmem:[#allocation3 + $0x378] sm:$0xff]
        %v422 = vld [vmem:[#allocation3 + $0x380] sm:$0xff]
        %v423 = vld [vmem:[#allocation3 + $0x388] sm:$0xff]
        %v424 = vld [vmem:[#allocation3 + $0x390] sm:$0xff]
        %v425 = vld [vmem:[#allocation3 + $0x398] sm:$0xff]
        %v426 = vld [vmem:[#allocation3 + $0x3a0] sm:$0xff]
        %v427 = vld [vmem:[#allocation3 + $0x3a8] sm:$0xff]
        %v428 = vld [vmem:[#allocation3 + $0x3b0] sm:$0xff]
        %v429 = vld [vmem:[#allocation3 + $0x3b8] sm:$0xff]
        %v430 = vld [vmem:[#allocation3 + $0x3c0] sm:$0xff]
        %v431 = vld [vmem:[#allocation3 + $0x3c8] sm:$0xff]
        %v432 = vld [vmem:[#allocation3 + $0x3d0] sm:$0xff]
        %v433 = vld [vmem:[#allocation3 + $0x3d8] sm:$0xff]
        %v434 = vld [vmem:[#allocation3 + $0x3e0] sm:$0xff]
        %v435 = vld [vmem:[#allocation3 + $0x3e8] sm:$0xff]
        %v436 = vld [vmem:[#allocation3 + $0x3f0] sm:$0xff]
        %v437 = vld [vmem:[#allocation3 + $0x3f8] sm:$0xff]
        %v438 = vld [vmem:[#allocation3 + $0x400] sm:$0xff]
        %v439 = vld [vmem:[#allocation3 + $0x408] sm:$0xff]
        %v440 = vld [vmem:[#allocation3 + $0x410] sm:$0xff]
        %v441 = vld [vmem:[#allocation3 + $0x418] sm:$0xff]
        %v442 = vld [vmem:[#allocation3 + $0x420] sm:$0xff]
        %v443 = vld [vmem:[#allocation3 + $0x428] sm:$0xff]
        %v444 = vld [vmem:[#allocation3 + $0x430] sm:$0xff]
        %v445 = vld [vmem:[#allocation3 + $0x438] sm:$0xff]
        %v446 = vld [vmem:[#allocation3 + $0x440] sm:$0xff]
        %v447 = vld [vmem:[#allocation3 + $0x448] sm:$0xff]
        %v448 = vld [vmem:[#allocation3 + $0x450] sm:$0xff]
        %v449 = vld [vmem:[#allocation3 + $0x458] sm:$0xff]
        %v450 = vld [vmem:[#allocation3 + $0x460] sm:$0xff]
        %v451 = vld [vmem:[#allocation3 + $0x468] sm:$0xff]
        %v452 = vld [vmem:[#allocation3 + $0x470] sm:$0xff]
        %v453 = vld [vmem:[#allocation3 + $0x478] sm:$0xff]
        %v454 = vld [vmem:[#allocation3 + $0x480] sm:$0xff]
        %v455 = vld [vmem:[#allocation3 + $0x488] sm:$0xff]
        %v456 = vld [vmem:[#allocation3 + $0x490] sm:$0xff]
        %v457 = vld [vmem:[#allocation3 + $0x498] sm:$0xff]
        %v458 = vld [vmem:[#allocation3 + $0x4a0] sm:$0xff]
        %v459 = vld [vmem:[#allocation3 + $0x4a8] sm:$0xff]
        %v460 = vld [vmem:[#allocation3 + $0x4b0] sm:$0xff]
        %v461 = vld [vmem:[#allocation3 + $0x4b8] sm:$0xff]
        %v462 = vld [vmem:[#allocation3 + $0x4c0] sm:$0xff]
        %v463 = vld [vmem:[#allocation3 + $0x4c8] sm:$0xff]
        %v464 = vld [vmem:[#allocation3 + $0x4d0] sm:$0xff]
        %v465 = vld [vmem:[#allocation3 + $0x4d8] sm:$0xff]
        %v466 = vld [vmem:[#allocation3 + $0x4e0] sm:$0xff]
        %v467 = vld [vmem:[#allocation3 + $0x4e8] sm:$0xff]
        %v468 = vld [vmem:[#allocation3 + $0x4f0] sm:$0xff]
        %v469 = vld [vmem:[#allocation3 + $0x4f8] sm:$0xff]
        %470 = vmatprep.subr.mxu0 0.0
        %471 = vmatpush1.msra.mxu0 %v310
        %472 = vmatprep.subr.mxu0 0.0
        %473 = vmatpush1.msra.mxu0 %v311
        %474 = vmatprep.subr.mxu0 0.0
        %475 = vmatpush1.msra.mxu0 %v312
        %476 = vmatprep.subr.mxu0 0.0
        %477 = vmatpush1.msra.mxu0 %v313
        %478 = vmatprep.subr.mxu0 0.0
        %479 = vmatpush1.msra.mxu0 %v314
        %480 = vmatprep.subr.mxu0 0.0
        %481 = vmatpush1.msra.mxu0 %v315
        %482 = vmatprep.subr.mxu0 0.0
        %483 = vmatpush1.msra.mxu0 %v316
        %484 = vmatprep.subr.mxu0 0.0
        %485 = vmatpush1.msra.mxu0 %v317
        %486 = vmatprep.subr.mxu0 0.0
        %487 = vmatpush1.msra.mxu0 %v318
        %488 = vmatprep.subr.mxu0 0.0
        %489 = vmatpush1.msra.mxu0 %v319
        %490 = vmatprep.subr.mxu0 0.0
        %491 = vmatpush1.msra.mxu0 %v320
        %492 = vmatprep.subr.mxu0 0.0
        %493 = vmatpush1.msra.mxu0 %v321
        %494 = vmatprep.subr.mxu0 0.0
        %495 = vmatpush1.msra.mxu0 %v322
        %496 = vmatprep.subr.mxu0 0.0
        %497 = vmatpush1.msra.mxu0 %v323
        %498 = vmatprep.subr.mxu0 0.0
        %499 = vmatpush1.msra.mxu0 %v324
        %500 = vmatprep.subr.mxu0 0.0
        %501 = vmatpush1.msra.mxu0 %v325
        %502 = vmatprep.subr.mxu0 0.0
        %503 = vmatpush1.msra.mxu0 %v326
        %504 = vmatprep.subr.mxu0 0.0
        %505 = vmatpush1.msra.mxu0 %v327
        %506 = vmatprep.subr.mxu0 0.0
        %507 = vmatpush1.msra.mxu0 %v328
        %508 = vmatprep.subr.mxu0 0.0
        %509 = vmatpush1.msra.mxu0 %v329
        %510 = vmatprep.subr.mxu0 0.0
        %511 = vmatpush1.msra.mxu0 %v330
        %512 = vmatprep.subr.mxu0 0.0
        %513 = vmatpush1.msra.mxu0 %v331
        %514 = vmatprep.subr.mxu0 0.0
        %515 = vmatpush1.msra.mxu0 %v332
        %516 = vmatprep.subr.mxu0 0.0
        %517 = vmatpush1.msra.mxu0 %v333
        %518 = vmatprep.subr.mxu0 0.0
        %519 = vmatpush1.msra.mxu0 %v334
        %520 = vmatprep.subr.mxu0 0.0
        %521 = vmatpush1.msra.mxu0 %v335
        %522 = vmatprep.subr.mxu0 0.0
        %523 = vmatpush1.msra.mxu0 %v336
        %524 = vmatprep.subr.mxu0 0.0
        %525 = vmatpush1.msra.mxu0 %v337
        %526 = vmatprep.subr.mxu0 0.0
        %527 = vmatpush1.msra.mxu0 %v338
        %528 = vmatprep.subr.mxu0 0.0
        %529 = vmatpush1.msra.mxu0 %v339
        %530 = vmatprep.subr.mxu0 0.0
        %531 = vmatpush1.msra.mxu0 %v340
        %532 = vmatprep.subr.mxu0 0.0
        %533 = vmatpush1.msra.mxu0 %v341
        %534 = vmatprep.mubr.f32.mxu0 %v301
        %535 = vmatmul.mubr.f32.gmra.mrb[0].mxu0 %v300
        %v536 = vpop.f32.mrb[0].mxu0
        %v537 = vadd.f32 0.0, %v536
        %v538 = vpop.f32.mrb[0].mxu0
        %539 = vdwg.mxu0
        %540 = vmatprep.subr.mxu0 0.0
        %541 = vmatpush1.msra.mxu0 %v342
        %542 = vmatprep.subr.mxu0 0.0
        %543 = vmatpush1.msra.mxu0 %v343
        %544 = vmatprep.subr.mxu0 0.0
        %545 = vmatpush1.msra.mxu0 %v344
        %546 = vmatprep.subr.mxu0 0.0
        %547 = vmatpush1.msra.mxu0 %v345
        %548 = vmatprep.subr.mxu0 0.0
        %549 = vmatpush1.msra.mxu0 %v346
        %550 = vmatprep.subr.mxu0 0.0
        %551 = vmatpush1.msra.mxu0 %v347
        %552 = vmatprep.subr.mxu0 0.0
        %553 = vmatpush1.msra.mxu0 %v348
        %554 = vmatprep.subr.mxu0 0.0
        %555 = vmatpush1.msra.mxu0 %v349
        %556 = vmatprep.subr.mxu0 0.0
        %557 = vmatpush1.msra.mxu0 %v350
        %558 = vmatprep.subr.mxu0 0.0
        %559 = vmatpush1.msra.mxu0 %v351
        %560 = vmatprep.subr.mxu0 0.0
        %561 = vmatpush1.msra.mxu0 %v352
        %562 = vmatprep.subr.mxu0 0.0
        %563 = vmatpush1.msra.mxu0 %v353
        %564 = vmatprep.subr.mxu0 0.0
        %565 = vmatpush1.msra.mxu0 %v354
        %566 = vmatprep.subr.mxu0 0.0
        %567 = vmatpush1.msra.mxu0 %v355
        %568 = vmatprep.subr.mxu0 0.0
        %569 = vmatpush1.msra.mxu0 %v356
        %570 = vmatprep.subr.mxu0 0.0
        %571 = vmatpush1.msra.mxu0 %v357
        %572 = vmatprep.subr.mxu0 0.0
        %573 = vmatpush1.msra.mxu0 %v358
        %574 = vmatprep.subr.mxu0 0.0
        %575 = vmatpush1.msra.mxu0 %v359
        %576 = vmatprep.subr.mxu0 0.0
        %577 = vmatpush1.msra.mxu0 %v360
        %578 = vmatprep.subr.mxu0 0.0
        %579 = vmatpush1.msra.mxu0 %v361
        %580 = vmatprep.subr.mxu0 0.0
        %581 = vmatpush1.msra.mxu0 %v362
        %582 = vmatprep.subr.mxu0 0.0
        %583 = vmatpush1.msra.mxu0 %v363
        %584 = vmatprep.subr.mxu0 0.0
        %585 = vmatpush1.msra.mxu0 %v364
        %586 = vmatprep.subr.mxu0 0.0
        %587 = vmatpush1.msra.mxu0 %v365
        %588 = vmatprep.subr.mxu0 0.0
        %589 = vmatpush1.msra.mxu0 %v366
        %590 = vmatprep.subr.mxu0 0.0
        %591 = vmatpush1.msra.mxu0 %v367
        %592 = vmatprep.subr.mxu0 0.0
        %593 = vmatpush1.msra.mxu0 %v368
        %594 = vmatprep.subr.mxu0 0.0
        %595 = vmatpush1.msra.mxu0 %v369
        %596 = vmatprep.subr.mxu0 0.0
        %597 = vmatpush1.msra.mxu0 %v370
        %598 = vmatprep.subr.mxu0 0.0
        %599 = vmatpush1.msra.mxu0 %v371
        %600 = vmatprep.subr.mxu0 0.0
        %601 = vmatpush1.msra.mxu0 %v372
        %602 = vmatprep.subr.mxu0 0.0
        %603 = vmatpush1.msra.mxu0 %v373
        %604 = vmatprep.mubr.f32.mxu0 %v303
        %605 = vmatmul.mubr.f32.gmra.mrb[0].mxu0 %v302
        %v606 = vpop.f32.mrb[0].mxu0
        %v607 = vadd.f32 %v537, %v606
        %v608 = vpop.f32.mrb[0].mxu0
        %609 = vdwg.mxu0
        %610 = vmatprep.subr.mxu0 0.0
        %611 = vmatpush1.msra.mxu0 %v374
        %612 = vmatprep.subr.mxu0 0.0
        %613 = vmatpush1.msra.mxu0 %v375
        %614 = vmatprep.subr.mxu0 0.0
        %615 = vmatpush1.msra.mxu0 %v376
        %616 = vmatprep.subr.mxu0 0.0
        %617 = vmatpush1.msra.mxu0 %v377
        %618 = vmatprep.subr.mxu0 0.0
        %619 = vmatpush1.msra.mxu0 %v378
        %620 = vmatprep.subr.mxu0 0.0
        %621 = vmatpush1.msra.mxu0 %v379
        %622 = vmatprep.subr.mxu0 0.0
        %623 = vmatpush1.msra.mxu0 %v380
        %624 = vmatprep.subr.mxu0 0.0
        %625 = vmatpush1.msra.mxu0 %v381
        %626 = vmatprep.subr.mxu0 0.0
        %627 = vmatpush1.msra.mxu0 %v382
        %628 = vmatprep.subr.mxu0 0.0
        %629 = vmatpush1.msra.mxu0 %v383
        %630 = vmatprep.subr.mxu0 0.0
        %631 = vmatpush1.msra.mxu0 %v384
        %632 = vmatprep.subr.mxu0 0.0
        %633 = vmatpush1.msra.mxu0 %v385
        %634 = vmatprep.subr.mxu0 0.0
        %635 = vmatpush1.msra.mxu0 %v386
        %636 = vmatprep.subr.mxu0 0.0
        %637 = vmatpush1.msra.mxu0 %v387
        %638 = vmatprep.subr.mxu0 0.0
        %639 = vmatpush1.msra.mxu0 %v388
        %640 = vmatprep.subr.mxu0 0.0
        %641 = vmatpush1.msra.mxu0 %v389
        %642 = vmatprep.subr.mxu0 0.0
        %643 = vmatpush1.msra.mxu0 %v390
        %644 = vmatprep.subr.mxu0 0.0
        %645 = vmatpush1.msra.mxu0 %v391
        %646 = vmatprep.subr.mxu0 0.0
        %647 = vmatpush1.msra.mxu0 %v392
        %648 = vmatprep.subr.mxu0 0.0
        %649 = vmatpush1.msra.mxu0 %v393
        %650 = vmatprep.subr.mxu0 0.0
        %651 = vmatpush1.msra.mxu0 %v394
        %652 = vmatprep.subr.mxu0 0.0
        %653 = vmatpush1.msra.mxu0 %v395
        %654 = vmatprep.subr.mxu0 0.0
        %655 = vmatpush1.msra.mxu0 %v396
        %656 = vmatprep.subr.mxu0 0.0
        %657 = vmatpush1.msra.mxu0 %v397
        %658 = vmatprep.subr.mxu0 0.0
        %659 = vmatpush1.msra.mxu0 %v398
        %660 = vmatprep.subr.mxu0 0.0
        %661 = vmatpush1.msra.mxu0 %v399
        %662 = vmatprep.subr.mxu0 0.0
        %663 = vmatpush1.msra.mxu0 %v400
        %664 = vmatprep.subr.mxu0 0.0
        %665 = vmatpush1.msra.mxu0 %v401
        %666 = vmatprep.subr.mxu0 0.0
        %667 = vmatpush1.msra.mxu0 %v402
        %668 = vmatprep.subr.mxu0 0.0
        %669 = vmatpush1.msra.mxu0 %v403
        %670 = vmatprep.subr.mxu0 0.0
        %671 = vmatpush1.msra.mxu0 %v404
        %672 = vmatprep.subr.mxu0 0.0
        %673 = vmatpush1.msra.mxu0 %v405
        %674 = vmatprep.mubr.f32.mxu0 %v305
        %675 = vmatmul.mubr.f32.gmra.mrb[0].mxu0 %v304
        %v676 = vpop.f32.mrb[0].mxu0
        %v677 = vadd.f32 %v607, %v676
        %v678 = vpop.f32.mrb[0].mxu0
        %679 = vdwg.mxu0
        %680 = vmatprep.subr.mxu0 0.0
        %681 = vmatpush1.msra.mxu0 %v406
        %682 = vmatprep.subr.mxu0 0.0
        %683 = vmatpush1.msra.mxu0 %v407
        %684 = vmatprep.subr.mxu0 0.0
        %685 = vmatpush1.msra.mxu0 %v408
        %686 = vmatprep.subr.mxu0 0.0
        %687 = vmatpush1.msra.mxu0 %v409
        %688 = vmatprep.subr.mxu0 0.0
        %689 = vmatpush1.msra.mxu0 %v410
        %690 = vmatprep.subr.mxu0 0.0
        %691 = vmatpush1.msra.mxu0 %v411
        %692 = vmatprep.subr.mxu0 0.0
        %693 = vmatpush1.msra.mxu0 %v412
        %694 = vmatprep.subr.mxu0 0.0
        %695 = vmatpush1.msra.mxu0 %v413
        %696 = vmatprep.subr.mxu0 0.0
        %697 = vmatpush1.msra.mxu0 %v414
        %698 = vmatprep.subr.mxu0 0.0
        %699 = vmatpush1.msra.mxu0 %v415
        %700 = vmatprep.subr.mxu0 0.0
        %701 = vmatpush1.msra.mxu0 %v416
        %702 = vmatprep.subr.mxu0 0.0
        %703 = vmatpush1.msra.mxu0 %v417
        %704 = vmatprep.subr.mxu0 0.0
        %705 = vmatpush1.msra.mxu0 %v418
        %706 = vmatprep.subr.mxu0 0.0
        %707 = vmatpush1.msra.mxu0 %v419
        %708 = vmatprep.subr.mxu0 0.0
        %709 = vmatpush1.msra.mxu0 %v420
        %710 = vmatprep.subr.mxu0 0.0
        %711 = vmatpush1.msra.mxu0 %v421
        %712 = vmatprep.subr.mxu0 0.0
        %713 = vmatpush1.msra.mxu0 %v422
        %714 = vmatprep.subr.mxu0 0.0
        %715 = vmatpush1.msra.mxu0 %v423
        %716 = vmatprep.subr.mxu0 0.0
        %717 = vmatpush1.msra.mxu0 %v424
        %718 = vmatprep.subr.mxu0 0.0
        %719 = vmatpush1.msra.mxu0 %v425
        %720 = vmatprep.subr.mxu0 0.0
        %721 = vmatpush1.msra.mxu0 %v426
        %722 = vmatprep.subr.mxu0 0.0
        %723 = vmatpush1.msra.mxu0 %v427
        %724 = vmatprep.subr.mxu0 0.0
        %725 = vmatpush1.msra.mxu0 %v428
        %726 = vmatprep.subr.mxu0 0.0
        %727 = vmatpush1.msra.mxu0 %v429
        %728 = vmatprep.subr.mxu0 0.0
        %729 = vmatpush1.msra.mxu0 %v430
        %730 = vmatprep.subr.mxu0 0.0
        %731 = vmatpush1.msra.mxu0 %v431
        %732 = vmatprep.subr.mxu0 0.0
        %733 = vmatpush1.msra.mxu0 %v432
        %734 = vmatprep.subr.mxu0 0.0
        %735 = vmatpush1.msra.mxu0 %v433
        %736 = vmatprep.subr.mxu0 0.0
        %737 = vmatpush1.msra.mxu0 %v434
        %738 = vmatprep.subr.mxu0 0.0
        %739 = vmatpush1.msra.mxu0 %v435
        %740 = vmatprep.subr.mxu0 0.0
        %741 = vmatpush1.msra.mxu0 %v436
        %742 = vmatprep.subr.mxu0 0.0
        %743 = vmatpush1.msra.mxu0 %v437
        %744 = vmatprep.mubr.f32.mxu0 %v307
        %745 = vmatmul.mubr.f32.gmra.mrb[0].mxu0 %v306
        %v746 = vpop.f32.mrb[0].mxu0
        %v747 = vadd.f32 %v677, %v746
        %v748 = vpop.f32.mrb[0].mxu0
        %749 = vdwg.mxu0
        %750 = vmatprep.subr.mxu0 0.0
        %751 = vmatpush1.msra.mxu0 %v438
        %752 = vmatprep.subr.mxu0 0.0
        %753 = vmatpush1.msra.mxu0 %v439
        %754 = vmatprep.subr.mxu0 0.0
        %755 = vmatpush1.msra.mxu0 %v440
        %756 = vmatprep.subr.mxu0 0.0
        %757 = vmatpush1.msra.mxu0 %v441
        %758 = vmatprep.subr.mxu0 0.0
        %759 = vmatpush1.msra.mxu0 %v442
        %760 = vmatprep.subr.mxu0 0.0
        %761 = vmatpush1.msra.mxu0 %v443
        %762 = vmatprep.subr.mxu0 0.0
        %763 = vmatpush1.msra.mxu0 %v444
        %764 = vmatprep.subr.mxu0 0.0
        %765 = vmatpush1.msra.mxu0 %v445
        %766 = vmatprep.subr.mxu0 0.0
        %767 = vmatpush1.msra.mxu0 %v446
        %768 = vmatprep.subr.mxu0 0.0
        %769 = vmatpush1.msra.mxu0 %v447
        %770 = vmatprep.subr.mxu0 0.0
        %771 = vmatpush1.msra.mxu0 %v448
        %772 = vmatprep.subr.mxu0 0.0
        %773 = vmatpush1.msra.mxu0 %v449
        %774 = vmatprep.subr.mxu0 0.0
        %775 = vmatpush1.msra.mxu0 %v450
        %776 = vmatprep.subr.mxu0 0.0
        %777 = vmatpush1.msra.mxu0 %v451
        %778 = vmatprep.subr.mxu0 0.0
        %779 = vmatpush1.msra.mxu0 %v452
        %780 = vmatprep.subr.mxu0 0.0
        %781 = vmatpush1.msra.mxu0 %v453
        %782 = vmatprep.subr.mxu0 0.0
        %783 = vmatpush1.msra.mxu0 %v454
        %784 = vmatprep.subr.mxu0 0.0
        %785 = vmatpush1.msra.mxu0 %v455
        %786 = vmatprep.subr.mxu0 0.0
        %787 = vmatpush1.msra.mxu0 %v456
        %788 = vmatprep.subr.mxu0 0.0
        %789 = vmatpush1.msra.mxu0 %v457
        %790 = vmatprep.subr.mxu0 0.0
        %791 = vmatpush1.msra.mxu0 %v458
        %792 = vmatprep.subr.mxu0 0.0
        %793 = vmatpush1.msra.mxu0 %v459
        %794 = vmatprep.subr.mxu0 0.0
        %795 = vmatpush1.msra.mxu0 %v460
        %796 = vmatprep.subr.mxu0 0.0
        %797 = vmatpush1.msra.mxu0 %v461
        %798 = vmatprep.subr.mxu0 0.0
        %799 = vmatpush1.msra.mxu0 %v462
        %800 = vmatprep.subr.mxu0 0.0
        %801 = vmatpush1.msra.mxu0 %v463
        %802 = vmatprep.subr.mxu0 0.0
        %803 = vmatpush1.msra.mxu0 %v464
        %804 = vmatprep.subr.mxu0 0.0
        %805 = vmatpush1.msra.mxu0 %v465
        %806 = vmatprep.subr.mxu0 0.0
        %807 = vmatpush1.msra.mxu0 %v466
        %808 = vmatprep.subr.mxu0 0.0
        %809 = vmatpush1.msra.mxu0 %v467
        %810 = vmatprep.subr.mxu0 0.0
        %811 = vmatpush1.msra.mxu0 %v468
        %812 = vmatprep.subr.mxu0 0.0
        %813 = vmatpush1.msra.mxu0 %v469
        %814 = vmatprep.mubr.f32.mxu0 %v309
        %815 = vmatmul.mubr.f32.gmra.mrb[0].mxu0 %v308
        %v816 = vpop.f32.mrb[0].mxu0
        %v817 = vadd.f32 %v747, %v816
        %v818 = vpop.f32.mrb[0].mxu0
        %819 = vdwg.mxu0
        %v820 = vmax.f32 %v817, 0.0
        %v821 = vmul.f32 %v254, %v820
        %822 = vst [vmem:[#allocation2] sm:$0xff] %v821
        %v823 = vmul.f32 %v260, %v820
        %824 = vst [vmem:[#allocation2 + $0x8] sm:$0xff] %v823
        %v825 = vmul.f32 %v266, %v820
        %826 = vst [vmem:[#allocation2 + $0x10] sm:$0xff] %v825
        %v827 = vmul.f32 %v272, %v820
        %828 = vst [vmem:[#allocation2 + $0x18] sm:$0xff] %v827
        %v829 = vmul.f32 %v278, %v820
        %830 = vst [vmem:[#allocation2 + $0x20] sm:$0xff] %v829
        %v831 = vmul.f32 %v284, %v820
        %832 = vst [vmem:[#allocation2 + $0x28] sm:$0xff] %v831
        %v833 = vmul.f32 %v290, %v820
        %834 = vst [vmem:[#allocation2 + $0x30] sm:$0xff] %v833
        %v835 = vmul.f32 %v296, %v820
        %836 = vst [vmem:[#allocation2 + $0x38] sm:$0xff] %v835
        %837 = vst [vmem:[#allocation2 + $0x40] sm:$0xff] %v820
        %v838 = vld [vmem:[#allocation2] sm:$0xff]
        %v839 = vld [vmem:[#allocation2 + $0x8] sm:$0xff]
        %v840 = vld [vmem:[#allocation2 + $0x10] sm:$0xff]
        %v841 = vld [vmem:[#allocation2 + $0x18] sm:$0xff]
        %v842 = vld [vmem:[#allocation2 + $0x20] sm:$0xff]
        %v843 = vld [vmem:[#allocation2 + $0x28] sm:$0xff]
        %v844 = vld [vmem:[#allocation2 + $0x30] sm:$0xff]
        %v845 = vld [vmem:[#allocation2 + $0x38] sm:$0xff]
        %v846 = vld [vmem:[#allocation2 + $0x40] sm:$0xff]
        %v847 = vld [vmem:[#allocation2 + $0x48] sm:$0xff]
        %v848 = vld [vmem:[#allocation6] sm:$0xff]
        %v849 = vld [vmem:[#allocation6 + $0x8] sm:$0xff]
        %v850 = vld [vmem:[#allocation6 + $0x10] sm:$0xff]
        %v851 = vld [vmem:[#allocation6 + $0x18] sm:$0xff]
        %v852 = vld [vmem:[#allocation6 + $0x20] sm:$0xff]
        %v853 = vld [vmem:[#allocation6 + $0x28] sm:$0xff]
        %v854 = vld [vmem:[#allocation6 + $0x30] sm:$0xff]
        %v855 = vld [vmem:[#allocation6 + $0x38] sm:$0xff]
        %v856 = vld [vmem:[#allocation6 + $0x40] sm:$0xff]
        %v857 = vld [vmem:[#allocation6 + $0x48] sm:$0xff]
        %v858 = vld [vmem:[#allocation6 + $0x50] sm:$0xff]
        %v859 = vld [vmem:[#allocation6 + $0x58] sm:$0xff]
        %v860 = vld [vmem:[#allocation6 + $0x60] sm:$0xff]
        %v861 = vld [vmem:[#allocation6 + $0x68] sm:$0xff]
        %v862 = vld [vmem:[#allocation6 + $0x70] sm:$0xff]
        %v863 = vld [vmem:[#allocation6 + $0x78] sm:$0xff]
        %v864 = vld [vmem:[#allocation6 + $0x80] sm:$0xff]
        %v865 = vld [vmem:[#allocation6 + $0x88] sm:$0xff]
        %v866 = vld [vmem:[#allocation6 + $0x90] sm:$0xff]
        %v867 = vld [vmem:[#allocation6 + $0x98] sm:$0xff]
        %v868 = vld [vmem:[#allocation6 + $0xa0] sm:$0xff]
        %v869 = vld [vmem:[#allocation6 + $0xa8] sm:$0xff]
        %v870 = vld [vmem:[#allocation6 + $0xb0] sm:$0xff]
        %v871 = vld [vmem:[#allocation6 + $0xb8] sm:$0xff]
        %v872 = vld [vmem:[#allocation6 + $0xc0] sm:$0xff]
        %v873 = vld [vmem:[#allocation6 + $0xc8] sm:$0xff]
        %v874 = vld [vmem:[#allocation6 + $0xd0] sm:$0xff]
        %v875 = vld [vmem:[#allocation6 + $0xd8] sm:$0xff]
        %v876 = vld [vmem:[#allocation6 + $0xe0] sm:$0xff]
        %v877 = vld [vmem:[#allocation6 + $0xe8] sm:$0xff]
        %v878 = vld [vmem:[#allocation6 + $0xf0] sm:$0xff]
        %v879 = vld [vmem:[#allocation6 + $0xf8] sm:$0xff]
        %v880 = vld [vmem:[#allocation6 + $0x100] sm:$0xff]
        %v881 = vld [vmem:[#allocation6 + $0x108] sm:$0xff]
        %v882 = vld [vmem:[#allocation6 + $0x110] sm:$0xff]
        %v883 = vld [vmem:[#allocation6 + $0x118] sm:$0xff]
        %v884 = vld [vmem:[#allocation6 + $0x120] sm:$0xff]
        %v885 = vld [vmem:[#allocation6 + $0x128] sm:$0xff]
        %v886 = vld [vmem:[#allocation6 + $0x130] sm:$0xff]
        %v887 = vld [vmem:[#allocation6 + $0x138] sm:$0xff]
        %v888 = vld [vmem:[#allocation6 + $0x140] sm:$0xff]
        %v889 = vld [vmem:[#allocation6 + $0x148] sm:$0xff]
        %v890 = vld [vmem:[#allocation6 + $0x150] sm:$0xff]
        %v891 = vld [vmem:[#allocation6 + $0x158] sm:$0xff]
        %v892 = vld [vmem:[#allocation6 + $0x160] sm:$0xff]
        %v893 = vld [vmem:[#allocation6 + $0x168] sm:$0xff]
        %v894 = vld [vmem:[#allocation6 + $0x170] sm:$0xff]
        %v895 = vld [vmem:[#allocation6 + $0x178] sm:$0xff]
        %v896 = vld [vmem:[#allocation6 + $0x180] sm:$0xff]
        %v897 = vld [vmem:[#allocation6 + $0x188] sm:$0xff]
        %v898 = vld [vmem:[#allocation6 + $0x190] sm:$0xff]
        %v899 = vld [vmem:[#allocation6 + $0x198] sm:$0xff]
        %v900 = vld [vmem:[#allocation6 + $0x1a0] sm:$0xff]
        %v901 = vld [vmem:[#allocation6 + $0x1a8] sm:$0xff]
        %v902 = vld [vmem:[#allocation6 + $0x1b0] sm:$0xff]
        %v903 = vld [vmem:[#allocation6 + $0x1b8] sm:$0xff]
        %v904 = vld [vmem:[#allocation6 + $0x1c0] sm:$0xff]
        %v905 = vld [vmem:[#allocation6 + $0x1c8] sm:$0xff]
        %v906 = vld [vmem:[#allocation6 + $0x1d0] sm:$0xff]
        %v907 = vld [vmem:[#allocation6 + $0x1d8] sm:$0xff]
        %v908 = vld [vmem:[#allocation6 + $0x1e0] sm:$0xff]
        %v909 = vld [vmem:[#allocation6 + $0x1e8] sm:$0xff]
        %v910 = vld [vmem:[#allocation6 + $0x1f0] sm:$0xff]
        %v911 = vld [vmem:[#allocation6 + $0x1f8] sm:$0xff]
        %v912 = vld [vmem:[#allocation6 + $0x200] sm:$0xff]
        %v913 = vld [vmem:[#allocation6 + $0x208] sm:$0xff]
        %v914 = vld [vmem:[#allocation6 + $0x210] sm:$0xff]
        %v915 = vld [vmem:[#allocation6 + $0x218] sm:$0xff]
        %v916 = vld [vmem:[#allocation6 + $0x220] sm:$0xff]
        %v917 = vld [vmem:[#allocation6 + $0x228] sm:$0xff]
        %v918 = vld [vmem:[#allocation6 + $0x230] sm:$0xff]
        %v919 = vld [vmem:[#allocation6 + $0x238] sm:$0xff]
        %v920 = vld [vmem:[#allocation6 + $0x240] sm:$0xff]
        %v921 = vld [vmem:[#allocation6 + $0x248] sm:$0xff]
        %v922 = vld [vmem:[#allocation6 + $0x250] sm:$0xff]
        %v923 = vld [vmem:[#allocation6 + $0x258] sm:$0xff]
        %v924 = vld [vmem:[#allocation6 + $0x260] sm:$0xff]
        %v925 = vld [vmem:[#allocation6 + $0x268] sm:$0xff]
        %v926 = vld [vmem:[#allocation6 + $0x270] sm:$0xff]
        %v927 = vld [vmem:[#allocation6 + $0x278] sm:$0xff]
        %v928 = vld [vmem:[#allocation6 + $0x280] sm:$0xff]
        %v929 = vld [vmem:[#allocation6 + $0x288] sm:$0xff]
        %v930 = vld [vmem:[#allocation6 + $0x290] sm:$0xff]
        %v931 = vld [vmem:[#allocation6 + $0x298] sm:$0xff]
        %v932 = vld [vmem:[#allocation6 + $0x2a0] sm:$0xff]
        %v933 = vld [vmem:[#allocation6 + $0x2a8] sm:$0xff]
        %v934 = vld [vmem:[#allocation6 + $0x2b0] sm:$0xff]
        %v935 = vld [vmem:[#allocation6 + $0x2b8] sm:$0xff]
        %v936 = vld [vmem:[#allocation6 + $0x2c0] sm:$0xff]
        %v937 = vld [vmem:[#allocation6 + $0x2c8] sm:$0xff]
        %v938 = vld [vmem:[#allocation6 + $0x2d0] sm:$0xff]
        %v939 = vld [vmem:[#allocation6 + $0x2d8] sm:$0xff]
        %v940 = vld [vmem:[#allocation6 + $0x2e0] sm:$0xff]
        %v941 = vld [vmem:[#allocation6 + $0x2e8] sm:$0xff]
        %v942 = vld [vmem:[#allocation6 + $0x2f0] sm:$0xff]
        %v943 = vld [vmem:[#allocation6 + $0x2f8] sm:$0xff]
        %v944 = vld [vmem:[#allocation6 + $0x300] sm:$0xff]
        %v945 = vld [vmem:[#allocation6 + $0x308] sm:$0xff]
        %v946 = vld [vmem:[#allocation6 + $0x310] sm:$0xff]
        %v947 = vld [vmem:[#allocation6 + $0x318] sm:$0xff]
        %v948 = vld [vmem:[#allocation6 + $0x320] sm:$0xff]
        %v949 = vld [vmem:[#allocation6 + $0x328] sm:$0xff]
        %v950 = vld [vmem:[#allocation6 + $0x330] sm:$0xff]
        %v951 = vld [vmem:[#allocation6 + $0x338] sm:$0xff]
        %v952 = vld [vmem:[#allocation6 + $0x340] sm:$0xff]
        %v953 = vld [vmem:[#allocation6 + $0x348] sm:$0xff]
        %v954 = vld [vmem:[#allocation6 + $0x350] sm:$0xff]
        %v955 = vld [vmem:[#allocation6 + $0x358] sm:$0xff]
        %v956 = vld [vmem:[#allocation6 + $0x360] sm:$0xff]
        %v957 = vld [vmem:[#allocation6 + $0x368] sm:$0xff]
        %v958 = vld [vmem:[#allocation6 + $0x370] sm:$0xff]
        %v959 = vld [vmem:[#allocation6 + $0x378] sm:$0xff]
        %v960 = vld [vmem:[#allocation6 + $0x380] sm:$0xff]
        %v961 = vld [vmem:[#allocation6 + $0x388] sm:$0xff]
        %v962 = vld [vmem:[#allocation6 + $0x390] sm:$0xff]
        %v963 = vld [vmem:[#allocation6 + $0x398] sm:$0xff]
        %v964 = vld [vmem:[#allocation6 + $0x3a0] sm:$0xff]
        %v965 = vld [vmem:[#allocation6 + $0x3a8] sm:$0xff]
        %v966 = vld [vmem:[#allocation6 + $0x3b0] sm:$0xff]
        %v967 = vld [vmem:[#allocation6 + $0x3b8] sm:$0xff]
        %v968 = vld [vmem:[#allocation6 + $0x3c0] sm:$0xff]
        %v969 = vld [vmem:[#allocation6 + $0x3c8] sm:$0xff]
        %v970 = vld [vmem:[#allocation6 + $0x3d0] sm:$0xff]
        %v971 = vld [vmem:[#allocation6 + $0x3d8] sm:$0xff]
        %v972 = vld [vmem:[#allocation6 + $0x3e0] sm:$0xff]
        %v973 = vld [vmem:[#allocation6 + $0x3e8] sm:$0xff]
        %v974 = vld [vmem:[#allocation6 + $0x3f0] sm:$0xff]
        %v975 = vld [vmem:[#allocation6 + $0x3f8] sm:$0xff]
        %v976 = vld [vmem:[#allocation6 + $0x400] sm:$0xff]
        %v977 = vld [vmem:[#allocation6 + $0x408] sm:$0xff]
        %v978 = vld [vmem:[#allocation6 + $0x410] sm:$0xff]
        %v979 = vld [vmem:[#allocation6 + $0x418] sm:$0xff]
        %v980 = vld [vmem:[#allocation6 + $0x420] sm:$0xff]
        %v981 = vld [vmem:[#allocation6 + $0x428] sm:$0xff]
        %v982 = vld [vmem:[#allocation6 + $0x430] sm:$0xff]
        %v983 = vld [vmem:[#allocation6 + $0x438] sm:$0xff]
        %v984 = vld [vmem:[#allocation6 + $0x440] sm:$0xff]
        %v985 = vld [vmem:[#allocation6 + $0x448] sm:$0xff]
        %v986 = vld [vmem:[#allocation6 + $0x450] sm:$0xff]
        %v987 = vld [vmem:[#allocation6 + $0x458] sm:$0xff]
        %v988 = vld [vmem:[#allocation6 + $0x460] sm:$0xff]
        %v989 = vld [vmem:[#allocation6 + $0x468] sm:$0xff]
        %v990 = vld [vmem:[#allocation6 + $0x470] sm:$0xff]
        %v991 = vld [vmem:[#allocation6 + $0x478] sm:$0xff]
        %v992 = vld [vmem:[#allocation6 + $0x480] sm:$0xff]
        %v993 = vld [vmem:[#allocation6 + $0x488] sm:$0xff]
        %v994 = vld [vmem:[#allocation6 + $0x490] sm:$0xff]
        %v995 = vld [vmem:[#allocation6 + $0x498] sm:$0xff]
        %v996 = vld [vmem:[#allocation6 + $0x4a0] sm:$0xff]
        %v997 = vld [vmem:[#allocation6 + $0x4a8] sm:$0xff]
        %v998 = vld [vmem:[#allocation6 + $0x4b0] sm:$0xff]
        %v999 = vld [vmem:[#allocation6 + $0x4b8] sm:$0xff]
        %v1000 = vld [vmem:[#allocation6 + $0x4c0] sm:$0xff]
        %v1001 = vld [vmem:[#allocation6 + $0x4c8] sm:$0xff]
        %v1002 = vld [vmem:[#allocation6 + $0x4d0] sm:$0xff]
        %v1003 = vld [vmem:[#allocation6 + $0x4d8] sm:$0xff]
        %v1004 = vld [vmem:[#allocation6 + $0x4e0] sm:$0xff]
        %v1005 = vld [vmem:[#allocation6 + $0x4e8] sm:$0xff]
        %v1006 = vld [vmem:[#allocation6 + $0x4f0] sm:$0xff]
        %v1007 = vld [vmem:[#allocation6 + $0x4f8] sm:$0xff]
        %1008 = vmatprep.subr.mxu0 0.0
        %1009 = vmatpush1.msra.mxu0 %v848
        %1010 = vmatprep.subr.mxu0 0.0
        %1011 = vmatpush1.msra.mxu0 %v849
        %1012 = vmatprep.subr.mxu0 0.0
        %1013 = vmatpush1.msra.mxu0 %v850
        %1014 = vmatprep.subr.mxu0 0.0
        %1015 = vmatpush1.msra.mxu0 %v851
        %1016 = vmatprep.subr.mxu0 0.0
        %1017 = vmatpush1.msra.mxu0 %v852
        %1018 = vmatprep.subr.mxu0 0.0
        %1019 = vmatpush1.msra.mxu0 %v853
        %1020 = vmatprep.subr.mxu0 0.0
        %1021 = vmatpush1.msra.mxu0 %v854
        %1022 = vmatprep.subr.mxu0 0.0
        %1023 = vmatpush1.msra.mxu0 %v855
        %1024 = vmatprep.subr.mxu0 0.0
        %1025 = vmatpush1.msra.mxu0 %v856
        %1026 = vmatprep.subr.mxu0 0.0
        %1027 = vmatpush1.msra.mxu0 %v857
        %1028 = vmatprep.subr.mxu0 0.0
        %1029 = vmatpush1.msra.mxu0 %v858
        %1030 = vmatprep.subr.mxu0 0.0
        %1031 = vmatpush1.msra.mxu0 %v859
        %1032 = vmatprep.subr.mxu0 0.0
        %1033 = vmatpush1.msra.mxu0 %v860
        %1034 = vmatprep.subr.mxu0 0.0
        %1035 = vmatpush1.msra.mxu0 %v861
        %1036 = vmatprep.subr.mxu0 0.0
        %1037 = vmatpush1.msra.mxu0 %v862
        %1038 = vmatprep.subr.mxu0 0.0
        %1039 = vmatpush1.msra.mxu0 %v863
        %1040 = vmatprep.subr.mxu0 0.0
        %1041 = vmatpush1.msra.mxu0 %v864
        %1042 = vmatprep.subr.mxu0 0.0
        %1043 = vmatpush1.msra.mxu0 %v865
        %1044 = vmatprep.subr.mxu0 0.0
        %1045 = vmatpush1.msra.mxu0 %v866
        %1046 = vmatprep.subr.mxu0 0.0
        %1047 = vmatpush1.msra.mxu0 %v867
        %1048 = vmatprep.subr.mxu0 0.0
        %1049 = vmatpush1.msra.mxu0 %v868
        %1050 = vmatprep.subr.mxu0 0.0
        %1051 = vmatpush1.msra.mxu0 %v869
        %1052 = vmatprep.subr.mxu0 0.0
        %1053 = vmatpush1.msra.mxu0 %v870
        %1054 = vmatprep.subr.mxu0 0.0
        %1055 = vmatpush1.msra.mxu0 %v871
        %1056 = vmatprep.subr.mxu0 0.0
        %1057 = vmatpush1.msra.mxu0 %v872
        %1058 = vmatprep.subr.mxu0 0.0
        %1059 = vmatpush1.msra.mxu0 %v873
        %1060 = vmatprep.subr.mxu0 0.0
        %1061 = vmatpush1.msra.mxu0 %v874
        %1062 = vmatprep.subr.mxu0 0.0
        %1063 = vmatpush1.msra.mxu0 %v875
        %1064 = vmatprep.subr.mxu0 0.0
        %1065 = vmatpush1.msra.mxu0 %v876
        %1066 = vmatprep.subr.mxu0 0.0
        %1067 = vmatpush1.msra.mxu0 %v877
        %1068 = vmatprep.subr.mxu0 0.0
        %1069 = vmatpush1.msra.mxu0 %v878
        %1070 = vmatprep.subr.mxu0 0.0
        %1071 = vmatpush1.msra.mxu0 %v879
        %1072 = vmatprep.mubr.f32.mxu0 %v839
        %1073 = vmatmul.mubr.f32.gmra.mrb[0].mxu0 %v838
        %v1074 = vpop.f32.mrb[0].mxu0
        %v1075 = vadd.f32 0.0, %v1074
        %v1076 = vpop.f32.mrb[0].mxu0
        %1077 = vdwg.mxu0
        %1078 = vmatprep.subr.mxu0 0.0
        %1079 = vmatpush1.msra.mxu0 %v880
        %1080 = vmatprep.subr.mxu0 0.0
        %1081 = vmatpush1.msra.mxu0 %v881
        %1082 = vmatprep.subr.mxu0 0.0
        %1083 = vmatpush1.msra.mxu0 %v882
        %1084 = vmatprep.subr.mxu0 0.0
        %1085 = vmatpush1.msra.mxu0 %v883
        %1086 = vmatprep.subr.mxu0 0.0
        %1087 = vmatpush1.msra.mxu0 %v884
        %1088 = vmatprep.subr.mxu0 0.0
        %1089 = vmatpush1.msra.mxu0 %v885
        %1090 = vmatprep.subr.mxu0 0.0
        %1091 = vmatpush1.msra.mxu0 %v886
        %1092 = vmatprep.subr.mxu0 0.0
        %1093 = vmatpush1.msra.mxu0 %v887
        %1094 = vmatprep.subr.mxu0 0.0
        %1095 = vmatpush1.msra.mxu0 %v888
        %1096 = vmatprep.subr.mxu0 0.0
        %1097 = vmatpush1.msra.mxu0 %v889
        %1098 = vmatprep.subr.mxu0 0.0
        %1099 = vmatpush1.msra.mxu0 %v890
        %1100 = vmatprep.subr.mxu0 0.0
        %1101 = vmatpush1.msra.mxu0 %v891
        %1102 = vmatprep.subr.mxu0 0.0
        %1103 = vmatpush1.msra.mxu0 %v892
        %1104 = vmatprep.subr.mxu0 0.0
        %1105 = vmatpush1.msra.mxu0 %v893
        %1106 = vmatprep.subr.mxu0 0.0
        %1107 = vmatpush1.msra.mxu0 %v894
        %1108 = vmatprep.subr.mxu0 0.0
        %1109 = vmatpush1.msra.mxu0 %v895
        %1110 = vmatprep.subr.mxu0 0.0
        %1111 = vmatpush1.msra.mxu0 %v896
        %1112 = vmatprep.subr.mxu0 0.0
        %1113 = vmatpush1.msra.mxu0 %v897
        %1114 = vmatprep.subr.mxu0 0.0
        %1115 = vmatpush1.msra.mxu0 %v898
        %1116 = vmatprep.subr.mxu0 0.0
        %1117 = vmatpush1.msra.mxu0 %v899
        %1118 = vmatprep.subr.mxu0 0.0
        %1119 = vmatpush1.msra.mxu0 %v900
        %1120 = vmatprep.subr.mxu0 0.0
        %1121 = vmatpush1.msra.mxu0 %v901
        %1122 = vmatprep.subr.mxu0 0.0
        %1123 = vmatpush1.msra.mxu0 %v902
        %1124 = vmatprep.subr.mxu0 0.0
        %1125 = vmatpush1.msra.mxu0 %v903
        %1126 = vmatprep.subr.mxu0 0.0
        %1127 = vmatpush1.msra.mxu0 %v904
        %1128 = vmatprep.subr.mxu0 0.0
        %1129 = vmatpush1.msra.mxu0 %v905
        %1130 = vmatprep.subr.mxu0 0.0
        %1131 = vmatpush1.msra.mxu0 %v906
        %1132 = vmatprep.subr.mxu0 0.0
        %1133 = vmatpush1.msra.mxu0 %v907
        %1134 = vmatprep.subr.mxu0 0.0
        %1135 = vmatpush1.msra.mxu0 %v908
        %1136 = vmatprep.subr.mxu0 0.0
        %1137 = vmatpush1.msra.mxu0 %v909
        %1138 = vmatprep.subr.mxu0 0.0
        %1139 = vmatpush1.msra.mxu0 %v910
        %1140 = vmatprep.subr.mxu0 0.0
        %1141 = vmatpush1.msra.mxu0 %v911
        %1142 = vmatprep.mubr.f32.mxu0 %v841
        %1143 = vmatmul.mubr.f32.gmra.mrb[0].mxu0 %v840
        %v1144 = vpop.f32.mrb[0].mxu0
        %v1145 = vadd.f32 %v1075, %v1144
        %v1146 = vpop.f32.mrb[0].mxu0
        %1147 = vdwg.mxu0
        %1148 = vmatprep.subr.mxu0 0.0
        %1149 = vmatpush1.msra.mxu0 %v912
        %1150 = vmatprep.subr.mxu0 0.0
        %1151 = vmatpush1.msra.mxu0 %v913
        %1152 = vmatprep.subr.mxu0 0.0
        %1153 = vmatpush1.msra.mxu0 %v914
        %1154 = vmatprep.subr.mxu0 0.0
        %1155 = vmatpush1.msra.mxu0 %v915
        %1156 = vmatprep.subr.mxu0 0.0
        %1157 = vmatpush1.msra.mxu0 %v916
        %1158 = vmatprep.subr.mxu0 0.0
        %1159 = vmatpush1.msra.mxu0 %v917
        %1160 = vmatprep.subr.mxu0 0.0
        %1161 = vmatpush1.msra.mxu0 %v918
        %1162 = vmatprep.subr.mxu0 0.0
        %1163 = vmatpush1.msra.mxu0 %v919
        %1164 = vmatprep.subr.mxu0 0.0
        %1165 = vmatpush1.msra.mxu0 %v920
        %1166 = vmatprep.subr.mxu0 0.0
        %1167 = vmatpush1.msra.mxu0 %v921
        %1168 = vmatprep.subr.mxu0 0.0
        %1169 = vmatpush1.msra.mxu0 %v922
        %1170 = vmatprep.subr.mxu0 0.0
        %1171 = vmatpush1.msra.mxu0 %v923
        %1172 = vmatprep.subr.mxu0 0.0
        %1173 = vmatpush1.msra.mxu0 %v924
        %1174 = vmatprep.subr.mxu0 0.0
        %1175 = vmatpush1.msra.mxu0 %v925
        %1176 = vmatprep.subr.mxu0 0.0
        %1177 = vmatpush1.msra.mxu0 %v926
        %1178 = vmatprep.subr.mxu0 0.0
        %1179 = vmatpush1.msra.mxu0 %v927
        %1180 = vmatprep.subr.mxu0 0.0
        %1181 = vmatpush1.msra.mxu0 %v928
        %1182 = vmatprep.subr.mxu0 0.0
        %1183 = vmatpush1.msra.mxu0 %v929
        %1184 = vmatprep.subr.mxu0 0.0
        %1185 = vmatpush1.msra.mxu0 %v930
        %1186 = vmatprep.subr.mxu0 0.0
        %1187 = vmatpush1.msra.mxu0 %v931
        %1188 = vmatprep.subr.mxu0 0.0
        %1189 = vmatpush1.msra.mxu0 %v932
        %1190 = vmatprep.subr.mxu0 0.0
        %1191 = vmatpush1.msra.mxu0 %v933
        %1192 = vmatprep.subr.mxu0 0.0
        %1193 = vmatpush1.msra.mxu0 %v934
        %1194 = vmatprep.subr.mxu0 0.0
        %1195 = vmatpush1.msra.mxu0 %v935
        %1196 = vmatprep.subr.mxu0 0.0
        %1197 = vmatpush1.msra.mxu0 %v936
        %1198 = vmatprep.subr.mxu0 0.0
        %1199 = vmatpush1.msra.mxu0 %v937
        %1200 = vmatprep.subr.mxu0 0.0
        %1201 = vmatpush1.msra.mxu0 %v938
        %1202 = vmatprep.subr.mxu0 0.0
        %1203 = vmatpush1.msra.mxu0 %v939
        %1204 = vmatprep.subr.mxu0 0.0
        %1205 = vmatpush1.msra.mxu0 %v940
        %1206 = vmatprep.subr.mxu0 0.0
        %1207 = vmatpush1.msra.mxu0 %v941
        %1208 = vmatprep.subr.mxu0 0.0
        %1209 = vmatpush1.msra.mxu0 %v942
        %1210 = vmatprep.subr.mxu0 0.0
        %1211 = vmatpush1.msra.mxu0 %v943
        %1212 = vmatprep.mubr.f32.mxu0 %v843
        %1213 = vmatmul.mubr.f32.gmra.mrb[0].mxu0 %v842
        %v1214 = vpop.f32.mrb[0].mxu0
        %v1215 = vadd.f32 %v1145, %v1214
        %v1216 = vpop.f32.mrb[0].mxu0
        %1217 = vdwg.mxu0
        %1218 = vmatprep.subr.mxu0 0.0
        %1219 = vmatpush1.msra.mxu0 %v944
        %1220 = vmatprep.subr.mxu0 0.0
        %1221 = vmatpush1.msra.mxu0 %v945
        %1222 = vmatprep.subr.mxu0 0.0
        %1223 = vmatpush1.msra.mxu0 %v946
        %1224 = vmatprep.subr.mxu0 0.0
        %1225 = vmatpush1.msra.mxu0 %v947
        %1226 = vmatprep.subr.mxu0 0.0
        %1227 = vmatpush1.msra.mxu0 %v948
        %1228 = vmatprep.subr.mxu0 0.0
        %1229 = vmatpush1.msra.mxu0 %v949
        %1230 = vmatprep.subr.mxu0 0.0
        %1231 = vmatpush1.msra.mxu0 %v950
        %1232 = vmatprep.subr.mxu0 0.0
        %1233 = vmatpush1.msra.mxu0 %v951
        %1234 = vmatprep.subr.mxu0 0.0
        %1235 = vmatpush1.msra.mxu0 %v952
        %1236 = vmatprep.subr.mxu0 0.0
        %1237 = vmatpush1.msra.mxu0 %v953
        %1238 = vmatprep.subr.mxu0 0.0
        %1239 = vmatpush1.msra.mxu0 %v954
        %1240 = vmatprep.subr.mxu0 0.0
        %1241 = vmatpush1.msra.mxu0 %v955
        %1242 = vmatprep.subr.mxu0 0.0
        %1243 = vmatpush1.msra.mxu0 %v956
        %1244 = vmatprep.subr.mxu0 0.0
        %1245 = vmatpush1.msra.mxu0 %v957
        %1246 = vmatprep.subr.mxu0 0.0
        %1247 = vmatpush1.msra.mxu0 %v958
        %1248 = vmatprep.subr.mxu0 0.0
        %1249 = vmatpush1.msra.mxu0 %v959
        %1250 = vmatprep.subr.mxu0 0.0
        %1251 = vmatpush1.msra.mxu0 %v960
        %1252 = vmatprep.subr.mxu0 0.0
        %1253 = vmatpush1.msra.mxu0 %v961
        %1254 = vmatprep.subr.mxu0 0.0
        %1255 = vmatpush1.msra.mxu0 %v962
        %1256 = vmatprep.subr.mxu0 0.0
        %1257 = vmatpush1.msra.mxu0 %v963
        %1258 = vmatprep.subr.mxu0 0.0
        %1259 = vmatpush1.msra.mxu0 %v964
        %1260 = vmatprep.subr.mxu0 0.0
        %1261 = vmatpush1.msra.mxu0 %v965
        %1262 = vmatprep.subr.mxu0 0.0
        %1263 = vmatpush1.msra.mxu0 %v966
        %1264 = vmatprep.subr.mxu0 0.0
        %1265 = vmatpush1.msra.mxu0 %v967
        %1266 = vmatprep.subr.mxu0 0.0
        %1267 = vmatpush1.msra.mxu0 %v968
        %1268 = vmatprep.subr.mxu0 0.0
        %1269 = vmatpush1.msra.mxu0 %v969
        %1270 = vmatprep.subr.mxu0 0.0
        %1271 = vmatpush1.msra.mxu0 %v970
        %1272 = vmatprep.subr.mxu0 0.0
        %1273 = vmatpush1.msra.mxu0 %v971
        %1274 = vmatprep.subr.mxu0 0.0
        %1275 = vmatpush1.msra.mxu0 %v972
        %1276 = vmatprep.subr.mxu0 0.0
        %1277 = vmatpush1.msra.mxu0 %v973
        %1278 = vmatprep.subr.mxu0 0.0
        %1279 = vmatpush1.msra.mxu0 %v974
        %1280 = vmatprep.subr.mxu0 0.0
        %1281 = vmatpush1.msra.mxu0 %v975
        %1282 = vmatprep.mubr.f32.mxu0 %v845
        %1283 = vmatmul.mubr.f32.gmra.mrb[0].mxu0 %v844
        %v1284 = vpop.f32.mrb[0].mxu0
        %v1285 = vadd.f32 %v1215, %v1284
        %v1286 = vpop.f32.mrb[0].mxu0
        %1287 = vdwg.mxu0
        %1288 = vmatprep.subr.mxu0 0.0
        %1289 = vmatpush1.msra.mxu0 %v976
        %1290 = vmatprep.subr.mxu0 0.0
        %1291 = vmatpush1.msra.mxu0 %v977
        %1292 = vmatprep.subr.mxu0 0.0
        %1293 = vmatpush1.msra.mxu0 %v978
        %1294 = vmatprep.subr.mxu0 0.0
        %1295 = vmatpush1.msra.mxu0 %v979
        %1296 = vmatprep.subr.mxu0 0.0
        %1297 = vmatpush1.msra.mxu0 %v980
        %1298 = vmatprep.subr.mxu0 0.0
        %1299 = vmatpush1.msra.mxu0 %v981
        %1300 = vmatprep.subr.mxu0 0.0
        %1301 = vmatpush1.msra.mxu0 %v982
        %1302 = vmatprep.subr.mxu0 0.0
        %1303 = vmatpush1.msra.mxu0 %v983
        %1304 = vmatprep.subr.mxu0 0.0
        %1305 = vmatpush1.msra.mxu0 %v984
        %1306 = vmatprep.subr.mxu0 0.0
        %1307 = vmatpush1.msra.mxu0 %v985
        %1308 = vmatprep.subr.mxu0 0.0
        %1309 = vmatpush1.msra.mxu0 %v986
        %1310 = vmatprep.subr.mxu0 0.0
        %1311 = vmatpush1.msra.mxu0 %v987
        %1312 = vmatprep.subr.mxu0 0.0
        %1313 = vmatpush1.msra.mxu0 %v988
        %1314 = vmatprep.subr.mxu0 0.0
        %1315 = vmatpush1.msra.mxu0 %v989
        %1316 = vmatprep.subr.mxu0 0.0
        %1317 = vmatpush1.msra.mxu0 %v990
        %1318 = vmatprep.subr.mxu0 0.0
        %1319 = vmatpush1.msra.mxu0 %v991
        %1320 = vmatprep.subr.mxu0 0.0
        %1321 = vmatpush1.msra.mxu0 %v992
        %1322 = vmatprep.subr.mxu0 0.0
        %1323 = vmatpush1.msra.mxu0 %v993
        %1324 = vmatprep.subr.mxu0 0.0
        %1325 = vmatpush1.msra.mxu0 %v994
        %1326 = vmatprep.subr.mxu0 0.0
        %1327 = vmatpush1.msra.mxu0 %v995
        %1328 = vmatprep.subr.mxu0 0.0
        %1329 = vmatpush1.msra.mxu0 %v996
        %1330 = vmatprep.subr.mxu0 0.0
        %1331 = vmatpush1.msra.mxu0 %v997
        %1332 = vmatprep.subr.mxu0 0.0
        %1333 = vmatpush1.msra.mxu0 %v998
        %1334 = vmatprep.subr.mxu0 0.0
        %1335 = vmatpush1.msra.mxu0 %v999
        %1336 = vmatprep.subr.mxu0 0.0
        %1337 = vmatpush1.msra.mxu0 %v1000
        %1338 = vmatprep.subr.mxu0 0.0
        %1339 = vmatpush1.msra.mxu0 %v1001
        %1340 = vmatprep.subr.mxu0 0.0
        %1341 = vmatpush1.msra.mxu0 %v1002
        %1342 = vmatprep.subr.mxu0 0.0
        %1343 = vmatpush1.msra.mxu0 %v1003
        %1344 = vmatprep.subr.mxu0 0.0
        %1345 = vmatpush1.msra.mxu0 %v1004
        %1346 = vmatprep.subr.mxu0 0.0
        %1347 = vmatpush1.msra.mxu0 %v1005
        %1348 = vmatprep.subr.mxu0 0.0
        %1349 = vmatpush1.msra.mxu0 %v1006
        %1350 = vmatprep.subr.mxu0 0.0
        %1351 = vmatpush1.msra.mxu0 %v1007
        %1352 = vmatprep.mubr.f32.mxu0 %v847
        %1353 = vmatmul.mubr.f32.gmra.mrb[0].mxu0 %v846
        %v1354 = vpop.f32.mrb[0].mxu0
        %v1355 = vadd.f32 %v1285, %v1354
        %v1356 = vpop.f32.mrb[0].mxu0
        %1357 = vdwg.mxu0
        %1358 = vst [vmem:[%s231] sm:$0xff] %v1355
        %s1359 = sand.u32 %s122, 1
        %s1360 = scalar_lea.sflag [#allocation5], %s1359
        %s1361 = sand.u32 %s122, 1
        %s1362 = smul.addr %s1361, 8
        %s1363 = scalar_lea.vmem [#allocation8], %s1362
        // Predicated region
        $region45: #{tpu_custom_call.1} parent=35 // pred_check
          %p1364 = pneg %p132
        $region46: #{tpu_custom_call.1} parent=35 // pred_check_branch
          %1366 = sbr.rel (%p1364) target = $region48
        $region47: #{tpu_custom_call.1} parent=35 // pred_region
          %s1368 = ssub.s32 128, 128
          %1369 = vsyncadd %s1360, %s1368
          %s1370 = smul.addr %s20, 128
          %s1371 = scalar_lea.hbm %s4, %s1370
          %s1373 = sshll.u32 %s1363, 4
          %s1374 = int_to_ptr.vmem [resolvable:$true] %s1373
          %1376 = dma.vmem_to_hbm [thread:$0]  %s1374, 128, %s1371, %s1360
        $region48: #{tpu_custom_call.1} parent=35 // pred_fallthru
          _
      $region36: #{tpu_custom_call.1} parent=5 // pred_fallthru
        _
      %p1377 = scmp.le.s32.totalorder 2, %s15
      // Predicated region
      $region49: #{tpu_custom_call.1} parent=5 // pred_check
        %p1378 = pneg %p1377
      $region50: #{tpu_custom_call.1} parent=5 // pred_check_branch
        %1380 = sbr.rel (%p1378) target = $region52
      $region51: #{tpu_custom_call.1} parent=5 // pred_region
        %s1381 = ssub.s32 %s15, 2
        // Predicated region
        $region53: #{tpu_custom_call.1} parent=51 // pred_check
          %p1382 = pneg %p138
        $region54: #{tpu_custom_call.1} parent=51 // pred_check_branch
          %1384 = sbr.rel (%p1382) target = $region56
        $region55: #{tpu_custom_call.1} parent=51 // pred_region
          %s1385 = sand.u32 %s123, 1
          %s1386 = scalar_lea.sflag [#allocation5], %s1385
          %s1387 = sand.u32 %s123, 1
          %s1388 = smul.addr %s1387, 8
          %s1389 = scalar_lea.vmem [#allocation8], %s1388
          %1390 = dma.done %s1386, 128
        $region56: #{tpu_custom_call.1} parent=51 // pred_fallthru
          _
      $region52: #{tpu_custom_call.1} parent=5 // pred_fallthru
        _
    $region6: #{tpu_custom_call.1} parent=1 // loop_footer
      %s19 = sadd.s32 1, %s15
    $region7: #{tpu_custom_call.1} parent=1 // loop_footer_branch
      %14 = sbr.rel target = $region3
    $region8: #{tpu_custom_call.1} parent=1 // loop_exit
      _
    %1391 = vsyncpa [#allocation4], 1
    %s1392 = scalar_lea.sflag [#allocation4], 1
    %1393 = vsyncpa %s1392, 1
    %1394 = vsyncpa [#allocation7], 1
    %1395 = vsyncpa [#allocation5], 1
    %s1396 = scalar_lea.sflag [#allocation5], 1
    %1397 = vsyncpa %s1396, 1

// kernel: tpu_custom_call.1
$region0: #{tpu_custom_call.1}
  #allocation0 [shape = 'u32[]', space=smem, size = 0x4, offset = 0x4, fixed_abs, tag = 'smem constant byte address 0x4 - core index']
  #allocation1 [shape = 'u32[144,128]{1,0:T(1,128)}', space=vmem, size = 0x12000, scoped, tag = 'internal scratch']
  #allocation2 [shape = 'f32[8,1280]{1,0:T(8,128)}', space=vmem, size = 0xa000, scoped, tag = 'scratch operand']
  %s0 = inlined_call_operand.vmem [shape: f32[16,8], index: 0, kind: input, shape index: {}]
  %s1 = inlined_call_operand.vmem [shape: f32[16,16], index: 1, kind: input, shape index: {}]
  %s2 = inlined_call_operand.hbm [shape: f32[1280,128], index: 2, kind: input, shape index: {}]
  %s3 = inlined_call_operand.hbm [shape: f32[1280,128], index: 3, kind: input, shape index: {}]
  %s4 = inlined_call_operand.hbm [shape: f32[16,128], index: 4, kind: output, shape index: {}]
  %s5 = sld [smem:[#allocation0]]
  $region57: #{tpu_custom_call.1} parent=0
    _
  %s7 = ssub.s32 1, %s5
  %s8 = scalar_select 0, %s7, %s5
  $region1: #{tpu_custom_call.1} parent=0
    #allocation3 [shape = 'u8[655360]{0}', space=vmem, size = 0xa0000, scoped, tag = 'input window, operand 2, single buffered']
    #allocation4 [shape = 's32[2]{0}', space=sflag, size = 0x8, scoped, tag = 'scoped memory for tpu_custom_call.1']
    #allocation5 [shape = 's32[2]{0}', space=sflag, size = 0x8, scoped, tag = 'scoped memory for tpu_custom_call.1']
    #allocation6 [shape = 'u8[655360]{0}', space=vmem, size = 0xa0000, scoped, tag = 'input window, operand 3, single buffered']
    #allocation7 [shape = 's32[1]{0}', space=sflag, size = 0x4, scoped, tag = 'scoped memory for tpu_custom_call.1']
    #allocation8 [shape = 'u8[8192]{0}', space=vmem, size = 0x2000, scoped, tag = 'output window, operand 0']
    %9 = vsyncpa [#allocation4], 0
    %10 = vsyncpa [#allocation7], 0
    %11 = vsyncpa [#allocation5], 0
    %s12 = scalar_lea.sflag [#allocation5], 1
    %13 = vsyncpa %s12, 0
    loop: start=0, step=1, limit=4
    $region2: #{tpu_custom_call.1} parent=1 // loop_pre_header
      _
    $region3: #{tpu_custom_call.1} parent=1 // loop_header
      %s15 = sphi 0, %s19
      %p16 = scmp.ge.s32.totalorder %s15, 4
      %s25 = sphi 0, %s27
      %s28 = sphi 0, %s25
      %s29 = sphi 0, %s28
      %s45 = sphi 0, %s29
      %s51 = sphi 0, %s53
      %s54 = sphi 0, %s51
      %s55 = sphi 0, %s54
      %s71 = sphi 0, %s55
      %s75 = sphi 0, %s75
      %s77 = sphi 0, %s75
      %s78 = sphi 0, %s77
      %s92 = sphi 0, %s78
      %s96 = sphi 0, %s96
      %s98 = sphi 0, %s96
      %s99 = sphi 0, %s98
      %s113 = sphi 0, %s99
      %s119 = sphi 0, %s121
      %s122 = sphi 0, %s119
      %s123 = sphi 0, %s122
      %s139 = sphi 0, %s123
    $region4: #{tpu_custom_call.1} parent=1 // loop_header_branch
      %18 = sbr.rel (%p16) target = $region8
    $region5: #{tpu_custom_call.1} parent=1 // loop_body
      %s20 = ssub.s32 %s15, 1
      %s21 = ssub.s32 %s15, 2
      %s22 = sadd.s32 %s15, 1
      %s23 = ssub.s32 %s15, %s22
      %p24 = scmp.eq.s32.totalorder %s23, 0
      %s26 = sadd.s32 %s25, 1
      %s27 = scalar_select %p24, %s25, %s26
      %p30 = pneg %p24
      %p31 = scmp.eq.s32.totalorder %s15, 1
      %p32 = por %p30, %p31
      %p33 = scmp.ne.s32.totalorder %s25, %s28
      %p34 = scmp.eq.s32.totalorder %s15, 0
      %p35 = por %p33, %p34
      %p36 = scmp.ne.s32.totalorder %s25, %s28
      %p37 = scmp.eq.s32.totalorder %s20, 1
      %p38 = por %p36, %p37
      %p39 = scmp.ne.s32.totalorder %s28, %s29
      %p40 = scmp.eq.s32.totalorder %s20, 0
      %p41 = por %p39, %p40
      %p42 = scmp.ne.s32.totalorder %s28, %s29
      %p43 = scmp.eq.s32.totalorder %s21, 1
      %p44 = por %p42, %p43
      %p46 = scmp.ne.s32.totalorder %s29, %s45
      %p47 = scmp.eq.s32.totalorder %s21, 0
      %p48 = por %p46, %p47
      %s49 = ssub.s32 %s15, %s22
      %p50 = scmp.eq.s32.totalorder %s49, 0
      %s52 = sadd.s32 %s51, 1
      %s53 = scalar_select %p50, %s51, %s52
      %p56 = pneg %p50
      %p57 = scmp.eq.s32.totalorder %s15, 1
      %p58 = por %p56, %p57
      %p59 = scmp.ne.s32.totalorder %s51, %s54
      %p60 = scmp.eq.s32.totalorder %s15, 0
      %p61 = por %p59, %p60
      %p62 = scmp.ne.s32.totalorder %s51, %s54
      %p63 = scmp.eq.s32.totalorder %s20, 1
      %p64 = por %p62, %p63
      %p65 = scmp.ne.s32.totalorder %s54, %s55
      %p66 = scmp.eq.s32.totalorder %s20, 0
      %p67 = por %p65, %p66
      %p68 = scmp.ne.s32.totalorder %s54, %s55
      %p69 = scmp.eq.s32.totalorder %s21, 1
      %p70 = por %p68, %p69
      %p72 = scmp.ne.s32.totalorder %s55, %s71
      %p73 = scmp.eq.s32.totalorder %s21, 0
      %p74 = por %p72, %p73
      %s76 = sadd.s32 %s75, 1
      %p79 = scmp.eq.s32.totalorder %s15, 1
      %p80 = scmp.ne.s32.totalorder %s75, %s77
      %p81 = scmp.eq.s32.totalorder %s15, 0
      %p82 = por %p80, %p81
      %p83 = scmp.ne.s32.totalorder %s75, %s77
      %p84 = scmp.eq.s32.totalorder %s20, 1
      %p85 = por %p83, %p84
      %p86 = scmp.ne.s32.totalorder %s77, %s78
      %p87 = scmp.eq.s32.totalorder %s20, 0
      %p88 = por %p86, %p87
      %p89 = scmp.ne.s32.totalorder %s77, %s78
      %p90 = scmp.eq.s32.totalorder %s21, 1
      %p91 = por %p89, %p90
      %p93 = scmp.ne.s32.totalorder %s78, %s92
      %p94 = scmp.eq.s32.totalorder %s21, 0
      %p95 = por %p93, %p94
      %s97 = sadd.s32 %s96, 1
      %p100 = scmp.eq.s32.totalorder %s15, 1
      %p101 = scmp.ne.s32.totalorder %s96, %s98
      %p102 = scmp.eq.s32.totalorder %s15, 0
      %p103 = por %p101, %p102
      %p104 = scmp.ne.s32.totalorder %s96, %s98
      %p105 = scmp.eq.s32.totalorder %s20, 1
      %p106 = por %p104, %p105
      %p107 = scmp.ne.s32.totalorder %s98, %s99
      %p108 = scmp.eq.s32.totalorder %s20, 0
      %p109 = por %p107, %p108
      %p110 = scmp.ne.s32.totalorder %s98, %s99
      %p111 = scmp.eq.s32.totalorder %s21, 1
      %p112 = por %p110, %p111
      %p114 = scmp.ne.s32.totalorder %s99, %s113
      %p115 = scmp.eq.s32.totalorder %s21, 0
      %p116 = por %p114, %p115
      %s117 = ssub.s32 %s15, %s22
      %p118 = scmp.eq.s32.totalorder %s117, 0
      %s120 = sadd.s32 %s119, 1
      %s121 = scalar_select %p118, %s119, %s120
      %p124 = pneg %p118
      %p125 = scmp.eq.s32.totalorder %s15, 1
      %p126 = por %p124, %p125
      %p127 = scmp.ne.s32.totalorder %s119, %s122
      %p128 = scmp.eq.s32.totalorder %s15, 0
      %p129 = por %p127, %p128
      %p130 = scmp.ne.s32.totalorder %s119, %s122
      %p131 = scmp.eq.s32.totalorder %s20, 1
      %p132 = por %p130, %p131
      %p133 = scmp.ne.s32.totalorder %s122, %s123
      %p134 = scmp.eq.s32.totalorder %s20, 0
      %p135 = por %p133, %p134
      %p136 = scmp.ne.s32.totalorder %s122, %s123
      %p137 = scmp.eq.s32.totalorder %s21, 1
      %p138 = por %p136, %p137
      %p140 = scmp.ne.s32.totalorder %s123, %s139
      %p141 = scmp.eq.s32.totalorder %s21, 0
      %p142 = por %p140, %p141
      %p143 = scmp.le.s32.totalorder 1, %s15
      %p144 = scmp.lt.s32.totalorder %s15, 3
      %p145 = pnand %p143, %p144
      %p146 = pneg %p145
      // Predicated region
      $region9: #{tpu_custom_call.1} parent=5 // pred_check
        _
      $region10: #{tpu_custom_call.1} parent=5 // pred_check_branch
        %148 = sbr.rel (%p145) target = $region12
      $region11: #{tpu_custom_call.1} parent=5 // pred_region
        %s149 = ssub.s32 %s15, 1
        // Predicated region
        $region13: #{tpu_custom_call.1} parent=11 // pred_check
          %p150 = pneg %p88
        $region14: #{tpu_custom_call.1} parent=11 // pred_check_branch
          %152 = sbr.rel (%p150) target = $region16
        $region15: #{tpu_custom_call.1} parent=11 // pred_region
          %s154 = ssub.s32 20480, 20480
          %155 = vsyncadd [#allocation4], %s154
          %s156 = sshll.u32 [#allocation3], 4
          %s157 = int_to_ptr.vmem [resolvable:$true] %s156
          %162 = dma.hbm_to_vmem [thread:$0]  %s2, 20480, %s157, [#allocation4], 128, 128, 8
        $region16: #{tpu_custom_call.1} parent=11 // pred_fallthru
          _
        // Predicated region
        $region17: #{tpu_custom_call.1} parent=11 // pred_check
          %p163 = pneg %p109
        $region18: #{tpu_custom_call.1} parent=11 // pred_check_branch
          %165 = sbr.rel (%p163) target = $region20
        $region19: #{tpu_custom_call.1} parent=11 // pred_region
          %s167 = ssub.s32 20480, 20480
          %168 = vsyncadd [#allocation7], %s167
          %s169 = sshll.u32 [#allocation6], 4
          %s170 = int_to_ptr.vmem [resolvable:$true] %s169
          %175 = dma.hbm_to_vmem [thread:$0]  %s3, 20480, %s170, [#allocation7], 128, 128, 8
        $region20: #{tpu_custom_call.1} parent=11 // pred_fallthru
          _
      $region12: #{tpu_custom_call.1} parent=5 // pred_fallthru
        _
      %p176 = scmp.lt.s32.totalorder %s15, 2
      // Predicated region
      $region21: #{tpu_custom_call.1} parent=5 // pred_check
        %p177 = pneg %p176
      $region22: #{tpu_custom_call.1} parent=5 // pred_check_branch
        %179 = sbr.rel (%p177) target = $region24
      $region23: #{tpu_custom_call.1} parent=5 // pred_region
        // Predicated region
        $region25: #{tpu_custom_call.1} parent=23 // pred_check
          %p180 = pneg %p35
        $region26: #{tpu_custom_call.1} parent=23 // pred_check_branch
          %182 = sbr.rel (%p180) target = $region28
        $region27: #{tpu_custom_call.1} parent=23 // pred_region
          %p183 = scmp.lt.s32.totalorder %s15, 1
          %s184 = scalar_select %p183, %s15, 1
          %s185 = smul.addr %s184, 8
          %s186 = scalar_lea.vmem %s0, %s185
        $region28: #{tpu_custom_call.1} parent=23 // pred_fallthru
          _
        // Predicated region
        $region29: #{tpu_custom_call.1} parent=23 // pred_check
          %p187 = pneg %p61
        $region30: #{tpu_custom_call.1} parent=23 // pred_check_branch
          %189 = sbr.rel (%p187) target = $region32
        $region31: #{tpu_custom_call.1} parent=23 // pred_region
          %p190 = scmp.lt.s32.totalorder %s15, 1
          %s191 = scalar_select %p190, %s15, 1
          %s192 = smul.addr %s191, 8
          %s193 = scalar_lea.vmem %s1, %s192
        $region32: #{tpu_custom_call.1} parent=23 // pred_fallthru
          _
      $region24: #{tpu_custom_call.1} parent=5 // pred_fallthru
        _
      %p194 = scmp.le.s32.totalorder 1, %s15
      %p195 = scmp.lt.s32.totalorder %s15, 3
      %p196 = pnand %p194, %p195
      %p197 = pneg %p196
      // Predicated region
      $region33: #{tpu_custom_call.1} parent=5 // pred_check
        _
      $region34: #{tpu_custom_call.1} parent=5 // pred_check_branch
        %199 = sbr.rel (%p196) target = $region36
      $region35: #{tpu_custom_call.1} parent=5 // pred_region
        %s200 = ssub.s32 %s15, 1
        // Predicated region
        $region37: #{tpu_custom_call.1} parent=35 // pred_check
          %p201 = pneg %p88
        $region38: #{tpu_custom_call.1} parent=35 // pred_check_branch
          %203 = sbr.rel (%p201) target = $region40
        $region39: #{tpu_custom_call.1} parent=35 // pred_region
          %204 = dma.done [#allocation4], 20480
        $region40: #{tpu_custom_call.1} parent=35 // pred_fallthru
          _
        // Predicated region
        $region41: #{tpu_custom_call.1} parent=35 // pred_check
          %p205 = pneg %p109
        $region42: #{tpu_custom_call.1} parent=35 // pred_check_branch
          %207 = sbr.rel (%p205) target = $region44
        $region43: #{tpu_custom_call.1} parent=35 // pred_region
          %208 = dma.done [#allocation7], 20480
        $region44: #{tpu_custom_call.1} parent=35 // pred_fallthru
          _
        %p209 = scmp.lt.s32.totalorder %s20, 1
        %s210 = scalar_select %p209, %s20, 1
        %s211 = smul.addr %s210, 8
        %s212 = scalar_lea.vmem %s0, %s211
        %p213 = pneg %p41
        %p214 = pneg %p38
        %p215 = scmp.lt.s32.totalorder %s20, 1
        %s216 = scalar_select %p215, %s20, 1
        %s217 = smul.addr %s216, 8
        %s218 = scalar_lea.vmem %s1, %s217
        %p219 = pneg %p67
        %p220 = pneg %p64
        %p221 = pneg %p88
        %p222 = pneg %p85
        %p223 = pneg %p109
        %p224 = pneg %p106
        %p225 = pneg %p135
        %p226 = pneg %p132
        %s227 = sand.u32 %s122, 1
        %s228 = scalar_lea.sflag [#allocation5], %s227
        %s229 = sand.u32 %s122, 1
        %s230 = smul.addr %s229, 8
        %s231 = scalar_lea.vmem [#allocation8], %s230
        %p232 = scmp.lt.s32.totalorder %s20, 1
        %s233 = scalar_select %p232, %s20, 1
        %s234 = smul.addr %s233, 8
        %s235 = scalar_lea.vmem %s0, %s234
        %p236 = scmp.lt.s32.totalorder %s20, 1
        %s237 = scalar_select %p236, %s20, 1
        %s238 = smul.addr %s237, 8
        %s239 = scalar_lea.vmem %s1, %s238
        %v240 = vld [vmem:[%s235] sm:$0xff]
        %v241 = vld [vmem:[%s239] sm:$0xff]
        %242 = vst [vmem:[#allocation2 + $0x48] sm:$0xff] 0.0
        %vm243 = vcmask 64512
        %244 = vst.msk [vmem:[#allocation2 + $0x48] sm:$0xff] %vm243, %v240
        %vm245 = vcmask 72768
        %246 = vst.msk [vmem:[#allocation2 + $0x48] sm:$0xff] %vm245, 1.0
        %247 = vst [vmem:[#allocation2 + $0x40] sm:$0xff] 0.0
        %vm248 = vcmask 130048
        %249 = vst.msk [vmem:[#allocation2 + $0x40] sm:$0xff] %vm248, %v241
        %v250 = vld [vmem:[#allocation2 + $0x40] sm:$0xff]
        %252 = vset.pattern.permute.xlu0 0
        %253 = vperm.xlu0 %252, %v240
        %v254 = vpop.permute.xlu0 %253
        %v256 = vmul.f32 %v254, %v250
        %257 = vst [vmem:[#allocation2] sm:$0xff] %v256
        %258 = vset.pattern.permute.xlu0 1
        %259 = vperm.xlu0 %258, %v240
        %v260 = vpop.permute.xlu0 %259
        %v262 = vmul.f32 %v260, %v250
        %263 = vst [vmem:[#allocation2 + $0x8] sm:$0xff] %v262
        %264 = vset.pattern.permute.xlu0 2
        %265 = vperm.xlu0 %264, %v240
        %v266 = vpop.permute.xlu0 %265
        %v268 = vmul.f32 %v266, %v250
        %269 = vst [vmem:[#allocation2 + $0x10] sm:$0xff] %v268
        %270 = vset.pattern.permute.xlu0 3
        %271 = vperm.xlu0 %270, %v240
        %v272 = vpop.permute.xlu0 %271
        %v274 = vmul.f32 %v272, %v250
        %275 = vst [vmem:[#allocation2 + $0x18] sm:$0xff] %v274
        %276 = vset.pattern.permute.xlu0 4
        %277 = vperm.xlu0 %276, %v240
        %v278 = vpop.permute.xlu0 %277
        %v280 = vmul.f32 %v278, %v250
        %281 = vst [vmem:[#allocation2 + $0x20] sm:$0xff] %v280
        %282 = vset.pattern.permute.xlu0 5
        %283 = vperm.xlu0 %282, %v240
        %v284 = vpop.permute.xlu0 %283
        %v286 = vmul.f32 %v284, %v250
        %287 = vst [vmem:[#allocation2 + $0x28] sm:$0xff] %v286
        %288 = vset.pattern.permute.xlu0 6
        %289 = vperm.xlu0 %288, %v240
        %v290 = vpop.permute.xlu0 %289
        %v292 = vmul.f32 %v290, %v250
        %293 = vst [vmem:[#allocation2 + $0x30] sm:$0xff] %v292
        %294 = vset.pattern.permute.xlu0 7
        %295 = vperm.xlu0 %294, %v240
        %v296 = vpop.permute.xlu0 %295
        %v298 = vmul.f32 %v296, %v250
        %299 = vst [vmem:[#allocation2 + $0x38] sm:$0xff] %v298
        %v300 = vld [vmem:[#allocation2] sm:$0xff]
        %v301 = vld [vmem:[#allocation2 + $0x8] sm:$0xff]
        %v302 = vld [vmem:[#allocation2 + $0x10] sm:$0xff]
        %v303 = vld [vmem:[#allocation2 + $0x18] sm:$0xff]
        %v304 = vld [vmem:[#allocation2 + $0x20] sm:$0xff]
        %v305 = vld [vmem:[#allocation2 + $0x28] sm:$0xff]
        %v306 = vld [vmem:[#allocation2 + $0x30] sm:$0xff]
        %v307 = vld [vmem:[#allocation2 + $0x38] sm:$0xff]
        %v308 = vld [vmem:[#allocation2 + $0x40] sm:$0xff]
        %v309 = vld [vmem:[#allocation2 + $0x48] sm:$0xff]
        %v310 = vld [vmem:[#allocation3] sm:$0xff]
        %v311 = vld [vmem:[#allocation3 + $0x8] sm:$0xff]
        %v312 = vld [vmem:[#allocation3 + $0x10] sm:$0xff]
        %v313 = vld [vmem:[#allocation3 + $0x18] sm:$0xff]
        %v314 = vld [vmem:[#allocation3 + $0x20] sm:$0xff]
        %v315 = vld [vmem:[#allocation3 + $0x28] sm:$0xff]
        %v316 = vld [vmem:[#allocation3 + $0x30] sm:$0xff]
        %v317 = vld [vmem:[#allocation3 + $0x38] sm:$0xff]
        %v318 = vld [vmem:[#allocation3 + $0x40] sm:$0xff]
        %v319 = vld [vmem:[#allocation3 + $0x48] sm:$0xff]
        %v320 = vld [vmem:[#allocation3 + $0x50] sm:$0xff]
        %v321 = vld [vmem:[#allocation3 + $0x58] sm:$0xff]
        %v322 = vld [vmem:[#allocation3 + $0x60] sm:$0xff]
        %v323 = vld [vmem:[#allocation3 + $0x68] sm:$0xff]
        %v324 = vld [vmem:[#allocation3 + $0x70] sm:$0xff]
        %v325 = vld [vmem:[#allocation3 + $0x78] sm:$0xff]
        %v326 = vld [vmem:[#allocation3 + $0x80] sm:$0xff]
        %v327 = vld [vmem:[#allocation3 + $0x88] sm:$0xff]
        %v328 = vld [vmem:[#allocation3 + $0x90] sm:$0xff]
        %v329 = vld [vmem:[#allocation3 + $0x98] sm:$0xff]
        %v330 = vld [vmem:[#allocation3 + $0xa0] sm:$0xff]
        %v331 = vld [vmem:[#allocation3 + $0xa8] sm:$0xff]
        %v332 = vld [vmem:[#allocation3 + $0xb0] sm:$0xff]
        %v333 = vld [vmem:[#allocation3 + $0xb8] sm:$0xff]
        %v334 = vld [vmem:[#allocation3 + $0xc0] sm:$0xff]
        %v335 = vld [vmem:[#allocation3 + $0xc8] sm:$0xff]
        %v336 = vld [vmem:[#allocation3 + $0xd0] sm:$0xff]
        %v337 = vld [vmem:[#allocation3 + $0xd8] sm:$0xff]
        %v338 = vld [vmem:[#allocation3 + $0xe0] sm:$0xff]
        %v339 = vld [vmem:[#allocation3 + $0xe8] sm:$0xff]
        %v340 = vld [vmem:[#allocation3 + $0xf0] sm:$0xff]
        %v341 = vld [vmem:[#allocation3 + $0xf8] sm:$0xff]
        %v342 = vld [vmem:[#allocation3 + $0x100] sm:$0xff]
        %v343 = vld [vmem:[#allocation3 + $0x108] sm:$0xff]
        %v344 = vld [vmem:[#allocation3 + $0x110] sm:$0xff]
        %v345 = vld [vmem:[#allocation3 + $0x118] sm:$0xff]
        %v346 = vld [vmem:[#allocation3 + $0x120] sm:$0xff]
        %v347 = vld [vmem:[#allocation3 + $0x128] sm:$0xff]
        %v348 = vld [vmem:[#allocation3 + $0x130] sm:$0xff]
        %v349 = vld [vmem:[#allocation3 + $0x138] sm:$0xff]
        %v350 = vld [vmem:[#allocation3 + $0x140] sm:$0xff]
        %v351 = vld [vmem:[#allocation3 + $0x148] sm:$0xff]
        %v352 = vld [vmem:[#allocation3 + $0x150] sm:$0xff]
        %v353 = vld [vmem:[#allocation3 + $0x158] sm:$0xff]
        %v354 = vld [vmem:[#allocation3 + $0x160] sm:$0xff]
        %v355 = vld [vmem:[#allocation3 + $0x168] sm:$0xff]
        %v356 = vld [vmem:[#allocation3 + $0x170] sm:$0xff]
        %v357 = vld [vmem:[#allocation3 + $0x178] sm:$0xff]
        %v358 = vld [vmem:[#allocation3 + $0x180] sm:$0xff]
        %v359 = vld [vmem:[#allocation3 + $0x188] sm:$0xff]
        %v360 = vld [vmem:[#allocation3 + $0x190] sm:$0xff]
        %v361 = vld [vmem:[#allocation3 + $0x198] sm:$0xff]
        %v362 = vld [vmem:[#allocation3 + $0x1a0] sm:$0xff]
        %v363 = vld [vmem:[#allocation3 + $0x1a8] sm:$0xff]
        %v364 = vld [vmem:[#allocation3 + $0x1b0] sm:$0xff]
        %v365 = vld [vmem:[#allocation3 + $0x1b8] sm:$0xff]
        %v366 = vld [vmem:[#allocation3 + $0x1c0] sm:$0xff]
        %v367 = vld [vmem:[#allocation3 + $0x1c8] sm:$0xff]
        %v368 = vld [vmem:[#allocation3 + $0x1d0] sm:$0xff]
        %v369 = vld [vmem:[#allocation3 + $0x1d8] sm:$0xff]
        %v370 = vld [vmem:[#allocation3 + $0x1e0] sm:$0xff]
        %v371 = vld [vmem:[#allocation3 + $0x1e8] sm:$0xff]
        %v372 = vld [vmem:[#allocation3 + $0x1f0] sm:$0xff]
        %v373 = vld [vmem:[#allocation3 + $0x1f8] sm:$0xff]
        %v374 = vld [vmem:[#allocation3 + $0x200] sm:$0xff]
        %v375 = vld [vmem:[#allocation3 + $0x208] sm:$0xff]
        %v376 = vld [vmem:[#allocation3 + $0x210] sm:$0xff]
        %v377 = vld [vmem:[#allocation3 + $0x218] sm:$0xff]
        %v378 = vld [vmem:[#allocation3 + $0x220] sm:$0xff]
        %v379 = vld [vmem:[#allocation3 + $0x228] sm:$0xff]
        %v380 = vld [vmem:[#allocation3 + $0x230] sm:$0xff]
        %v381 = vld [vmem:[#allocation3 + $0x238] sm:$0xff]
        %v382 = vld [vmem:[#allocation3 + $0x240] sm:$0xff]
        %v383 = vld [vmem:[#allocation3 + $0x248] sm:$0xff]
        %v384 = vld [vmem:[#allocation3 + $0x250] sm:$0xff]
        %v385 = vld [vmem:[#allocation3 + $0x258] sm:$0xff]
        %v386 = vld [vmem:[#allocation3 + $0x260] sm:$0xff]
        %v387 = vld [vmem:[#allocation3 + $0x268] sm:$0xff]
        %v388 = vld [vmem:[#allocation3 + $0x270] sm:$0xff]
        %v389 = vld [vmem:[#allocation3 + $0x278] sm:$0xff]
        %v390 = vld [vmem:[#allocation3 + $0x280] sm:$0xff]
        %v391 = vld [vmem:[#allocation3 + $0x288] sm:$0xff]
        %v392 = vld [vmem:[#allocation3 + $0x290] sm:$0xff]
        %v393 = vld [vmem:[#allocation3 + $0x298] sm:$0xff]
        %v394 = vld [vmem:[#allocation3 + $0x2a0] sm:$0xff]
        %v395 = vld [vmem:[#allocation3 + $0x2a8] sm:$0xff]
        %v396 = vld [vmem:[#allocation3 + $0x2b0] sm:$0xff]
        %v397 = vld [vmem:[#allocation3 + $0x2b8] sm:$0xff]
        %v398 = vld [vmem:[#allocation3 + $0x2c0] sm:$0xff]
        %v399 = vld [vmem:[#allocation3 + $0x2c8] sm:$0xff]
        %v400 = vld [vmem:[#allocation3 + $0x2d0] sm:$0xff]
        %v401 = vld [vmem:[#allocation3 + $0x2d8] sm:$0xff]
        %v402 = vld [vmem:[#allocation3 + $0x2e0] sm:$0xff]
        %v403 = vld [vmem:[#allocation3 + $0x2e8] sm:$0xff]
        %v404 = vld [vmem:[#allocation3 + $0x2f0] sm:$0xff]
        %v405 = vld [vmem:[#allocation3 + $0x2f8] sm:$0xff]
        %v406 = vld [vmem:[#allocation3 + $0x300] sm:$0xff]
        %v407 = vld [vmem:[#allocation3 + $0x308] sm:$0xff]
        %v408 = vld [vmem:[#allocation3 + $0x310] sm:$0xff]
        %v409 = vld [vmem:[#allocation3 + $0x318] sm:$0xff]
        %v410 = vld [vmem:[#allocation3 + $0x320] sm:$0xff]
        %v411 = vld [vmem:[#allocation3 + $0x328] sm:$0xff]
        %v412 = vld [vmem:[#allocation3 + $0x330] sm:$0xff]
        %v413 = vld [vmem:[#allocation3 + $0x338] sm:$0xff]
        %v414 = vld [vmem:[#allocation3 + $0x340] sm:$0xff]
        %v415 = vld [vmem:[#allocation3 + $0x348] sm:$0xff]
        %v416 = vld [vmem:[#allocation3 + $0x350] sm:$0xff]
        %v417 = vld [vmem:[#allocation3 + $0x358] sm:$0xff]
        %v418 = vld [vmem:[#allocation3 + $0x360] sm:$0xff]
        %v419 = vld [vmem:[#allocation3 + $0x368] sm:$0xff]
        %v420 = vld [vmem:[#allocation3 + $0x370] sm:$0xff]
        %v421 = vld [vmem:[#allocation3 + $0x378] sm:$0xff]
        %v422 = vld [vmem:[#allocation3 + $0x380] sm:$0xff]
        %v423 = vld [vmem:[#allocation3 + $0x388] sm:$0xff]
        %v424 = vld [vmem:[#allocation3 + $0x390] sm:$0xff]
        %v425 = vld [vmem:[#allocation3 + $0x398] sm:$0xff]
        %v426 = vld [vmem:[#allocation3 + $0x3a0] sm:$0xff]
        %v427 = vld [vmem:[#allocation3 + $0x3a8] sm:$0xff]
        %v428 = vld [vmem:[#allocation3 + $0x3b0] sm:$0xff]
        %v429 = vld [vmem:[#allocation3 + $0x3b8] sm:$0xff]
        %v430 = vld [vmem:[#allocation3 + $0x3c0] sm:$0xff]
        %v431 = vld [vmem:[#allocation3 + $0x3c8] sm:$0xff]
        %v432 = vld [vmem:[#allocation3 + $0x3d0] sm:$0xff]
        %v433 = vld [vmem:[#allocation3 + $0x3d8] sm:$0xff]
        %v434 = vld [vmem:[#allocation3 + $0x3e0] sm:$0xff]
        %v435 = vld [vmem:[#allocation3 + $0x3e8] sm:$0xff]
        %v436 = vld [vmem:[#allocation3 + $0x3f0] sm:$0xff]
        %v437 = vld [vmem:[#allocation3 + $0x3f8] sm:$0xff]
        %v438 = vld [vmem:[#allocation3 + $0x400] sm:$0xff]
        %v439 = vld [vmem:[#allocation3 + $0x408] sm:$0xff]
        %v440 = vld [vmem:[#allocation3 + $0x410] sm:$0xff]
        %v441 = vld [vmem:[#allocation3 + $0x418] sm:$0xff]
        %v442 = vld [vmem:[#allocation3 + $0x420] sm:$0xff]
        %v443 = vld [vmem:[#allocation3 + $0x428] sm:$0xff]
        %v444 = vld [vmem:[#allocation3 + $0x430] sm:$0xff]
        %v445 = vld [vmem:[#allocation3 + $0x438] sm:$0xff]
        %v446 = vld [vmem:[#allocation3 + $0x440] sm:$0xff]
        %v447 = vld [vmem:[#allocation3 + $0x448] sm:$0xff]
        %v448 = vld [vmem:[#allocation3 + $0x450] sm:$0xff]
        %v449 = vld [vmem:[#allocation3 + $0x458] sm:$0xff]
        %v450 = vld [vmem:[#allocation3 + $0x460] sm:$0xff]
        %v451 = vld [vmem:[#allocation3 + $0x468] sm:$0xff]
        %v452 = vld [vmem:[#allocation3 + $0x470] sm:$0xff]
        %v453 = vld [vmem:[#allocation3 + $0x478] sm:$0xff]
        %v454 = vld [vmem:[#allocation3 + $0x480] sm:$0xff]
        %v455 = vld [vmem:[#allocation3 + $0x488] sm:$0xff]
        %v456 = vld [vmem:[#allocation3 + $0x490] sm:$0xff]
        %v457 = vld [vmem:[#allocation3 + $0x498] sm:$0xff]
        %v458 = vld [vmem:[#allocation3 + $0x4a0] sm:$0xff]
        %v459 = vld [vmem:[#allocation3 + $0x4a8] sm:$0xff]
        %v460 = vld [vmem:[#allocation3 + $0x4b0] sm:$0xff]
        %v461 = vld [vmem:[#allocation3 + $0x4b8] sm:$0xff]
        %v462 = vld [vmem:[#allocation3 + $0x4c0] sm:$0xff]
        %v463 = vld [vmem:[#allocation3 + $0x4c8] sm:$0xff]
        %v464 = vld [vmem:[#allocation3 + $0x4d0] sm:$0xff]
        %v465 = vld [vmem:[#allocation3 + $0x4d8] sm:$0xff]
        %v466 = vld [vmem:[#allocation3 + $0x4e0] sm:$0xff]
        %v467 = vld [vmem:[#allocation3 + $0x4e8] sm:$0xff]
        %v468 = vld [vmem:[#allocation3 + $0x4f0] sm:$0xff]
        %v469 = vld [vmem:[#allocation3 + $0x4f8] sm:$0xff]
        %470 = vmatprep.subr.mxu0 0.0
        %471 = vmatpush1.msra.mxu0 %v310
        %472 = vmatprep.subr.mxu0 0.0
        %473 = vmatpush1.msra.mxu0 %v311
        %474 = vmatprep.subr.mxu0 0.0
        %475 = vmatpush1.msra.mxu0 %v312
        %476 = vmatprep.subr.mxu0 0.0
        %477 = vmatpush1.msra.mxu0 %v313
        %478 = vmatprep.subr.mxu0 0.0
        %479 = vmatpush1.msra.mxu0 %v314
        %480 = vmatprep.subr.mxu0 0.0
        %481 = vmatpush1.msra.mxu0 %v315
        %482 = vmatprep.subr.mxu0 0.0
        %483 = vmatpush1.msra.mxu0 %v316
        %484 = vmatprep.subr.mxu0 0.0
        %485 = vmatpush1.msra.mxu0 %v317
        %486 = vmatprep.subr.mxu0 0.0
        %487 = vmatpush1.msra.mxu0 %v318
        %488 = vmatprep.subr.mxu0 0.0
        %489 = vmatpush1.msra.mxu0 %v319
        %490 = vmatprep.subr.mxu0 0.0
        %491 = vmatpush1.msra.mxu0 %v320
        %492 = vmatprep.subr.mxu0 0.0
        %493 = vmatpush1.msra.mxu0 %v321
        %494 = vmatprep.subr.mxu0 0.0
        %495 = vmatpush1.msra.mxu0 %v322
        %496 = vmatprep.subr.mxu0 0.0
        %497 = vmatpush1.msra.mxu0 %v323
        %498 = vmatprep.subr.mxu0 0.0
        %499 = vmatpush1.msra.mxu0 %v324
        %500 = vmatprep.subr.mxu0 0.0
        %501 = vmatpush1.msra.mxu0 %v325
        %502 = vmatprep.subr.mxu0 0.0
        %503 = vmatpush1.msra.mxu0 %v326
        %504 = vmatprep.subr.mxu0 0.0
        %505 = vmatpush1.msra.mxu0 %v327
        %506 = vmatprep.subr.mxu0 0.0
        %507 = vmatpush1.msra.mxu0 %v328
        %508 = vmatprep.subr.mxu0 0.0
        %509 = vmatpush1.msra.mxu0 %v329
        %510 = vmatprep.subr.mxu0 0.0
        %511 = vmatpush1.msra.mxu0 %v330
        %512 = vmatprep.subr.mxu0 0.0
        %513 = vmatpush1.msra.mxu0 %v331
        %514 = vmatprep.subr.mxu0 0.0
        %515 = vmatpush1.msra.mxu0 %v332
        %516 = vmatprep.subr.mxu0 0.0
        %517 = vmatpush1.msra.mxu0 %v333
        %518 = vmatprep.subr.mxu0 0.0
        %519 = vmatpush1.msra.mxu0 %v334
        %520 = vmatprep.subr.mxu0 0.0
        %521 = vmatpush1.msra.mxu0 %v335
        %522 = vmatprep.subr.mxu0 0.0
        %523 = vmatpush1.msra.mxu0 %v336
        %524 = vmatprep.subr.mxu0 0.0
        %525 = vmatpush1.msra.mxu0 %v337
        %526 = vmatprep.subr.mxu0 0.0
        %527 = vmatpush1.msra.mxu0 %v338
        %528 = vmatprep.subr.mxu0 0.0
        %529 = vmatpush1.msra.mxu0 %v339
        %530 = vmatprep.subr.mxu0 0.0
        %531 = vmatpush1.msra.mxu0 %v340
        %532 = vmatprep.subr.mxu0 0.0
        %533 = vmatpush1.msra.mxu0 %v341
        %534 = vmatprep.mubr.f32.mxu0 %v301
        %535 = vmatmul.mubr.f32.gmra.mrb[0].mxu0 %v300
        %v536 = vpop.f32.mrb[0].mxu0
        %v537 = vadd.f32 0.0, %v536
        %v538 = vpop.f32.mrb[0].mxu0
        %539 = vdwg.mxu0
        %540 = vmatprep.subr.mxu0 0.0
        %541 = vmatpush1.msra.mxu0 %v342
        %542 = vmatprep.subr.mxu0 0.0
        %543 = vmatpush1.msra.mxu0 %v343
        %544 = vmatprep.subr.mxu0 0.0
        %545 = vmatpush1.msra.mxu0 %v344
        %546 = vmatprep.subr.mxu0 0.0
        %547 = vmatpush1.msra.mxu0 %v345
        %548 = vmatprep.subr.mxu0 0.0
        %549 = vmatpush1.msra.mxu0 %v346
        %550 = vmatprep.subr.mxu0 0.0
        %551 = vmatpush1.msra.mxu0 %v347
        %552 = vmatprep.subr.mxu0 0.0
        %553 = vmatpush1.msra.mxu0 %v348
        %554 = vmatprep.subr.mxu0 0.0
        %555 = vmatpush1.msra.mxu0 %v349
        %556 = vmatprep.subr.mxu0 0.0
        %557 = vmatpush1.msra.mxu0 %v350
        %558 = vmatprep.subr.mxu0 0.0
        %559 = vmatpush1.msra.mxu0 %v351
        %560 = vmatprep.subr.mxu0 0.0
        %561 = vmatpush1.msra.mxu0 %v352
        %562 = vmatprep.subr.mxu0 0.0
        %563 = vmatpush1.msra.mxu0 %v353
        %564 = vmatprep.subr.mxu0 0.0
        %565 = vmatpush1.msra.mxu0 %v354
        %566 = vmatprep.subr.mxu0 0.0
        %567 = vmatpush1.msra.mxu0 %v355
        %568 = vmatprep.subr.mxu0 0.0
        %569 = vmatpush1.msra.mxu0 %v356
        %570 = vmatprep.subr.mxu0 0.0
        %571 = vmatpush1.msra.mxu0 %v357
        %572 = vmatprep.subr.mxu0 0.0
        %573 = vmatpush1.msra.mxu0 %v358
        %574 = vmatprep.subr.mxu0 0.0
        %575 = vmatpush1.msra.mxu0 %v359
        %576 = vmatprep.subr.mxu0 0.0
        %577 = vmatpush1.msra.mxu0 %v360
        %578 = vmatprep.subr.mxu0 0.0
        %579 = vmatpush1.msra.mxu0 %v361
        %580 = vmatprep.subr.mxu0 0.0
        %581 = vmatpush1.msra.mxu0 %v362
        %582 = vmatprep.subr.mxu0 0.0
        %583 = vmatpush1.msra.mxu0 %v363
        %584 = vmatprep.subr.mxu0 0.0
        %585 = vmatpush1.msra.mxu0 %v364
        %586 = vmatprep.subr.mxu0 0.0
        %587 = vmatpush1.msra.mxu0 %v365
        %588 = vmatprep.subr.mxu0 0.0
        %589 = vmatpush1.msra.mxu0 %v366
        %590 = vmatprep.subr.mxu0 0.0
        %591 = vmatpush1.msra.mxu0 %v367
        %592 = vmatprep.subr.mxu0 0.0
        %593 = vmatpush1.msra.mxu0 %v368
        %594 = vmatprep.subr.mxu0 0.0
        %595 = vmatpush1.msra.mxu0 %v369
        %596 = vmatprep.subr.mxu0 0.0
        %597 = vmatpush1.msra.mxu0 %v370
        %598 = vmatprep.subr.mxu0 0.0
        %599 = vmatpush1.msra.mxu0 %v371
        %600 = vmatprep.subr.mxu0 0.0
        %601 = vmatpush1.msra.mxu0 %v372
        %602 = vmatprep.subr.mxu0 0.0
        %603 = vmatpush1.msra.mxu0 %v373
        %604 = vmatprep.mubr.f32.mxu0 %v303
        %605 = vmatmul.mubr.f32.gmra.mrb[0].mxu0 %v302
        %v606 = vpop.f32.mrb[0].mxu0
        %v607 = vadd.f32 %v537, %v606
        %v608 = vpop.f32.mrb[0].mxu0
        %609 = vdwg.mxu0
        %610 = vmatprep.subr.mxu0 0.0
        %611 = vmatpush1.msra.mxu0 %v374
        %612 = vmatprep.subr.mxu0 0.0
        %613 = vmatpush1.msra.mxu0 %v375
        %614 = vmatprep.subr.mxu0 0.0
        %615 = vmatpush1.msra.mxu0 %v376
        %616 = vmatprep.subr.mxu0 0.0
        %617 = vmatpush1.msra.mxu0 %v377
        %618 = vmatprep.subr.mxu0 0.0
        %619 = vmatpush1.msra.mxu0 %v378
        %620 = vmatprep.subr.mxu0 0.0
        %621 = vmatpush1.msra.mxu0 %v379
        %622 = vmatprep.subr.mxu0 0.0
        %623 = vmatpush1.msra.mxu0 %v380
        %624 = vmatprep.subr.mxu0 0.0
        %625 = vmatpush1.msra.mxu0 %v381
        %626 = vmatprep.subr.mxu0 0.0
        %627 = vmatpush1.msra.mxu0 %v382
        %628 = vmatprep.subr.mxu0 0.0
        %629 = vmatpush1.msra.mxu0 %v383
        %630 = vmatprep.subr.mxu0 0.0
        %631 = vmatpush1.msra.mxu0 %v384
        %632 = vmatprep.subr.mxu0 0.0
        %633 = vmatpush1.msra.mxu0 %v385
        %634 = vmatprep.subr.mxu0 0.0
        %635 = vmatpush1.msra.mxu0 %v386
        %636 = vmatprep.subr.mxu0 0.0
        %637 = vmatpush1.msra.mxu0 %v387
        %638 = vmatprep.subr.mxu0 0.0
        %639 = vmatpush1.msra.mxu0 %v388
        %640 = vmatprep.subr.mxu0 0.0
        %641 = vmatpush1.msra.mxu0 %v389
        %642 = vmatprep.subr.mxu0 0.0
        %643 = vmatpush1.msra.mxu0 %v390
        %644 = vmatprep.subr.mxu0 0.0
        %645 = vmatpush1.msra.mxu0 %v391
        %646 = vmatprep.subr.mxu0 0.0
        %647 = vmatpush1.msra.mxu0 %v392
        %648 = vmatprep.subr.mxu0 0.0
        %649 = vmatpush1.msra.mxu0 %v393
        %650 = vmatprep.subr.mxu0 0.0
        %651 = vmatpush1.msra.mxu0 %v394
        %652 = vmatprep.subr.mxu0 0.0
        %653 = vmatpush1.msra.mxu0 %v395
        %654 = vmatprep.subr.mxu0 0.0
        %655 = vmatpush1.msra.mxu0 %v396
        %656 = vmatprep.subr.mxu0 0.0
        %657 = vmatpush1.msra.mxu0 %v397
        %658 = vmatprep.subr.mxu0 0.0
        %659 = vmatpush1.msra.mxu0 %v398
        %660 = vmatprep.subr.mxu0 0.0
        %661 = vmatpush1.msra.mxu0 %v399
        %662 = vmatprep.subr.mxu0 0.0
        %663 = vmatpush1.msra.mxu0 %v400
        %664 = vmatprep.subr.mxu0 0.0
        %665 = vmatpush1.msra.mxu0 %v401
        %666 = vmatprep.subr.mxu0 0.0
        %667 = vmatpush1.msra.mxu0 %v402
        %668 = vmatprep.subr.mxu0 0.0
        %669 = vmatpush1.msra.mxu0 %v403
        %670 = vmatprep.subr.mxu0 0.0
        %671 = vmatpush1.msra.mxu0 %v404
        %672 = vmatprep.subr.mxu0 0.0
        %673 = vmatpush1.msra.mxu0 %v405
        %674 = vmatprep.mubr.f32.mxu0 %v305
        %675 = vmatmul.mubr.f32.gmra.mrb[0].mxu0 %v304
        %v676 = vpop.f32.mrb[0].mxu0
        %v677 = vadd.f32 %v607, %v676
        %v678 = vpop.f32.mrb[0].mxu0
        %679 = vdwg.mxu0
        %680 = vmatprep.subr.mxu0 0.0
        %681 = vmatpush1.msra.mxu0 %v406
        %682 = vmatprep.subr.mxu0 0.0
        %683 = vmatpush1.msra.mxu0 %v407
        %684 = vmatprep.subr.mxu0 0.0
        %685 = vmatpush1.msra.mxu0 %v408
        %686 = vmatprep.subr.mxu0 0.0
        %687 = vmatpush1.msra.mxu0 %v409
        %688 = vmatprep.subr.mxu0 0.0
        %689 = vmatpush1.msra.mxu0 %v410
        %690 = vmatprep.subr.mxu0 0.0
        %691 = vmatpush1.msra.mxu0 %v411
        %692 = vmatprep.subr.mxu0 0.0
        %693 = vmatpush1.msra.mxu0 %v412
        %694 = vmatprep.subr.mxu0 0.0
        %695 = vmatpush1.msra.mxu0 %v413
        %696 = vmatprep.subr.mxu0 0.0
        %697 = vmatpush1.msra.mxu0 %v414
        %698 = vmatprep.subr.mxu0 0.0
        %699 = vmatpush1.msra.mxu0 %v415
        %700 = vmatprep.subr.mxu0 0.0
        %701 = vmatpush1.msra.mxu0 %v416
        %702 = vmatprep.subr.mxu0 0.0
        %703 = vmatpush1.msra.mxu0 %v417
        %704 = vmatprep.subr.mxu0 0.0
        %705 = vmatpush1.msra.mxu0 %v418
        %706 = vmatprep.subr.mxu0 0.0
        %707 = vmatpush1.msra.mxu0 %v419
        %708 = vmatprep.subr.mxu0 0.0
        %709 = vmatpush1.msra.mxu0 %v420
        %710 = vmatprep.subr.mxu0 0.0
        %711 = vmatpush1.msra.mxu0 %v421
        %712 = vmatprep.subr.mxu0 0.0
        %713 = vmatpush1.msra.mxu0 %v422
        %714 = vmatprep.subr.mxu0 0.0
        %715 = vmatpush1.msra.mxu0 %v423
        %716 = vmatprep.subr.mxu0 0.0
        %717 = vmatpush1.msra.mxu0 %v424
        %718 = vmatprep.subr.mxu0 0.0
        %719 = vmatpush1.msra.mxu0 %v425
        %720 = vmatprep.subr.mxu0 0.0
        %721 = vmatpush1.msra.mxu0 %v426
        %722 = vmatprep.subr.mxu0 0.0
        %723 = vmatpush1.msra.mxu0 %v427
        %724 = vmatprep.subr.mxu0 0.0
        %725 = vmatpush1.msra.mxu0 %v428
        %726 = vmatprep.subr.mxu0 0.0
        %727 = vmatpush1.msra.mxu0 %v429
        %728 = vmatprep.subr.mxu0 0.0
        %729 = vmatpush1.msra.mxu0 %v430
        %730 = vmatprep.subr.mxu0 0.0
        %731 = vmatpush1.msra.mxu0 %v431
        %732 = vmatprep.subr.mxu0 0.0
        %733 = vmatpush1.msra.mxu0 %v432
        %734 = vmatprep.subr.mxu0 0.0
        %735 = vmatpush1.msra.mxu0 %v433
        %736 = vmatprep.subr.mxu0 0.0
        %737 = vmatpush1.msra.mxu0 %v434
        %738 = vmatprep.subr.mxu0 0.0
        %739 = vmatpush1.msra.mxu0 %v435
        %740 = vmatprep.subr.mxu0 0.0
        %741 = vmatpush1.msra.mxu0 %v436
        %742 = vmatprep.subr.mxu0 0.0
        %743 = vmatpush1.msra.mxu0 %v437
        %744 = vmatprep.mubr.f32.mxu0 %v307
        %745 = vmatmul.mubr.f32.gmra.mrb[0].mxu0 %v306
        %v746 = vpop.f32.mrb[0].mxu0
        %v747 = vadd.f32 %v677, %v746
        %v748 = vpop.f32.mrb[0].mxu0
        %749 = vdwg.mxu0
        %750 = vmatprep.subr.mxu0 0.0
        %751 = vmatpush1.msra.mxu0 %v438
        %752 = vmatprep.subr.mxu0 0.0
        %753 = vmatpush1.msra.mxu0 %v439
        %754 = vmatprep.subr.mxu0 0.0
        %755 = vmatpush1.msra.mxu0 %v440
        %756 = vmatprep.subr.mxu0 0.0
        %757 = vmatpush1.msra.mxu0 %v441
        %758 = vmatprep.subr.mxu0 0.0
        %759 = vmatpush1.msra.mxu0 %v442
        %760 = vmatprep.subr.mxu0 0.0
        %761 = vmatpush1.msra.mxu0 %v443
        %762 = vmatprep.subr.mxu0 0.0
        %763 = vmatpush1.msra.mxu0 %v444
        %764 = vmatprep.subr.mxu0 0.0
        %765 = vmatpush1.msra.mxu0 %v445
        %766 = vmatprep.subr.mxu0 0.0
        %767 = vmatpush1.msra.mxu0 %v446
        %768 = vmatprep.subr.mxu0 0.0
        %769 = vmatpush1.msra.mxu0 %v447
        %770 = vmatprep.subr.mxu0 0.0
        %771 = vmatpush1.msra.mxu0 %v448
        %772 = vmatprep.subr.mxu0 0.0
        %773 = vmatpush1.msra.mxu0 %v449
        %774 = vmatprep.subr.mxu0 0.0
        %775 = vmatpush1.msra.mxu0 %v450
        %776 = vmatprep.subr.mxu0 0.0
        %777 = vmatpush1.msra.mxu0 %v451
        %778 = vmatprep.subr.mxu0 0.0
        %779 = vmatpush1.msra.mxu0 %v452
        %780 = vmatprep.subr.mxu0 0.0
        %781 = vmatpush1.msra.mxu0 %v453
        %782 = vmatprep.subr.mxu0 0.0
        %783 = vmatpush1.msra.mxu0 %v454
        %784 = vmatprep.subr.mxu0 0.0
        %785 = vmatpush1.msra.mxu0 %v455
        %786 = vmatprep.subr.mxu0 0.0
        %787 = vmatpush1.msra.mxu0 %v456
        %788 = vmatprep.subr.mxu0 0.0
        %789 = vmatpush1.msra.mxu0 %v457
        %790 = vmatprep.subr.mxu0 0.0
        %791 = vmatpush1.msra.mxu0 %v458
        %792 = vmatprep.subr.mxu0 0.0
        %793 = vmatpush1.msra.mxu0 %v459
        %794 = vmatprep.subr.mxu0 0.0
        %795 = vmatpush1.msra.mxu0 %v460
        %796 = vmatprep.subr.mxu0 0.0
        %797 = vmatpush1.msra.mxu0 %v461
        %798 = vmatprep.subr.mxu0 0.0
        %799 = vmatpush1.msra.mxu0 %v462
        %800 = vmatprep.subr.mxu0 0.0
        %801 = vmatpush1.msra.mxu0 %v463
        %802 = vmatprep.subr.mxu0 0.0
        %803 = vmatpush1.msra.mxu0 %v464
        %804 = vmatprep.subr.mxu0 0.0
        %805 = vmatpush1.msra.mxu0 %v465
        %806 = vmatprep.subr.mxu0 0.0
        %807 = vmatpush1.msra.mxu0 %v466
        %808 = vmatprep.subr.mxu0 0.0
        %809 = vmatpush1.msra.mxu0 %v467
        %810 = vmatprep.subr.mxu0 0.0
        %811 = vmatpush1.msra.mxu0 %v468
        %812 = vmatprep.subr.mxu0 0.0
        %813 = vmatpush1.msra.mxu0 %v469
        %814 = vmatprep.mubr.f32.mxu0 %v309
        %815 = vmatmul.mubr.f32.gmra.mrb[0].mxu0 %v308
        %v816 = vpop.f32.mrb[0].mxu0
        %v817 = vadd.f32 %v747, %v816
        %v818 = vpop.f32.mrb[0].mxu0
        %819 = vdwg.mxu0
        %v820 = vmax.f32 %v817, 0.0
        %v821 = vmul.f32 %v254, %v820
        %822 = vst [vmem:[#allocation2] sm:$0xff] %v821
        %v823 = vmul.f32 %v260, %v820
        %824 = vst [vmem:[#allocation2 + $0x8] sm:$0xff] %v823
        %v825 = vmul.f32 %v266, %v820
        %826 = vst [vmem:[#allocation2 + $0x10] sm:$0xff] %v825
        %v827 = vmul.f32 %v272, %v820
        %828 = vst [vmem:[#allocation2 + $0x18] sm:$0xff] %v827
        %v829 = vmul.f32 %v278, %v820
        %830 = vst [vmem:[#allocation2 + $0x20] sm:$0xff] %v829
        %v831 = vmul.f32 %v284, %v820
        %832 = vst [vmem:[#allocation2 + $0x28] sm:$0xff] %v831
        %v833 = vmul.f32 %v290, %v820
        %834 = vst [vmem:[#allocation2 + $0x30] sm:$0xff] %v833
        %v835 = vmul.f32 %v296, %v820
        %836 = vst [vmem:[#allocation2 + $0x38] sm:$0xff] %v835
        %837 = vst [vmem:[#allocation2 + $0x40] sm:$0xff] %v820
        %v838 = vld [vmem:[#allocation2] sm:$0xff]
        %v839 = vld [vmem:[#allocation2 + $0x8] sm:$0xff]
        %v840 = vld [vmem:[#allocation2 + $0x10] sm:$0xff]
        %v841 = vld [vmem:[#allocation2 + $0x18] sm:$0xff]
        %v842 = vld [vmem:[#allocation2 + $0x20] sm:$0xff]
        %v843 = vld [vmem:[#allocation2 + $0x28] sm:$0xff]
        %v844 = vld [vmem:[#allocation2 + $0x30] sm:$0xff]
        %v845 = vld [vmem:[#allocation2 + $0x38] sm:$0xff]
        %v846 = vld [vmem:[#allocation2 + $0x40] sm:$0xff]
        %v847 = vld [vmem:[#allocation2 + $0x48] sm:$0xff]
        %v848 = vld [vmem:[#allocation6] sm:$0xff]
        %v849 = vld [vmem:[#allocation6 + $0x8] sm:$0xff]
        %v850 = vld [vmem:[#allocation6 + $0x10] sm:$0xff]
        %v851 = vld [vmem:[#allocation6 + $0x18] sm:$0xff]
        %v852 = vld [vmem:[#allocation6 + $0x20] sm:$0xff]
        %v853 = vld [vmem:[#allocation6 + $0x28] sm:$0xff]
        %v854 = vld [vmem:[#allocation6 + $0x30] sm:$0xff]
        %v855 = vld [vmem:[#allocation6 + $0x38] sm:$0xff]
        %v856 = vld [vmem:[#allocation6 + $0x40] sm:$0xff]
        %v857 = vld [vmem:[#allocation6 + $0x48] sm:$0xff]
        %v858 = vld [vmem:[#allocation6 + $0x50] sm:$0xff]
        %v859 = vld [vmem:[#allocation6 + $0x58] sm:$0xff]
        %v860 = vld [vmem:[#allocation6 + $0x60] sm:$0xff]
        %v861 = vld [vmem:[#allocation6 + $0x68] sm:$0xff]
        %v862 = vld [vmem:[#allocation6 + $0x70] sm:$0xff]
        %v863 = vld [vmem:[#allocation6 + $0x78] sm:$0xff]
        %v864 = vld [vmem:[#allocation6 + $0x80] sm:$0xff]
        %v865 = vld [vmem:[#allocation6 + $0x88] sm:$0xff]
        %v866 = vld [vmem:[#allocation6 + $0x90] sm:$0xff]
        %v867 = vld [vmem:[#allocation6 + $0x98] sm:$0xff]
        %v868 = vld [vmem:[#allocation6 + $0xa0] sm:$0xff]
        %v869 = vld [vmem:[#allocation6 + $0xa8] sm:$0xff]
        %v870 = vld [vmem:[#allocation6 + $0xb0] sm:$0xff]
        %v871 = vld [vmem:[#allocation6 + $0xb8] sm:$0xff]
        %v872 = vld [vmem:[#allocation6 + $0xc0] sm:$0xff]
        %v873 = vld [vmem:[#allocation6 + $0xc8] sm:$0xff]
        %v874 = vld [vmem:[#allocation6 + $0xd0] sm:$0xff]
        %v875 = vld [vmem:[#allocation6 + $0xd8] sm:$0xff]
        %v876 = vld [vmem:[#allocation6 + $0xe0] sm:$0xff]
        %v877 = vld [vmem:[#allocation6 + $0xe8] sm:$0xff]
        %v878 = vld [vmem:[#allocation6 + $0xf0] sm:$0xff]
        %v879 = vld [vmem:[#allocation6 + $0xf8] sm:$0xff]
        %v880 = vld [vmem:[#allocation6 + $0x100] sm:$0xff]
        %v881 = vld [vmem:[#allocation6 + $0x108] sm:$0xff]
        %v882 = vld [vmem:[#allocation6 + $0x110] sm:$0xff]
        %v883 = vld [vmem:[#allocation6 + $0x118] sm:$0xff]
        %v884 = vld [vmem:[#allocation6 + $0x120] sm:$0xff]
        %v885 = vld [vmem:[#allocation6 + $0x128] sm:$0xff]
        %v886 = vld [vmem:[#allocation6 + $0x130] sm:$0xff]
        %v887 = vld [vmem:[#allocation6 + $0x138] sm:$0xff]
        %v888 = vld [vmem:[#allocation6 + $0x140] sm:$0xff]
        %v889 = vld [vmem:[#allocation6 + $0x148] sm:$0xff]
        %v890 = vld [vmem:[#allocation6 + $0x150] sm:$0xff]
        %v891 = vld [vmem:[#allocation6 + $0x158] sm:$0xff]
        %v892 = vld [vmem:[#allocation6 + $0x160] sm:$0xff]
        %v893 = vld [vmem:[#allocation6 + $0x168] sm:$0xff]
        %v894 = vld [vmem:[#allocation6 + $0x170] sm:$0xff]
        %v895 = vld [vmem:[#allocation6 + $0x178] sm:$0xff]
        %v896 = vld [vmem:[#allocation6 + $0x180] sm:$0xff]
        %v897 = vld [vmem:[#allocation6 + $0x188] sm:$0xff]
        %v898 = vld [vmem:[#allocation6 + $0x190] sm:$0xff]
        %v899 = vld [vmem:[#allocation6 + $0x198] sm:$0xff]
        %v900 = vld [vmem:[#allocation6 + $0x1a0] sm:$0xff]
        %v901 = vld [vmem:[#allocation6 + $0x1a8] sm:$0xff]
        %v902 = vld [vmem:[#allocation6 + $0x1b0] sm:$0xff]
        %v903 = vld [vmem:[#allocation6 + $0x1b8] sm:$0xff]
        %v904 = vld [vmem:[#allocation6 + $0x1c0] sm:$0xff]
        %v905 = vld [vmem:[#allocation6 + $0x1c8] sm:$0xff]
        %v906 = vld [vmem:[#allocation6 + $0x1d0] sm:$0xff]
        %v907 = vld [vmem:[#allocation6 + $0x1d8] sm:$0xff]
        %v908 = vld [vmem:[#allocation6 + $0x1e0] sm:$0xff]
        %v909 = vld [vmem:[#allocation6 + $0x1e8] sm:$0xff]
        %v910 = vld [vmem:[#allocation6 + $0x1f0] sm:$0xff]
        %v911 = vld [vmem:[#allocation6 + $0x1f8] sm:$0xff]
        %v912 = vld [vmem:[#allocation6 + $0x200] sm:$0xff]
        %v913 = vld [vmem:[#allocation6 + $0x208] sm:$0xff]
        %v914 = vld [vmem:[#allocation6 + $0x210] sm:$0xff]
        %v915 = vld [vmem:[#allocation6 + $0x218] sm:$0xff]
        %v916 = vld [vmem:[#allocation6 + $0x220] sm:$0xff]
        %v917 = vld [vmem:[#allocation6 + $0x228] sm:$0xff]
        %v918 = vld [vmem:[#allocation6 + $0x230] sm:$0xff]
        %v919 = vld [vmem:[#allocation6 + $0x238] sm:$0xff]
        %v920 = vld [vmem:[#allocation6 + $0x240] sm:$0xff]
        %v921 = vld [vmem:[#allocation6 + $0x248] sm:$0xff]
        %v922 = vld [vmem:[#allocation6 + $0x250] sm:$0xff]
        %v923 = vld [vmem:[#allocation6 + $0x258] sm:$0xff]
        %v924 = vld [vmem:[#allocation6 + $0x260] sm:$0xff]
        %v925 = vld [vmem:[#allocation6 + $0x268] sm:$0xff]
        %v926 = vld [vmem:[#allocation6 + $0x270] sm:$0xff]
        %v927 = vld [vmem:[#allocation6 + $0x278] sm:$0xff]
        %v928 = vld [vmem:[#allocation6 + $0x280] sm:$0xff]
        %v929 = vld [vmem:[#allocation6 + $0x288] sm:$0xff]
        %v930 = vld [vmem:[#allocation6 + $0x290] sm:$0xff]
        %v931 = vld [vmem:[#allocation6 + $0x298] sm:$0xff]
        %v932 = vld [vmem:[#allocation6 + $0x2a0] sm:$0xff]
        %v933 = vld [vmem:[#allocation6 + $0x2a8] sm:$0xff]
        %v934 = vld [vmem:[#allocation6 + $0x2b0] sm:$0xff]
        %v935 = vld [vmem:[#allocation6 + $0x2b8] sm:$0xff]
        %v936 = vld [vmem:[#allocation6 + $0x2c0] sm:$0xff]
        %v937 = vld [vmem:[#allocation6 + $0x2c8] sm:$0xff]
        %v938 = vld [vmem:[#allocation6 + $0x2d0] sm:$0xff]
        %v939 = vld [vmem:[#allocation6 + $0x2d8] sm:$0xff]
        %v940 = vld [vmem:[#allocation6 + $0x2e0] sm:$0xff]
        %v941 = vld [vmem:[#allocation6 + $0x2e8] sm:$0xff]
        %v942 = vld [vmem:[#allocation6 + $0x2f0] sm:$0xff]
        %v943 = vld [vmem:[#allocation6 + $0x2f8] sm:$0xff]
        %v944 = vld [vmem:[#allocation6 + $0x300] sm:$0xff]
        %v945 = vld [vmem:[#allocation6 + $0x308] sm:$0xff]
        %v946 = vld [vmem:[#allocation6 + $0x310] sm:$0xff]
        %v947 = vld [vmem:[#allocation6 + $0x318] sm:$0xff]
        %v948 = vld [vmem:[#allocation6 + $0x320] sm:$0xff]
        %v949 = vld [vmem:[#allocation6 + $0x328] sm:$0xff]
        %v950 = vld [vmem:[#allocation6 + $0x330] sm:$0xff]
        %v951 = vld [vmem:[#allocation6 + $0x338] sm:$0xff]
        %v952 = vld [vmem:[#allocation6 + $0x340] sm:$0xff]
        %v953 = vld [vmem:[#allocation6 + $0x348] sm:$0xff]
        %v954 = vld [vmem:[#allocation6 + $0x350] sm:$0xff]
        %v955 = vld [vmem:[#allocation6 + $0x358] sm:$0xff]
        %v956 = vld [vmem:[#allocation6 + $0x360] sm:$0xff]
        %v957 = vld [vmem:[#allocation6 + $0x368] sm:$0xff]
        %v958 = vld [vmem:[#allocation6 + $0x370] sm:$0xff]
        %v959 = vld [vmem:[#allocation6 + $0x378] sm:$0xff]
        %v960 = vld [vmem:[#allocation6 + $0x380] sm:$0xff]
        %v961 = vld [vmem:[#allocation6 + $0x388] sm:$0xff]
        %v962 = vld [vmem:[#allocation6 + $0x390] sm:$0xff]
        %v963 = vld [vmem:[#allocation6 + $0x398] sm:$0xff]
        %v964 = vld [vmem:[#allocation6 + $0x3a0] sm:$0xff]
        %v965 = vld [vmem:[#allocation6 + $0x3a8] sm:$0xff]
        %v966 = vld [vmem:[#allocation6 + $0x3b0] sm:$0xff]
        %v967 = vld [vmem:[#allocation6 + $0x3b8] sm:$0xff]
        %v968 = vld [vmem:[#allocation6 + $0x3c0] sm:$0xff]
        %v969 = vld [vmem:[#allocation6 + $0x3c8] sm:$0xff]
        %v970 = vld [vmem:[#allocation6 + $0x3d0] sm:$0xff]
        %v971 = vld [vmem:[#allocation6 + $0x3d8] sm:$0xff]
        %v972 = vld [vmem:[#allocation6 + $0x3e0] sm:$0xff]
        %v973 = vld [vmem:[#allocation6 + $0x3e8] sm:$0xff]
        %v974 = vld [vmem:[#allocation6 + $0x3f0] sm:$0xff]
        %v975 = vld [vmem:[#allocation6 + $0x3f8] sm:$0xff]
        %v976 = vld [vmem:[#allocation6 + $0x400] sm:$0xff]
        %v977 = vld [vmem:[#allocation6 + $0x408] sm:$0xff]
        %v978 = vld [vmem:[#allocation6 + $0x410] sm:$0xff]
        %v979 = vld [vmem:[#allocation6 + $0x418] sm:$0xff]
        %v980 = vld [vmem:[#allocation6 + $0x420] sm:$0xff]
        %v981 = vld [vmem:[#allocation6 + $0x428] sm:$0xff]
        %v982 = vld [vmem:[#allocation6 + $0x430] sm:$0xff]
        %v983 = vld [vmem:[#allocation6 + $0x438] sm:$0xff]
        %v984 = vld [vmem:[#allocation6 + $0x440] sm:$0xff]
        %v985 = vld [vmem:[#allocation6 + $0x448] sm:$0xff]
        %v986 = vld [vmem:[#allocation6 + $0x450] sm:$0xff]
        %v987 = vld [vmem:[#allocation6 + $0x458] sm:$0xff]
        %v988 = vld [vmem:[#allocation6 + $0x460] sm:$0xff]
        %v989 = vld [vmem:[#allocation6 + $0x468] sm:$0xff]
        %v990 = vld [vmem:[#allocation6 + $0x470] sm:$0xff]
        %v991 = vld [vmem:[#allocation6 + $0x478] sm:$0xff]
        %v992 = vld [vmem:[#allocation6 + $0x480] sm:$0xff]
        %v993 = vld [vmem:[#allocation6 + $0x488] sm:$0xff]
        %v994 = vld [vmem:[#allocation6 + $0x490] sm:$0xff]
        %v995 = vld [vmem:[#allocation6 + $0x498] sm:$0xff]
        %v996 = vld [vmem:[#allocation6 + $0x4a0] sm:$0xff]
        %v997 = vld [vmem:[#allocation6 + $0x4a8] sm:$0xff]
        %v998 = vld [vmem:[#allocation6 + $0x4b0] sm:$0xff]
        %v999 = vld [vmem:[#allocation6 + $0x4b8] sm:$0xff]
        %v1000 = vld [vmem:[#allocation6 + $0x4c0] sm:$0xff]
        %v1001 = vld [vmem:[#allocation6 + $0x4c8] sm:$0xff]
        %v1002 = vld [vmem:[#allocation6 + $0x4d0] sm:$0xff]
        %v1003 = vld [vmem:[#allocation6 + $0x4d8] sm:$0xff]
        %v1004 = vld [vmem:[#allocation6 + $0x4e0] sm:$0xff]
        %v1005 = vld [vmem:[#allocation6 + $0x4e8] sm:$0xff]
        %v1006 = vld [vmem:[#allocation6 + $0x4f0] sm:$0xff]
        %v1007 = vld [vmem:[#allocation6 + $0x4f8] sm:$0xff]
        %1008 = vmatprep.subr.mxu0 0.0
        %1009 = vmatpush1.msra.mxu0 %v848
        %1010 = vmatprep.subr.mxu0 0.0
        %1011 = vmatpush1.msra.mxu0 %v849
        %1012 = vmatprep.subr.mxu0 0.0
        %1013 = vmatpush1.msra.mxu0 %v850
        %1014 = vmatprep.subr.mxu0 0.0
        %1015 = vmatpush1.msra.mxu0 %v851
        %1016 = vmatprep.subr.mxu0 0.0
        %1017 = vmatpush1.msra.mxu0 %v852
        %1018 = vmatprep.subr.mxu0 0.0
        %1019 = vmatpush1.msra.mxu0 %v853
        %1020 = vmatprep.subr.mxu0 0.0
        %1021 = vmatpush1.msra.mxu0 %v854
        %1022 = vmatprep.subr.mxu0 0.0
        %1023 = vmatpush1.msra.mxu0 %v855
        %1024 = vmatprep.subr.mxu0 0.0
        %1025 = vmatpush1.msra.mxu0 %v856
        %1026 = vmatprep.subr.mxu0 0.0
        %1027 = vmatpush1.msra.mxu0 %v857
        %1028 = vmatprep.subr.mxu0 0.0
        %1029 = vmatpush1.msra.mxu0 %v858
        %1030 = vmatprep.subr.mxu0 0.0
        %1031 = vmatpush1.msra.mxu0 %v859
        %1032 = vmatprep.subr.mxu0 0.0
        %1033 = vmatpush1.msra.mxu0 %v860
        %1034 = vmatprep.subr.mxu0 0.0
        %1035 = vmatpush1.msra.mxu0 %v861
        %1036 = vmatprep.subr.mxu0 0.0
        %1037 = vmatpush1.msra.mxu0 %v862
        %1038 = vmatprep.subr.mxu0 0.0
        %1039 = vmatpush1.msra.mxu0 %v863
        %1040 = vmatprep.subr.mxu0 0.0
        %1041 = vmatpush1.msra.mxu0 %v864
        %1042 = vmatprep.subr.mxu0 0.0
        %1043 = vmatpush1.msra.mxu0 %v865
        %1044 = vmatprep.subr.mxu0 0.0
        %1045 = vmatpush1.msra.mxu0 %v866
        %1046 = vmatprep.subr.mxu0 0.0
        %1047 = vmatpush1.msra.mxu0 %v867
        %1048 = vmatprep.subr.mxu0 0.0
        %1049 = vmatpush1.msra.mxu0 %v868
        %1050 = vmatprep.subr.mxu0 0.0
        %1051 = vmatpush1.msra.mxu0 %v869
        %1052 = vmatprep.subr.mxu0 0.0
        %1053 = vmatpush1.msra.mxu0 %v870
        %1054 = vmatprep.subr.mxu0 0.0
        %1055 = vmatpush1.msra.mxu0 %v871
        %1056 = vmatprep.subr.mxu0 0.0
        %1057 = vmatpush1.msra.mxu0 %v872
        %1058 = vmatprep.subr.mxu0 0.0
        %1059 = vmatpush1.msra.mxu0 %v873
        %1060 = vmatprep.subr.mxu0 0.0
        %1061 = vmatpush1.msra.mxu0 %v874
        %1062 = vmatprep.subr.mxu0 0.0
        %1063 = vmatpush1.msra.mxu0 %v875
        %1064 = vmatprep.subr.mxu0 0.0
        %1065 = vmatpush1.msra.mxu0 %v876
        %1066 = vmatprep.subr.mxu0 0.0
        %1067 = vmatpush1.msra.mxu0 %v877
        %1068 = vmatprep.subr.mxu0 0.0
        %1069 = vmatpush1.msra.mxu0 %v878
        %1070 = vmatprep.subr.mxu0 0.0
        %1071 = vmatpush1.msra.mxu0 %v879
        %1072 = vmatprep.mubr.f32.mxu0 %v839
        %1073 = vmatmul.mubr.f32.gmra.mrb[0].mxu0 %v838
        %v1074 = vpop.f32.mrb[0].mxu0
        %v1075 = vadd.f32 0.0, %v1074
        %v1076 = vpop.f32.mrb[0].mxu0
        %1077 = vdwg.mxu0
        %1078 = vmatprep.subr.mxu0 0.0
        %1079 = vmatpush1.msra.mxu0 %v880
        %1080 = vmatprep.subr.mxu0 0.0
        %1081 = vmatpush1.msra.mxu0 %v881
        %1082 = vmatprep.subr.mxu0 0.0
        %1083 = vmatpush1.msra.mxu0 %v882
        %1084 = vmatprep.subr.mxu0 0.0
        %1085 = vmatpush1.msra.mxu0 %v883
        %1086 = vmatprep.subr.mxu0 0.0
        %1087 = vmatpush1.msra.mxu0 %v884
        %1088 = vmatprep.subr.mxu0 0.0
        %1089 = vmatpush1.msra.mxu0 %v885
        %1090 = vmatprep.subr.mxu0 0.0
        %1091 = vmatpush1.msra.mxu0 %v886
        %1092 = vmatprep.subr.mxu0 0.0
        %1093 = vmatpush1.msra.mxu0 %v887
        %1094 = vmatprep.subr.mxu0 0.0
        %1095 = vmatpush1.msra.mxu0 %v888
        %1096 = vmatprep.subr.mxu0 0.0
        %1097 = vmatpush1.msra.mxu0 %v889
        %1098 = vmatprep.subr.mxu0 0.0
        %1099 = vmatpush1.msra.mxu0 %v890
        %1100 = vmatprep.subr.mxu0 0.0
        %1101 = vmatpush1.msra.mxu0 %v891
        %1102 = vmatprep.subr.mxu0 0.0
        %1103 = vmatpush1.msra.mxu0 %v892
        %1104 = vmatprep.subr.mxu0 0.0
        %1105 = vmatpush1.msra.mxu0 %v893
        %1106 = vmatprep.subr.mxu0 0.0
        %1107 = vmatpush1.msra.mxu0 %v894
        %1108 = vmatprep.subr.mxu0 0.0
        %1109 = vmatpush1.msra.mxu0 %v895
        %1110 = vmatprep.subr.mxu0 0.0
        %1111 = vmatpush1.msra.mxu0 %v896
        %1112 = vmatprep.subr.mxu0 0.0
        %1113 = vmatpush1.msra.mxu0 %v897
        %1114 = vmatprep.subr.mxu0 0.0
        %1115 = vmatpush1.msra.mxu0 %v898
        %1116 = vmatprep.subr.mxu0 0.0
        %1117 = vmatpush1.msra.mxu0 %v899
        %1118 = vmatprep.subr.mxu0 0.0
        %1119 = vmatpush1.msra.mxu0 %v900
        %1120 = vmatprep.subr.mxu0 0.0
        %1121 = vmatpush1.msra.mxu0 %v901
        %1122 = vmatprep.subr.mxu0 0.0
        %1123 = vmatpush1.msra.mxu0 %v902
        %1124 = vmatprep.subr.mxu0 0.0
        %1125 = vmatpush1.msra.mxu0 %v903
        %1126 = vmatprep.subr.mxu0 0.0
        %1127 = vmatpush1.msra.mxu0 %v904
        %1128 = vmatprep.subr.mxu0 0.0
        %1129 = vmatpush1.msra.mxu0 %v905
        %1130 = vmatprep.subr.mxu0 0.0
        %1131 = vmatpush1.msra.mxu0 %v906
        %1132 = vmatprep.subr.mxu0 0.0
        %1133 = vmatpush1.msra.mxu0 %v907
        %1134 = vmatprep.subr.mxu0 0.0
        %1135 = vmatpush1.msra.mxu0 %v908
        %1136 = vmatprep.subr.mxu0 0.0
        %1137 = vmatpush1.msra.mxu0 %v909
        %1138 = vmatprep.subr.mxu0 0.0
        %1139 = vmatpush1.msra.mxu0 %v910
        %1140 = vmatprep.subr.mxu0 0.0
        %1141 = vmatpush1.msra.mxu0 %v911
        %1142 = vmatprep.mubr.f32.mxu0 %v841
        %1143 = vmatmul.mubr.f32.gmra.mrb[0].mxu0 %v840
        %v1144 = vpop.f32.mrb[0].mxu0
        %v1145 = vadd.f32 %v1075, %v1144
        %v1146 = vpop.f32.mrb[0].mxu0
        %1147 = vdwg.mxu0
        %1148 = vmatprep.subr.mxu0 0.0
        %1149 = vmatpush1.msra.mxu0 %v912
        %1150 = vmatprep.subr.mxu0 0.0
        %1151 = vmatpush1.msra.mxu0 %v913
        %1152 = vmatprep.subr.mxu0 0.0
        %1153 = vmatpush1.msra.mxu0 %v914
        %1154 = vmatprep.subr.mxu0 0.0
        %1155 = vmatpush1.msra.mxu0 %v915
        %1156 = vmatprep.subr.mxu0 0.0
        %1157 = vmatpush1.msra.mxu0 %v916
        %1158 = vmatprep.subr.mxu0 0.0
        %1159 = vmatpush1.msra.mxu0 %v917
        %1160 = vmatprep.subr.mxu0 0.0
        %1161 = vmatpush1.msra.mxu0 %v918
        %1162 = vmatprep.subr.mxu0 0.0
        %1163 = vmatpush1.msra.mxu0 %v919
        %1164 = vmatprep.subr.mxu0 0.0
        %1165 = vmatpush1.msra.mxu0 %v920
        %1166 = vmatprep.subr.mxu0 0.0
        %1167 = vmatpush1.msra.mxu0 %v921
        %1168 = vmatprep.subr.mxu0 0.0
        %1169 = vmatpush1.msra.mxu0 %v922
        %1170 = vmatprep.subr.mxu0 0.0
        %1171 = vmatpush1.msra.mxu0 %v923
        %1172 = vmatprep.subr.mxu0 0.0
        %1173 = vmatpush1.msra.mxu0 %v924
        %1174 = vmatprep.subr.mxu0 0.0
        %1175 = vmatpush1.msra.mxu0 %v925
        %1176 = vmatprep.subr.mxu0 0.0
        %1177 = vmatpush1.msra.mxu0 %v926
        %1178 = vmatprep.subr.mxu0 0.0
        %1179 = vmatpush1.msra.mxu0 %v927
        %1180 = vmatprep.subr.mxu0 0.0
        %1181 = vmatpush1.msra.mxu0 %v928
        %1182 = vmatprep.subr.mxu0 0.0
        %1183 = vmatpush1.msra.mxu0 %v929
        %1184 = vmatprep.subr.mxu0 0.0
        %1185 = vmatpush1.msra.mxu0 %v930
        %1186 = vmatprep.subr.mxu0 0.0
        %1187 = vmatpush1.msra.mxu0 %v931
        %1188 = vmatprep.subr.mxu0 0.0
        %1189 = vmatpush1.msra.mxu0 %v932
        %1190 = vmatprep.subr.mxu0 0.0
        %1191 = vmatpush1.msra.mxu0 %v933
        %1192 = vmatprep.subr.mxu0 0.0
        %1193 = vmatpush1.msra.mxu0 %v934
        %1194 = vmatprep.subr.mxu0 0.0
        %1195 = vmatpush1.msra.mxu0 %v935
        %1196 = vmatprep.subr.mxu0 0.0
        %1197 = vmatpush1.msra.mxu0 %v936
        %1198 = vmatprep.subr.mxu0 0.0
        %1199 = vmatpush1.msra.mxu0 %v937
        %1200 = vmatprep.subr.mxu0 0.0
        %1201 = vmatpush1.msra.mxu0 %v938
        %1202 = vmatprep.subr.mxu0 0.0
        %1203 = vmatpush1.msra.mxu0 %v939
        %1204 = vmatprep.subr.mxu0 0.0
        %1205 = vmatpush1.msra.mxu0 %v940
        %1206 = vmatprep.subr.mxu0 0.0
        %1207 = vmatpush1.msra.mxu0 %v941
        %1208 = vmatprep.subr.mxu0 0.0
        %1209 = vmatpush1.msra.mxu0 %v942
        %1210 = vmatprep.subr.mxu0 0.0
        %1211 = vmatpush1.msra.mxu0 %v943
        %1212 = vmatprep.mubr.f32.mxu0 %v843
        %1213 = vmatmul.mubr.f32.gmra.mrb[0].mxu0 %v842
        %v1214 = vpop.f32.mrb[0].mxu0
        %v1215 = vadd.f32 %v1145, %v1214
        %v1216 = vpop.f32.mrb[0].mxu0
        %1217 = vdwg.mxu0
        %1218 = vmatprep.subr.mxu0 0.0
        %1219 = vmatpush1.msra.mxu0 %v944
        %1220 = vmatprep.subr.mxu0 0.0
        %1221 = vmatpush1.msra.mxu0 %v945
        %1222 = vmatprep.subr.mxu0 0.0
        %1223 = vmatpush1.msra.mxu0 %v946
        %1224 = vmatprep.subr.mxu0 0.0
        %1225 = vmatpush1.msra.mxu0 %v947
        %1226 = vmatprep.subr.mxu0 0.0
        %1227 = vmatpush1.msra.mxu0 %v948
        %1228 = vmatprep.subr.mxu0 0.0
        %1229 = vmatpush1.msra.mxu0 %v949
        %1230 = vmatprep.subr.mxu0 0.0
        %1231 = vmatpush1.msra.mxu0 %v950
        %1232 = vmatprep.subr.mxu0 0.0
        %1233 = vmatpush1.msra.mxu0 %v951
        %1234 = vmatprep.subr.mxu0 0.0
        %1235 = vmatpush1.msra.mxu0 %v952
        %1236 = vmatprep.subr.mxu0 0.0
        %1237 = vmatpush1.msra.mxu0 %v953
        %1238 = vmatprep.subr.mxu0 0.0
        %1239 = vmatpush1.msra.mxu0 %v954
        %1240 = vmatprep.subr.mxu0 0.0
        %1241 = vmatpush1.msra.mxu0 %v955
        %1242 = vmatprep.subr.mxu0 0.0
        %1243 = vmatpush1.msra.mxu0 %v956
        %1244 = vmatprep.subr.mxu0 0.0
        %1245 = vmatpush1.msra.mxu0 %v957
        %1246 = vmatprep.subr.mxu0 0.0
        %1247 = vmatpush1.msra.mxu0 %v958
        %1248 = vmatprep.subr.mxu0 0.0
        %1249 = vmatpush1.msra.mxu0 %v959
        %1250 = vmatprep.subr.mxu0 0.0
        %1251 = vmatpush1.msra.mxu0 %v960
        %1252 = vmatprep.subr.mxu0 0.0
        %1253 = vmatpush1.msra.mxu0 %v961
        %1254 = vmatprep.subr.mxu0 0.0
        %1255 = vmatpush1.msra.mxu0 %v962
        %1256 = vmatprep.subr.mxu0 0.0
        %1257 = vmatpush1.msra.mxu0 %v963
        %1258 = vmatprep.subr.mxu0 0.0
        %1259 = vmatpush1.msra.mxu0 %v964
        %1260 = vmatprep.subr.mxu0 0.0
        %1261 = vmatpush1.msra.mxu0 %v965
        %1262 = vmatprep.subr.mxu0 0.0
        %1263 = vmatpush1.msra.mxu0 %v966
        %1264 = vmatprep.subr.mxu0 0.0
        %1265 = vmatpush1.msra.mxu0 %v967
        %1266 = vmatprep.subr.mxu0 0.0
        %1267 = vmatpush1.msra.mxu0 %v968
        %1268 = vmatprep.subr.mxu0 0.0
        %1269 = vmatpush1.msra.mxu0 %v969
        %1270 = vmatprep.subr.mxu0 0.0
        %1271 = vmatpush1.msra.mxu0 %v970
        %1272 = vmatprep.subr.mxu0 0.0
        %1273 = vmatpush1.msra.mxu0 %v971
        %1274 = vmatprep.subr.mxu0 0.0
        %1275 = vmatpush1.msra.mxu0 %v972
        %1276 = vmatprep.subr.mxu0 0.0
        %1277 = vmatpush1.msra.mxu0 %v973
        %1278 = vmatprep.subr.mxu0 0.0
        %1279 = vmatpush1.msra.mxu0 %v974
        %1280 = vmatprep.subr.mxu0 0.0
        %1281 = vmatpush1.msra.mxu0 %v975
        %1282 = vmatprep.mubr.f32.mxu0 %v845
        %1283 = vmatmul.mubr.f32.gmra.mrb[0].mxu0 %v844
        %v1284 = vpop.f32.mrb[0].mxu0
        %v1285 = vadd.f32 %v1215, %v1284
        %v1286 = vpop.f32.mrb[0].mxu0
        %1287 = vdwg.mxu0
        %1288 = vmatprep.subr.mxu0 0.0
        %1289 = vmatpush1.msra.mxu0 %v976
        %1290 = vmatprep.subr.mxu0 0.0
        %1291 = vmatpush1.msra.mxu0 %v977
        %1292 = vmatprep.subr.mxu0 0.0
        %1293 = vmatpush1.msra.mxu0 %v978
        %1294 = vmatprep.subr.mxu0 0.0
        %1295 = vmatpush1.msra.mxu0 %v979
        %1296 = vmatprep.subr.mxu0 0.0
        %1297 = vmatpush1.msra.mxu0 %v980
        %1298 = vmatprep.subr.mxu0 0.0
        %1299 = vmatpush1.msra.mxu0 %v981
        %1300 = vmatprep.subr.mxu0 0.0
        %1301 = vmatpush1.msra.mxu0 %v982
        %1302 = vmatprep.subr.mxu0 0.0
        %1303 = vmatpush1.msra.mxu0 %v983
        %1304 = vmatprep.subr.mxu0 0.0
        %1305 = vmatpush1.msra.mxu0 %v984
        %1306 = vmatprep.subr.mxu0 0.0
        %1307 = vmatpush1.msra.mxu0 %v985
        %1308 = vmatprep.subr.mxu0 0.0
        %1309 = vmatpush1.msra.mxu0 %v986
        %1310 = vmatprep.subr.mxu0 0.0
        %1311 = vmatpush1.msra.mxu0 %v987
        %1312 = vmatprep.subr.mxu0 0.0
        %1313 = vmatpush1.msra.mxu0 %v988
        %1314 = vmatprep.subr.mxu0 0.0
        %1315 = vmatpush1.msra.mxu0 %v989
        %1316 = vmatprep.subr.mxu0 0.0
        %1317 = vmatpush1.msra.mxu0 %v990
        %1318 = vmatprep.subr.mxu0 0.0
        %1319 = vmatpush1.msra.mxu0 %v991
        %1320 = vmatprep.subr.mxu0 0.0
        %1321 = vmatpush1.msra.mxu0 %v992
        %1322 = vmatprep.subr.mxu0 0.0
        %1323 = vmatpush1.msra.mxu0 %v993
        %1324 = vmatprep.subr.mxu0 0.0
        %1325 = vmatpush1.msra.mxu0 %v994
        %1326 = vmatprep.subr.mxu0 0.0
        %1327 = vmatpush1.msra.mxu0 %v995
        %1328 = vmatprep.subr.mxu0 0.0
        %1329 = vmatpush1.msra.mxu0 %v996
        %1330 = vmatprep.subr.mxu0 0.0
        %1331 = vmatpush1.msra.mxu0 %v997
        %1332 = vmatprep.subr.mxu0 0.0
        %1333 = vmatpush1.msra.mxu0 %v998
        %1334 = vmatprep.subr.mxu0 0.0
        %1335 = vmatpush1.msra.mxu0 %v999
        %1336 = vmatprep.subr.mxu0 0.0
        %1337 = vmatpush1.msra.mxu0 %v1000
        %1338 = vmatprep.subr.mxu0 0.0
        %1339 = vmatpush1.msra.mxu0 %v1001
        %1340 = vmatprep.subr.mxu0 0.0
        %1341 = vmatpush1.msra.mxu0 %v1002
        %1342 = vmatprep.subr.mxu0 0.0
        %1343 = vmatpush1.msra.mxu0 %v1003
        %1344 = vmatprep.subr.mxu0 0.0
        %1345 = vmatpush1.msra.mxu0 %v1004
        %1346 = vmatprep.subr.mxu0 0.0
        %1347 = vmatpush1.msra.mxu0 %v1005
        %1348 = vmatprep.subr.mxu0 0.0
        %1349 = vmatpush1.msra.mxu0 %v1006
        %1350 = vmatprep.subr.mxu0 0.0
        %1351 = vmatpush1.msra.mxu0 %v1007
        %1352 = vmatprep.mubr.f32.mxu0 %v847
        %1353 = vmatmul.mubr.f32.gmra.mrb[0].mxu0 %v846
        %v1354 = vpop.f32.mrb[0].mxu0
        %v1355 = vadd.f32 %v1285, %v1354
        %v1356 = vpop.f32.mrb[0].mxu0
        %1357 = vdwg.mxu0
        %1358 = vst [vmem:[%s231] sm:$0xff] %v1355
        %s1359 = sand.u32 %s122, 1
        %s1360 = scalar_lea.sflag [#allocation5], %s1359
        %s1361 = sand.u32 %s122, 1
        %s1362 = smul.addr %s1361, 8
        %s1363 = scalar_lea.vmem [#allocation8], %s1362
        // Predicated region
        $region45: #{tpu_custom_call.1} parent=35 // pred_check
          %p1364 = pneg %p132
        $region46: #{tpu_custom_call.1} parent=35 // pred_check_branch
          %1366 = sbr.rel (%p1364) target = $region48
        $region47: #{tpu_custom_call.1} parent=35 // pred_region
          %s1368 = ssub.s32 128, 128
          %1369 = vsyncadd %s1360, %s1368
          %s1370 = smul.addr %s20, 128
          %s1371 = scalar_lea.hbm %s4, %s1370
          %s1373 = sshll.u32 %s1363, 4
          %s1374 = int_to_ptr.vmem [resolvable:$true] %s1373
          %1376 = dma.vmem_to_hbm [thread:$0]  %s1374, 128, %s1371, %s1360
        $region48: #{tpu_custom_call.1} parent=35 // pred_fallthru
          _
      $region36: #{tpu_custom_call.1} parent=5 // pred_fallthru
        _
      %p1377 = scmp.le.s32.totalorder 2, %s15
      // Predicated region
      $region49: #{tpu_custom_call.1} parent=5 // pred_check
        %p1378 = pneg %p1377
      $region50: #{tpu_custom_call.1} parent=5 // pred_check_branch
        %1380 = sbr.rel (%p1378) target = $region52
      $region51: #{tpu_custom_call.1} parent=5 // pred_region
        %s1381 = ssub.s32 %s15, 2
        // Predicated region
        $region53: #{tpu_custom_call.1} parent=51 // pred_check
          %p1382 = pneg %p138
        $region54: #{tpu_custom_call.1} parent=51 // pred_check_branch
          %1384 = sbr.rel (%p1382) target = $region56
        $region55: #{tpu_custom_call.1} parent=51 // pred_region
          %s1385 = sand.u32 %s123, 1
          %s1386 = scalar_lea.sflag [#allocation5], %s1385
          %s1387 = sand.u32 %s123, 1
          %s1388 = smul.addr %s1387, 8
          %s1389 = scalar_lea.vmem [#allocation8], %s1388
          %1390 = dma.done %s1386, 128
        $region56: #{tpu_custom_call.1} parent=51 // pred_fallthru
          _
      $region52: #{tpu_custom_call.1} parent=5 // pred_fallthru
        _
    $region6: #{tpu_custom_call.1} parent=1 // loop_footer
      %s19 = sadd.s32 1, %s15
    $region7: #{tpu_custom_call.1} parent=1 // loop_footer_branch
      %14 = sbr.rel target = $region3
    $region8: #{tpu_custom_call.1} parent=1 // loop_exit
      _
    %1391 = vsyncpa [#allocation4], 1
    %s1392 = scalar_lea.sflag [#allocation4], 1
    %1393 = vsyncpa %s1392, 1
    %1394 = vsyncpa [#allocation7], 1
    %1395 = vsyncpa [#allocation5], 1
    %s1396 = scalar_lea.sflag [#allocation5], 1
    %1397 = vsyncpa %s1396, 1

</llo_original>
